<compile_context>
chip_gen: v5e
topology: v5e:2x2
jax: 0.10.0
libtpu: 0.0.40
codegen_flags: <defaults>
</compile_context>

<pallas_src>
import functools

import jax
import jax.numpy as jnp
from jax import lax
from jax.experimental import pallas as pl
from jax.experimental.pallas import tpu as pltpu

_LANE = 128


def _round_up(x, m):
    return ((x + m - 1) // m) * m


# --------------------------- fused decoder kernel -----------------------------

def _make_decoder_kernel(n_layers, seq_len, hp):
    """Single fused kernel: all LSTM layers + inter-layer sigmoid + dense head."""
    S, HP = seq_len, hp

    def kernel(*args):
        # args: x(1,HP), [w_ih_t(HP,4HP), w_hh_t(HP,4HP), b(1,4HP)] * n_layers,
        #       dense(HP,OP), out(S,OP), hbuf scratch (S,HP)
        x_ref = args[0]
        dense_ref = args[1 + 3 * n_layers]
        out_ref = args[2 + 3 * n_layers]
        hbuf = args[3 + 3 * n_layers]  # VMEM scratch holding the current layer's output

        for layer in range(n_layers):
            w_ih_t = args[1 + 3 * layer][...]   # (HP, 4HP) pre-transposed
            w_hh_t = args[2 + 3 * layer][...]   # (HP, 4HP) pre-transposed
            b = args[3 + 3 * layer][...]        # (1, 4HP)  (b_ih + b_hh)
            last = layer == n_layers - 1

            if layer == 0:
                # Layer-0 input is x repeated over time -> its input projection is
                # identical at every step: compute the (1, 4HP) row once.
                xg = jnp.dot(x_ref[...], w_ih_t,
                             preferred_element_type=jnp.float32) + b
            else:
                # Input projection for ALL timesteps in one MXU matmul,
                # read straight from the VMEM-resident previous-layer output.
                xg = jnp.dot(hbuf[...], w_ih_t,
                             preferred_element_type=jnp.float32) + b   # (S, 4HP)

            h = jnp.zeros((1, HP), jnp.float32)
            c = jnp.zeros((1, HP), jnp.float32)
            # Fully unrolled recurrence (S is a small static constant): concrete
            # indices give static, 128-lane-aligned gate slices and let the
            # scheduler see the whole dependency chain (same effect as unroll=True).
            for t in range(S):
                x_gates = xg if layer == 0 else xg[t:t + 1, :]
                gates = x_gates + jnp.dot(h, w_hh_t,
                                          preferred_element_type=jnp.float32)  # (1,4HP)
                # PyTorch gate order (i, f, g, o); each gate is a full 128-lane block.
                i = jax.nn.sigmoid(gates[:, 0 * HP:1 * HP])
                f = jax.nn.sigmoid(gates[:, 1 * HP:2 * HP])
                g = jnp.tanh(gates[:, 2 * HP:3 * HP])
                o = jax.nn.sigmoid(gates[:, 3 * HP:4 * HP])
                c = f * c + i * g
                h = o * jnp.tanh(c)
                # Inter-layer activation fused into the store; the raw h stays in
                # the recurrent carry (matches PyTorch semantics).
                hbuf[pl.ds(t, 1), :] = h if last else jax.nn.sigmoid(h)

        # Dense head: one lane-dense full-tile store.
        out_ref[...] = jnp.dot(hbuf[...], dense_ref[...],
                               preferred_element_type=jnp.float32)

    return kernel


# ------------------------------ Decoder forward -------------------------------

@functools.partial(jax.jit, static_argnames=("seq_len", "out_dim"))
def decoder_forward(prepared, x_vec, *, seq_len, out_dim):
    layers = prepared["layers"]
    dense = prepared["dense"]
    n_layers = len(layers)
    hp = dense.shape[0]
    op = dense.shape[1]
    din = x_vec.shape[0]

    # Zero-pad the encoded vector to the lane-aligned width (padded lanes are inert).
    x_pad = jnp.zeros((1, hp), jnp.float32).at[0, :din].set(x_vec.astype(jnp.float32))

    args = [x_pad]
    for p in layers:
        args.extend([p["w_ih_t"], p["w_hh_t"], p["b"]])
    args.append(dense)

    out_pad = pl.pallas_call(
        _make_decoder_kernel(n_layers, seq_len, hp),
        out_shape=jax.ShapeDtypeStruct((seq_len, op), jnp.float32),
        in_specs=[pl.BlockSpec(memory_space=pltpu.MemorySpace.VMEM)] * len(args),
        out_specs=pl.BlockSpec(memory_space=pltpu.MemorySpace.VMEM),
        scratch_shapes=[pltpu.VMEM((seq_len, hp), jnp.float32)],
    )(*args)
    return out_pad[:, :out_dim]


# ---------------------- parameter init & one-time prep -------------------------

def init_decoder_params(key, input_dim, out_dim, h_dims):
    """PyTorch-layout parameters (same init scheme as nn.LSTM / torch.rand)."""
    layer_dims = [input_dim] + h_dims + [h_dims[-1]]
    num_layers = len(layer_dims) - 1
    lstm_params = []
    for index in range(num_layers):
        din, h = layer_dims[index], layer_dims[index + 1]
        bound = 1.0 / jnp.sqrt(h)  # U(-1/sqrt(H), 1/sqrt(H))
        key, k1, k2, k3, k4 = jax.random.split(key, 5)
        w_ih = jax.random.uniform(k1, (4 * h, din), jnp.float32, -bound, bound)
        w_hh = jax.random.uniform(k2, (4 * h, h), jnp.float32, -bound, bound)
        b_ih = jax.random.uniform(k3, (4 * h,), jnp.float32, -bound, bound)
        b_hh = jax.random.uniform(k4, (4 * h,), jnp.float32, -bound, bound)
        lstm_params.append({"w_ih": w_ih, "w_hh": w_hh, "b": (b_ih + b_hh)[None, :]})
    key, kd = jax.random.split(key)
    dense = jax.random.uniform(kd, (layer_dims[-1], out_dim), jnp.float32)  # torch.rand
    return {"lstm": lstm_params, "dense": dense}


def prepare_decoder_params(params, lane=_LANE):
    """One-time: pre-transpose weights and zero-pad to lane-aligned layouts.

    W_ih^T / W_hh^T become (HP, 4*HP) with gate g occupying columns
    [g*HP, g*HP + h); padded rows/columns are zero so padded lanes stay inert.
    """
    lstm = params["lstm"]
    dense = params["dense"]
    dims = [p["w_ih"].shape[1] for p in lstm] + [p["w_hh"].shape[1] for p in lstm]
    hp = _round_up(max(dims), lane)

    layers = []
    for p in lstm:
        w_ih, w_hh, b = p["w_ih"], p["w_hh"], p["b"]
        h4, din = w_ih.shape
        h = h4 // 4
        w_ih_t = jnp.zeros((hp, 4 * hp), jnp.float32)
        w_hh_t = jnp.zeros((hp, 4 * hp), jnp.float32)
        bp = jnp.zeros((1, 4 * hp), jnp.float32)
        for g in range(4):
            w_ih_t = w_ih_t.at[:din, g * hp:g * hp + h].set(w_ih[g * h:(g + 1) * h, :].T)
            w_hh_t = w_hh_t.at[:h, g * hp:g * hp + h].set(w_hh[g * h:(g + 1) * h, :].T)
            bp = bp.at[0, g * hp:g * hp + h].set(b[0, g * h:(g + 1) * h])
        layers.append({"w_ih_t": w_ih_t, "w_hh_t": w_hh_t, "b": bp})

    h_last, out_dim = dense.shape
    op = _round_up(out_dim, lane)
    dense_p = jnp.zeros((hp, op), jnp.float32).at[:h_last, :out_dim].set(dense)
    return {"layers": layers, "dense": dense_p}


# ------------------------------ pure-JAX reference -----------------------------

def _lstm_layer_ref(x, w_ih, w_hh, b):
    H = w_hh.shape[1]

    def step(carry, x_t):
        h, c = carry
        gates = x_t @ w_ih.T + h @ w_hh.T + b[0]
        i, f, g, o = jnp.split(gates, 4)
        i = jax.nn.sigmoid(i)
        f = jax.nn.sigmoid(f)
        g = jnp.tanh(g)
        o = jax.nn.sigmoid(o)
        c = f * c + i * g
        h = o * jnp.tanh(c)
        return (h, c), h

    init = (jnp.zeros((H,), jnp.float32), jnp.zeros((H,), jnp.float32))
    _, hs = lax.scan(step, init, x)
    return hs


def decoder_forward_ref(params, x_vec, seq_len):
    x = jnp.tile(x_vec[None, :], (seq_len, 1)).astype(jnp.float32)
    n_layers = len(params["lstm"])
    for idx, p in enumerate(params["lstm"]):
        x = _lstm_layer_ref(x, p["w_ih"], p["w_hh"], p["b"])
        if idx < n_layers - 1:
            x = jax.nn.sigmoid(x)
    return x @ params["dense"]


# ------------------------------------ main --------------------------------------

if __name__ == "__main__":
    input_dim = 8
    h_dims = [16, 32]
    out_dim = 8
    seq_len = 8

    key = jax.random.PRNGKey(0)
    key, kx = jax.random.split(key)
    params = init_decoder_params(key, input_dim, out_dim, h_dims)
    prepared = prepare_decoder_params(params)
    # The PyTorch forward takes a single encoded vector x of shape (input_dim,).
    x_vec = jax.random.normal(kx, (input_dim,), jnp.float32)

    out = decoder_forward(prepared, x_vec, seq_len=seq_len, out_dim=out_dim)
    out = jax.block_until_ready(out)

    ref = decoder_forward_ref(params, x_vec, seq_len)
    ref = jax.block_until_ready(ref)

    assert out.shape == (seq_len, out_dim)
    assert jnp.allclose(out, ref, atol=2e-4, rtol=2e-4), (
        f"max abs err {jnp.max(jnp.abs(out - ref))}"
    )
    print("KERNEL_OK")
</pallas_src>

<mosaic_0001>
module attributes {stable_mosaic.version = 11 : i64} {
  func.func @kernel(%arg0: memref<1x128xf32, #tpu.memory_space<vmem>>, %arg1: memref<128x512xf32, #tpu.memory_space<vmem>>, %arg2: memref<128x512xf32, #tpu.memory_space<vmem>>, %arg3: memref<1x512xf32, #tpu.memory_space<vmem>>, %arg4: memref<128x512xf32, #tpu.memory_space<vmem>>, %arg5: memref<128x512xf32, #tpu.memory_space<vmem>>, %arg6: memref<1x512xf32, #tpu.memory_space<vmem>>, %arg7: memref<128x512xf32, #tpu.memory_space<vmem>>, %arg8: memref<128x512xf32, #tpu.memory_space<vmem>>, %arg9: memref<1x512xf32, #tpu.memory_space<vmem>>, %arg10: memref<128x128xf32, #tpu.memory_space<vmem>>, %arg11: memref<8x128xf32, #tpu.memory_space<vmem>>, %arg12: memref<8x128xf32, #tpu.memory_space<vmem>>) attributes {dimension_semantics = [], scalar_prefetch = 0 : i64, scratch_operands = 1 : i64, tpu.core_type = #tpu.core_type<tc>} {
    %c0 = arith.constant 0 : index
    %c0_0 = arith.constant 0 : index
    %0 = vector.load %arg1[%c0, %c0_0] : memref<128x512xf32, #tpu.memory_space<vmem>>, vector<128x512xf32>
    %c0_1 = arith.constant 0 : index
    %c0_2 = arith.constant 0 : index
    %1 = vector.load %arg2[%c0_1, %c0_2] : memref<128x512xf32, #tpu.memory_space<vmem>>, vector<128x512xf32>
    %c0_3 = arith.constant 0 : index
    %c0_4 = arith.constant 0 : index
    %2 = vector.load %arg3[%c0_3, %c0_4] : memref<1x512xf32, #tpu.memory_space<vmem>>, vector<1x512xf32>
    %c0_5 = arith.constant 0 : index
    %c0_6 = arith.constant 0 : index
    %3 = vector.load %arg0[%c0_5, %c0_6] : memref<1x128xf32, #tpu.memory_space<vmem>>, vector<1x128xf32>
    %cst = arith.constant dense<0.000000e+00> : vector<1x512xf32>
    %4 = tpu.matmul %3, %0, %cst {dimension_numbers = #tpu.dot_dimension_numbers<[1], [0], [0], [1], [0, 0, 1, 1], [], []>} : vector<1x128xf32>, vector<128x512xf32>, vector<1x512xf32> -> vector<1x512xf32>
    %5 = arith.addf %4, %2 : vector<1x512xf32>
    %cst_7 = arith.constant 0.000000e+00 : f32
    %6 = vector.broadcast %cst_7 : f32 to vector<1x128xf32>
    %cst_8 = arith.constant 0.000000e+00 : f32
    %7 = vector.broadcast %cst_8 : f32 to vector<1x128xf32>
    %cst_9 = arith.constant dense<0.000000e+00> : vector<1x512xf32>
    %8 = tpu.matmul %6, %1, %cst_9 {dimension_numbers = #tpu.dot_dimension_numbers<[1], [0], [0], [1], [0, 0, 1, 1], [], []>} : vector<1x128xf32>, vector<128x512xf32>, vector<1x512xf32> -> vector<1x512xf32>
    %9 = arith.addf %5, %8 : vector<1x512xf32>
    %10 = vector.extract_strided_slice %9 {offsets = [0, 0], sizes = [1, 128], strides = [1, 1]} : vector<1x512xf32> to vector<1x128xf32>
    %11 = arith.negf %10 : vector<1x128xf32>
    %12 = math.exp %11 : vector<1x128xf32>
    %cst_10 = arith.constant 1.000000e+00 : f32
    %13 = vector.broadcast %cst_10 : f32 to vector<1x128xf32>
    %14 = arith.addf %13, %12 : vector<1x128xf32>
    %15 = arith.divf %13, %14 : vector<1x128xf32>
    %16 = vector.extract_strided_slice %9 {offsets = [0, 128], sizes = [1, 128], strides = [1, 1]} : vector<1x512xf32> to vector<1x128xf32>
    %17 = arith.negf %16 : vector<1x128xf32>
    %18 = math.exp %17 : vector<1x128xf32>
    %cst_11 = arith.constant 1.000000e+00 : f32
    %19 = vector.broadcast %cst_11 : f32 to vector<1x128xf32>
    %20 = arith.addf %19, %18 : vector<1x128xf32>
    %21 = arith.divf %19, %20 : vector<1x128xf32>
    %22 = vector.extract_strided_slice %9 {offsets = [0, 256], sizes = [1, 128], strides = [1, 1]} : vector<1x512xf32> to vector<1x128xf32>
    %23 = math.tanh %22 : vector<1x128xf32>
    %24 = vector.extract_strided_slice %9 {offsets = [0, 384], sizes = [1, 128], strides = [1, 1]} : vector<1x512xf32> to vector<1x128xf32>
    %25 = arith.negf %24 : vector<1x128xf32>
    %26 = math.exp %25 : vector<1x128xf32>
    %cst_12 = arith.constant 1.000000e+00 : f32
    %27 = vector.broadcast %cst_12 : f32 to vector<1x128xf32>
    %28 = arith.addf %27, %26 : vector<1x128xf32>
    %29 = arith.divf %27, %28 : vector<1x128xf32>
    %30 = arith.mulf %21, %7 : vector<1x128xf32>
    %31 = arith.mulf %15, %23 : vector<1x128xf32>
    %32 = arith.addf %30, %31 : vector<1x128xf32>
    %33 = math.tanh %32 : vector<1x128xf32>
    %34 = arith.mulf %29, %33 : vector<1x128xf32>
    %35 = arith.negf %34 : vector<1x128xf32>
    %36 = math.exp %35 : vector<1x128xf32>
    %cst_13 = arith.constant 1.000000e+00 : f32
    %37 = vector.broadcast %cst_13 : f32 to vector<1x128xf32>
    %38 = arith.addf %37, %36 : vector<1x128xf32>
    %39 = arith.divf %37, %38 : vector<1x128xf32>
    %c0_14 = arith.constant 0 : index
    %c0_15 = arith.constant 0 : index
    %40 = vector.load %arg12[%c0_14, %c0_15] : memref<8x128xf32, #tpu.memory_space<vmem>>, vector<1x128xf32>
    tpu.vector_store %arg12[%c0_14, %c0_15], %39 {strides = array<i32>} : memref<8x128xf32, #tpu.memory_space<vmem>>, vector<1x128xf32>,
    %cst_16 = arith.constant dense<0.000000e+00> : vector<1x512xf32>
    %41 = tpu.matmul %34, %1, %cst_16 {dimension_numbers = #tpu.dot_dimension_numbers<[1], [0], [0], [1], [0, 0, 1, 1], [], []>} : vector<1x128xf32>, vector<128x512xf32>, vector<1x512xf32> -> vector<1x512xf32>
    %42 = arith.addf %5, %41 : vector<1x512xf32>
    %43 = vector.extract_strided_slice %42 {offsets = [0, 0], sizes = [1, 128], strides = [1, 1]} : vector<1x512xf32> to vector<1x128xf32>
    %44 = arith.negf %43 : vector<1x128xf32>
    %45 = math.exp %44 : vector<1x128xf32>
    %cst_17 = arith.constant 1.000000e+00 : f32
    %46 = vector.broadcast %cst_17 : f32 to vector<1x128xf32>
    %47 = arith.addf %46, %45 : vector<1x128xf32>
    %48 = arith.divf %46, %47 : vector<1x128xf32>
    %49 = vector.extract_strided_slice %42 {offsets = [0, 128], sizes = [1, 128], strides = [1, 1]} : vector<1x512xf32> to vector<1x128xf32>
    %50 = arith.negf %49 : vector<1x128xf32>
    %51 = math.exp %50 : vector<1x128xf32>
    %cst_18 = arith.constant 1.000000e+00 : f32
    %52 = vector.broadcast %cst_18 : f32 to vector<1x128xf32>
    %53 = arith.addf %52, %51 : vector<1x128xf32>
    %54 = arith.divf %52, %53 : vector<1x128xf32>
    %55 = vector.extract_strided_slice %42 {offsets = [0, 256], sizes = [1, 128], strides = [1, 1]} : vector<1x512xf32> to vector<1x128xf32>
    %56 = math.tanh %55 : vector<1x128xf32>
    %57 = vector.extract_strided_slice %42 {offsets = [0, 384], sizes = [1, 128], strides = [1, 1]} : vector<1x512xf32> to vector<1x128xf32>
    %58 = arith.negf %57 : vector<1x128xf32>
    %59 = math.exp %58 : vector<1x128xf32>
    %cst_19 = arith.constant 1.000000e+00 : f32
    %60 = vector.broadcast %cst_19 : f32 to vector<1x128xf32>
    %61 = arith.addf %60, %59 : vector<1x128xf32>
    %62 = arith.divf %60, %61 : vector<1x128xf32>
    %63 = arith.mulf %54, %32 : vector<1x128xf32>
    %64 = arith.mulf %48, %56 : vector<1x128xf32>
    %65 = arith.addf %63, %64 : vector<1x128xf32>
    %66 = math.tanh %65 : vector<1x128xf32>
    %67 = arith.mulf %62, %66 : vector<1x128xf32>
    %68 = arith.negf %67 : vector<1x128xf32>
    %69 = math.exp %68 : vector<1x128xf32>
    %cst_20 = arith.constant 1.000000e+00 : f32
    %70 = vector.broadcast %cst_20 : f32 to vector<1x128xf32>
    %71 = arith.addf %70, %69 : vector<1x128xf32>
    %72 = arith.divf %70, %71 : vector<1x128xf32>
    %c1 = arith.constant 1 : index
    %c0_21 = arith.constant 0 : index
    %73 = vector.load %arg12[%c1, %c0_21] : memref<8x128xf32, #tpu.memory_space<vmem>>, vector<1x128xf32>
    tpu.vector_store %arg12[%c1, %c0_21], %72 {strides = array<i32>} : memref<8x128xf32, #tpu.memory_space<vmem>>, vector<1x128xf32>,
    %cst_22 = arith.constant dense<0.000000e+00> : vector<1x512xf32>
    %74 = tpu.matmul %67, %1, %cst_22 {dimension_numbers = #tpu.dot_dimension_numbers<[1], [0], [0], [1], [0, 0, 1, 1], [], []>} : vector<1x128xf32>, vector<128x512xf32>, vector<1x512xf32> -> vector<1x512xf32>
    %75 = arith.addf %5, %74 : vector<1x512xf32>
    %76 = vector.extract_strided_slice %75 {offsets = [0, 0], sizes = [1, 128], strides = [1, 1]} : vector<1x512xf32> to vector<1x128xf32>
    %77 = arith.negf %76 : vector<1x128xf32>
    %78 = math.exp %77 : vector<1x128xf32>
    %cst_23 = arith.constant 1.000000e+00 : f32
    %79 = vector.broadcast %cst_23 : f32 to vector<1x128xf32>
    %80 = arith.addf %79, %78 : vector<1x128xf32>
    %81 = arith.divf %79, %80 : vector<1x128xf32>
    %82 = vector.extract_strided_slice %75 {offsets = [0, 128], sizes = [1, 128], strides = [1, 1]} : vector<1x512xf32> to vector<1x128xf32>
    %83 = arith.negf %82 : vector<1x128xf32>
    %84 = math.exp %83 : vector<1x128xf32>
    %cst_24 = arith.constant 1.000000e+00 : f32
    %85 = vector.broadcast %cst_24 : f32 to vector<1x128xf32>
    %86 = arith.addf %85, %84 : vector<1x128xf32>
    %87 = arith.divf %85, %86 : vector<1x128xf32>
    %88 = vector.extract_strided_slice %75 {offsets = [0, 256], sizes = [1, 128], strides = [1, 1]} : vector<1x512xf32> to vector<1x128xf32>
    %89 = math.tanh %88 : vector<1x128xf32>
    %90 = vector.extract_strided_slice %75 {offsets = [0, 384], sizes = [1, 128], strides = [1, 1]} : vector<1x512xf32> to vector<1x128xf32>
    %91 = arith.negf %90 : vector<1x128xf32>
    %92 = math.exp %91 : vector<1x128xf32>
    %cst_25 = arith.constant 1.000000e+00 : f32
    %93 = vector.broadcast %cst_25 : f32 to vector<1x128xf32>
    %94 = arith.addf %93, %92 : vector<1x128xf32>
    %95 = arith.divf %93, %94 : vector<1x128xf32>
    %96 = arith.mulf %87, %65 : vector<1x128xf32>
    %97 = arith.mulf %81, %89 : vector<1x128xf32>
    %98 = arith.addf %96, %97 : vector<1x128xf32>
    %99 = math.tanh %98 : vector<1x128xf32>
    %100 = arith.mulf %95, %99 : vector<1x128xf32>
    %101 = arith.negf %100 : vector<1x128xf32>
    %102 = math.exp %101 : vector<1x128xf32>
    %cst_26 = arith.constant 1.000000e+00 : f32
    %103 = vector.broadcast %cst_26 : f32 to vector<1x128xf32>
    %104 = arith.addf %103, %102 : vector<1x128xf32>
    %105 = arith.divf %103, %104 : vector<1x128xf32>
    %c2 = arith.constant 2 : index
    %c0_27 = arith.constant 0 : index
    %106 = vector.load %arg12[%c2, %c0_27] : memref<8x128xf32, #tpu.memory_space<vmem>>, vector<1x128xf32>
    tpu.vector_store %arg12[%c2, %c0_27], %105 {strides = array<i32>} : memref<8x128xf32, #tpu.memory_space<vmem>>, vector<1x128xf32>,
    %cst_28 = arith.constant dense<0.000000e+00> : vector<1x512xf32>
    %107 = tpu.matmul %100, %1, %cst_28 {dimension_numbers = #tpu.dot_dimension_numbers<[1], [0], [0], [1], [0, 0, 1, 1], [], []>} : vector<1x128xf32>, vector<128x512xf32>, vector<1x512xf32> -> vector<1x512xf32>
    %108 = arith.addf %5, %107 : vector<1x512xf32>
    %109 = vector.extract_strided_slice %108 {offsets = [0, 0], sizes = [1, 128], strides = [1, 1]} : vector<1x512xf32> to vector<1x128xf32>
    %110 = arith.negf %109 : vector<1x128xf32>
    %111 = math.exp %110 : vector<1x128xf32>
    %cst_29 = arith.constant 1.000000e+00 : f32
    %112 = vector.broadcast %cst_29 : f32 to vector<1x128xf32>
    %113 = arith.addf %112, %111 : vector<1x128xf32>
    %114 = arith.divf %112, %113 : vector<1x128xf32>
    %115 = vector.extract_strided_slice %108 {offsets = [0, 128], sizes = [1, 128], strides = [1, 1]} : vector<1x512xf32> to vector<1x128xf32>
    %116 = arith.negf %115 : vector<1x128xf32>
    %117 = math.exp %116 : vector<1x128xf32>
    %cst_30 = arith.constant 1.000000e+00 : f32
    %118 = vector.broadcast %cst_30 : f32 to vector<1x128xf32>
    %119 = arith.addf %118, %117 : vector<1x128xf32>
    %120 = arith.divf %118, %119 : vector<1x128xf32>
    %121 = vector.extract_strided_slice %108 {offsets = [0, 256], sizes = [1, 128], strides = [1, 1]} : vector<1x512xf32> to vector<1x128xf32>
    %122 = math.tanh %121 : vector<1x128xf32>
    %123 = vector.extract_strided_slice %108 {offsets = [0, 384], sizes = [1, 128], strides = [1, 1]} : vector<1x512xf32> to vector<1x128xf32>
    %124 = arith.negf %123 : vector<1x128xf32>
    %125 = math.exp %124 : vector<1x128xf32>
    %cst_31 = arith.constant 1.000000e+00 : f32
    %126 = vector.broadcast %cst_31 : f32 to vector<1x128xf32>
    %127 = arith.addf %126, %125 : vector<1x128xf32>
    %128 = arith.divf %126, %127 : vector<1x128xf32>
    %129 = arith.mulf %120, %98 : vector<1x128xf32>
    %130 = arith.mulf %114, %122 : vector<1x128xf32>
    %131 = arith.addf %129, %130 : vector<1x128xf32>
    %132 = math.tanh %131 : vector<1x128xf32>
    %133 = arith.mulf %128, %132 : vector<1x128xf32>
    %134 = arith.negf %133 : vector<1x128xf32>
    %135 = math.exp %134 : vector<1x128xf32>
    %cst_32 = arith.constant 1.000000e+00 : f32
    %136 = vector.broadcast %cst_32 : f32 to vector<1x128xf32>
    %137 = arith.addf %136, %135 : vector<1x128xf32>
    %138 = arith.divf %136, %137 : vector<1x128xf32>
    %c3 = arith.constant 3 : index
    %c0_33 = arith.constant 0 : index
    %139 = vector.load %arg12[%c3, %c0_33] : memref<8x128xf32, #tpu.memory_space<vmem>>, vector<1x128xf32>
    tpu.vector_store %arg12[%c3, %c0_33], %138 {strides = array<i32>} : memref<8x128xf32, #tpu.memory_space<vmem>>, vector<1x128xf32>,
    %cst_34 = arith.constant dense<0.000000e+00> : vector<1x512xf32>
    %140 = tpu.matmul %133, %1, %cst_34 {dimension_numbers = #tpu.dot_dimension_numbers<[1], [0], [0], [1], [0, 0, 1, 1], [], []>} : vector<1x128xf32>, vector<128x512xf32>, vector<1x512xf32> -> vector<1x512xf32>
    %141 = arith.addf %5, %140 : vector<1x512xf32>
    %142 = vector.extract_strided_slice %141 {offsets = [0, 0], sizes = [1, 128], strides = [1, 1]} : vector<1x512xf32> to vector<1x128xf32>
    %143 = arith.negf %142 : vector<1x128xf32>
    %144 = math.exp %143 : vector<1x128xf32>
    %cst_35 = arith.constant 1.000000e+00 : f32
    %145 = vector.broadcast %cst_35 : f32 to vector<1x128xf32>
    %146 = arith.addf %145, %144 : vector<1x128xf32>
    %147 = arith.divf %145, %146 : vector<1x128xf32>
    %148 = vector.extract_strided_slice %141 {offsets = [0, 128], sizes = [1, 128], strides = [1, 1]} : vector<1x512xf32> to vector<1x128xf32>
    %149 = arith.negf %148 : vector<1x128xf32>
    %150 = math.exp %149 : vector<1x128xf32>
    %cst_36 = arith.constant 1.000000e+00 : f32
    %151 = vector.broadcast %cst_36 : f32 to vector<1x128xf32>
    %152 = arith.addf %151, %150 : vector<1x128xf32>
    %153 = arith.divf %151, %152 : vector<1x128xf32>
    %154 = vector.extract_strided_slice %141 {offsets = [0, 256], sizes = [1, 128], strides = [1, 1]} : vector<1x512xf32> to vector<1x128xf32>
    %155 = math.tanh %154 : vector<1x128xf32>
    %156 = vector.extract_strided_slice %141 {offsets = [0, 384], sizes = [1, 128], strides = [1, 1]} : vector<1x512xf32> to vector<1x128xf32>
    %157 = arith.negf %156 : vector<1x128xf32>
    %158 = math.exp %157 : vector<1x128xf32>
    %cst_37 = arith.constant 1.000000e+00 : f32
    %159 = vector.broadcast %cst_37 : f32 to vector<1x128xf32>
    %160 = arith.addf %159, %158 : vector<1x128xf32>
    %161 = arith.divf %159, %160 : vector<1x128xf32>
    %162 = arith.mulf %153, %131 : vector<1x128xf32>
    %163 = arith.mulf %147, %155 : vector<1x128xf32>
    %164 = arith.addf %162, %163 : vector<1x128xf32>
    %165 = math.tanh %164 : vector<1x128xf32>
    %166 = arith.mulf %161, %165 : vector<1x128xf32>
    %167 = arith.negf %166 : vector<1x128xf32>
    %168 = math.exp %167 : vector<1x128xf32>
    %cst_38 = arith.constant 1.000000e+00 : f32
    %169 = vector.broadcast %cst_38 : f32 to vector<1x128xf32>
    %170 = arith.addf %169, %168 : vector<1x128xf32>
    %171 = arith.divf %169, %170 : vector<1x128xf32>
    %c4 = arith.constant 4 : index
    %c0_39 = arith.constant 0 : index
    %172 = vector.load %arg12[%c4, %c0_39] : memref<8x128xf32, #tpu.memory_space<vmem>>, vector<1x128xf32>
    tpu.vector_store %arg12[%c4, %c0_39], %171 {strides = array<i32>} : memref<8x128xf32, #tpu.memory_space<vmem>>, vector<1x128xf32>,
    %cst_40 = arith.constant dense<0.000000e+00> : vector<1x512xf32>
    %173 = tpu.matmul %166, %1, %cst_40 {dimension_numbers = #tpu.dot_dimension_numbers<[1], [0], [0], [1], [0, 0, 1, 1], [], []>} : vector<1x128xf32>, vector<128x512xf32>, vector<1x512xf32> -> vector<1x512xf32>
    %174 = arith.addf %5, %173 : vector<1x512xf32>
    %175 = vector.extract_strided_slice %174 {offsets = [0, 0], sizes = [1, 128], strides = [1, 1]} : vector<1x512xf32> to vector<1x128xf32>
    %176 = arith.negf %175 : vector<1x128xf32>
    %177 = math.exp %176 : vector<1x128xf32>
    %cst_41 = arith.constant 1.000000e+00 : f32
    %178 = vector.broadcast %cst_41 : f32 to vector<1x128xf32>
    %179 = arith.addf %178, %177 : vector<1x128xf32>
    %180 = arith.divf %178, %179 : vector<1x128xf32>
    %181 = vector.extract_strided_slice %174 {offsets = [0, 128], sizes = [1, 128], strides = [1, 1]} : vector<1x512xf32> to vector<1x128xf32>
    %182 = arith.negf %181 : vector<1x128xf32>
    %183 = math.exp %182 : vector<1x128xf32>
    %cst_42 = arith.constant 1.000000e+00 : f32
    %184 = vector.broadcast %cst_42 : f32 to vector<1x128xf32>
    %185 = arith.addf %184, %183 : vector<1x128xf32>
    %186 = arith.divf %184, %185 : vector<1x128xf32>
    %187 = vector.extract_strided_slice %174 {offsets = [0, 256], sizes = [1, 128], strides = [1, 1]} : vector<1x512xf32> to vector<1x128xf32>
    %188 = math.tanh %187 : vector<1x128xf32>
    %189 = vector.extract_strided_slice %174 {offsets = [0, 384], sizes = [1, 128], strides = [1, 1]} : vector<1x512xf32> to vector<1x128xf32>
    %190 = arith.negf %189 : vector<1x128xf32>
    %191 = math.exp %190 : vector<1x128xf32>
    %cst_43 = arith.constant 1.000000e+00 : f32
    %192 = vector.broadcast %cst_43 : f32 to vector<1x128xf32>
    %193 = arith.addf %192, %191 : vector<1x128xf32>
    %194 = arith.divf %192, %193 : vector<1x128xf32>
    %195 = arith.mulf %186, %164 : vector<1x128xf32>
    %196 = arith.mulf %180, %188 : vector<1x128xf32>
    %197 = arith.addf %195, %196 : vector<1x128xf32>
    %198 = math.tanh %197 : vector<1x128xf32>
    %199 = arith.mulf %194, %198 : vector<1x128xf32>
    %200 = arith.negf %199 : vector<1x128xf32>
    %201 = math.exp %200 : vector<1x128xf32>
    %cst_44 = arith.constant 1.000000e+00 : f32
    %202 = vector.broadcast %cst_44 : f32 to vector<1x128xf32>
    %203 = arith.addf %202, %201 : vector<1x128xf32>
    %204 = arith.divf %202, %203 : vector<1x128xf32>
    %c5 = arith.constant 5 : index
    %c0_45 = arith.constant 0 : index
    %205 = vector.load %arg12[%c5, %c0_45] : memref<8x128xf32, #tpu.memory_space<vmem>>, vector<1x128xf32>
    tpu.vector_store %arg12[%c5, %c0_45], %204 {strides = array<i32>} : memref<8x128xf32, #tpu.memory_space<vmem>>, vector<1x128xf32>,
    %cst_46 = arith.constant dense<0.000000e+00> : vector<1x512xf32>
    %206 = tpu.matmul %199, %1, %cst_46 {dimension_numbers = #tpu.dot_dimension_numbers<[1], [0], [0], [1], [0, 0, 1, 1], [], []>} : vector<1x128xf32>, vector<128x512xf32>, vector<1x512xf32> -> vector<1x512xf32>
    %207 = arith.addf %5, %206 : vector<1x512xf32>
    %208 = vector.extract_strided_slice %207 {offsets = [0, 0], sizes = [1, 128], strides = [1, 1]} : vector<1x512xf32> to vector<1x128xf32>
    %209 = arith.negf %208 : vector<1x128xf32>
    %210 = math.exp %209 : vector<1x128xf32>
    %cst_47 = arith.constant 1.000000e+00 : f32
    %211 = vector.broadcast %cst_47 : f32 to vector<1x128xf32>
    %212 = arith.addf %211, %210 : vector<1x128xf32>
    %213 = arith.divf %211, %212 : vector<1x128xf32>
    %214 = vector.extract_strided_slice %207 {offsets = [0, 128], sizes = [1, 128], strides = [1, 1]} : vector<1x512xf32> to vector<1x128xf32>
    %215 = arith.negf %214 : vector<1x128xf32>
    %216 = math.exp %215 : vector<1x128xf32>
    %cst_48 = arith.constant 1.000000e+00 : f32
    %217 = vector.broadcast %cst_48 : f32 to vector<1x128xf32>
    %218 = arith.addf %217, %216 : vector<1x128xf32>
    %219 = arith.divf %217, %218 : vector<1x128xf32>
    %220 = vector.extract_strided_slice %207 {offsets = [0, 256], sizes = [1, 128], strides = [1, 1]} : vector<1x512xf32> to vector<1x128xf32>
    %221 = math.tanh %220 : vector<1x128xf32>
    %222 = vector.extract_strided_slice %207 {offsets = [0, 384], sizes = [1, 128], strides = [1, 1]} : vector<1x512xf32> to vector<1x128xf32>
    %223 = arith.negf %222 : vector<1x128xf32>
    %224 = math.exp %223 : vector<1x128xf32>
    %cst_49 = arith.constant 1.000000e+00 : f32
    %225 = vector.broadcast %cst_49 : f32 to vector<1x128xf32>
    %226 = arith.addf %225, %224 : vector<1x128xf32>
    %227 = arith.divf %225, %226 : vector<1x128xf32>
    %228 = arith.mulf %219, %197 : vector<1x128xf32>
    %229 = arith.mulf %213, %221 : vector<1x128xf32>
    %230 = arith.addf %228, %229 : vector<1x128xf32>
    %231 = math.tanh %230 : vector<1x128xf32>
    %232 = arith.mulf %227, %231 : vector<1x128xf32>
    %233 = arith.negf %232 : vector<1x128xf32>
    %234 = math.exp %233 : vector<1x128xf32>
    %cst_50 = arith.constant 1.000000e+00 : f32
    %235 = vector.broadcast %cst_50 : f32 to vector<1x128xf32>
    %236 = arith.addf %235, %234 : vector<1x128xf32>
    %237 = arith.divf %235, %236 : vector<1x128xf32>
    %c6 = arith.constant 6 : index
    %c0_51 = arith.constant 0 : index
    %238 = vector.load %arg12[%c6, %c0_51] : memref<8x128xf32, #tpu.memory_space<vmem>>, vector<1x128xf32>
    tpu.vector_store %arg12[%c6, %c0_51], %237 {strides = array<i32>} : memref<8x128xf32, #tpu.memory_space<vmem>>, vector<1x128xf32>,
    %cst_52 = arith.constant dense<0.000000e+00> : vector<1x512xf32>
    %239 = tpu.matmul %232, %1, %cst_52 {dimension_numbers = #tpu.dot_dimension_numbers<[1], [0], [0], [1], [0, 0, 1, 1], [], []>} : vector<1x128xf32>, vector<128x512xf32>, vector<1x512xf32> -> vector<1x512xf32>
    %240 = arith.addf %5, %239 : vector<1x512xf32>
    %241 = vector.extract_strided_slice %240 {offsets = [0, 0], sizes = [1, 128], strides = [1, 1]} : vector<1x512xf32> to vector<1x128xf32>
    %242 = arith.negf %241 : vector<1x128xf32>
    %243 = math.exp %242 : vector<1x128xf32>
    %cst_53 = arith.constant 1.000000e+00 : f32
    %244 = vector.broadcast %cst_53 : f32 to vector<1x128xf32>
    %245 = arith.addf %244, %243 : vector<1x128xf32>
    %246 = arith.divf %244, %245 : vector<1x128xf32>
    %247 = vector.extract_strided_slice %240 {offsets = [0, 128], sizes = [1, 128], strides = [1, 1]} : vector<1x512xf32> to vector<1x128xf32>
    %248 = arith.negf %247 : vector<1x128xf32>
    %249 = math.exp %248 : vector<1x128xf32>
    %cst_54 = arith.constant 1.000000e+00 : f32
    %250 = vector.broadcast %cst_54 : f32 to vector<1x128xf32>
    %251 = arith.addf %250, %249 : vector<1x128xf32>
    %252 = arith.divf %250, %251 : vector<1x128xf32>
    %253 = vector.extract_strided_slice %240 {offsets = [0, 256], sizes = [1, 128], strides = [1, 1]} : vector<1x512xf32> to vector<1x128xf32>
    %254 = math.tanh %253 : vector<1x128xf32>
    %255 = vector.extract_strided_slice %240 {offsets = [0, 384], sizes = [1, 128], strides = [1, 1]} : vector<1x512xf32> to vector<1x128xf32>
    %256 = arith.negf %255 : vector<1x128xf32>
    %257 = math.exp %256 : vector<1x128xf32>
    %cst_55 = arith.constant 1.000000e+00 : f32
    %258 = vector.broadcast %cst_55 : f32 to vector<1x128xf32>
    %259 = arith.addf %258, %257 : vector<1x128xf32>
    %260 = arith.divf %258, %259 : vector<1x128xf32>
    %261 = arith.mulf %252, %230 : vector<1x128xf32>
    %262 = arith.mulf %246, %254 : vector<1x128xf32>
    %263 = arith.addf %261, %262 : vector<1x128xf32>
    %264 = math.tanh %263 : vector<1x128xf32>
    %265 = arith.mulf %260, %264 : vector<1x128xf32>
    %266 = arith.negf %265 : vector<1x128xf32>
    %267 = math.exp %266 : vector<1x128xf32>
    %cst_56 = arith.constant 1.000000e+00 : f32
    %268 = vector.broadcast %cst_56 : f32 to vector<1x128xf32>
    %269 = arith.addf %268, %267 : vector<1x128xf32>
    %270 = arith.divf %268, %269 : vector<1x128xf32>
    %c7 = arith.constant 7 : index
    %c0_57 = arith.constant 0 : index
    %271 = vector.load %arg12[%c7, %c0_57] : memref<8x128xf32, #tpu.memory_space<vmem>>, vector<1x128xf32>
    tpu.vector_store %arg12[%c7, %c0_57], %270 {strides = array<i32>} : memref<8x128xf32, #tpu.memory_space<vmem>>, vector<1x128xf32>,
    %c0_58 = arith.constant 0 : index
    %c0_59 = arith.constant 0 : index
    %272 = vector.load %arg4[%c0_58, %c0_59] : memref<128x512xf32, #tpu.memory_space<vmem>>, vector<128x512xf32>
    %c0_60 = arith.constant 0 : index
    %c0_61 = arith.constant 0 : index
    %273 = vector.load %arg5[%c0_60, %c0_61] : memref<128x512xf32, #tpu.memory_space<vmem>>, vector<128x512xf32>
    %c0_62 = arith.constant 0 : index
    %c0_63 = arith.constant 0 : index
    %274 = vector.load %arg6[%c0_62, %c0_63] : memref<1x512xf32, #tpu.memory_space<vmem>>, vector<1x512xf32>
    %c0_64 = arith.constant 0 : index
    %c0_65 = arith.constant 0 : index
    %275 = vector.load %arg12[%c0_64, %c0_65] : memref<8x128xf32, #tpu.memory_space<vmem>>, vector<8x128xf32>
    %cst_66 = arith.constant dense<0.000000e+00> : vector<8x512xf32>
    %276 = tpu.matmul %275, %272, %cst_66 {dimension_numbers = #tpu.dot_dimension_numbers<[1], [0], [0], [1], [0, 0, 1, 1], [], []>} : vector<8x128xf32>, vector<128x512xf32>, vector<8x512xf32> -> vector<8x512xf32>
    %277 = vector.broadcast %274 : vector<1x512xf32> to vector<8x512xf32>
    %278 = arith.addf %276, %277 : vector<8x512xf32>
    %cst_67 = arith.constant 0.000000e+00 : f32
    %279 = vector.broadcast %cst_67 : f32 to vector<1x128xf32>
    %cst_68 = arith.constant 0.000000e+00 : f32
    %280 = vector.broadcast %cst_68 : f32 to vector<1x128xf32>
    %281 = vector.extract_strided_slice %278 {offsets = [0, 0], sizes = [1, 512], strides = [1, 1]} : vector<8x512xf32> to vector<1x512xf32>
    %cst_69 = arith.constant dense<0.000000e+00> : vector<1x512xf32>
    %282 = tpu.matmul %279, %273, %cst_69 {dimension_numbers = #tpu.dot_dimension_numbers<[1], [0], [0], [1], [0, 0, 1, 1], [], []>} : vector<1x128xf32>, vector<128x512xf32>, vector<1x512xf32> -> vector<1x512xf32>
    %283 = arith.addf %281, %282 : vector<1x512xf32>
    %284 = vector.extract_strided_slice %283 {offsets = [0, 0], sizes = [1, 128], strides = [1, 1]} : vector<1x512xf32> to vector<1x128xf32>
    %285 = arith.negf %284 : vector<1x128xf32>
    %286 = math.exp %285 : vector<1x128xf32>
    %cst_70 = arith.constant 1.000000e+00 : f32
    %287 = vector.broadcast %cst_70 : f32 to vector<1x128xf32>
    %288 = arith.addf %287, %286 : vector<1x128xf32>
    %289 = arith.divf %287, %288 : vector<1x128xf32>
    %290 = vector.extract_strided_slice %283 {offsets = [0, 128], sizes = [1, 128], strides = [1, 1]} : vector<1x512xf32> to vector<1x128xf32>
    %291 = arith.negf %290 : vector<1x128xf32>
    %292 = math.exp %291 : vector<1x128xf32>
    %cst_71 = arith.constant 1.000000e+00 : f32
    %293 = vector.broadcast %cst_71 : f32 to vector<1x128xf32>
    %294 = arith.addf %293, %292 : vector<1x128xf32>
    %295 = arith.divf %293, %294 : vector<1x128xf32>
    %296 = vector.extract_strided_slice %283 {offsets = [0, 256], sizes = [1, 128], strides = [1, 1]} : vector<1x512xf32> to vector<1x128xf32>
    %297 = math.tanh %296 : vector<1x128xf32>
    %298 = vector.extract_strided_slice %283 {offsets = [0, 384], sizes = [1, 128], strides = [1, 1]} : vector<1x512xf32> to vector<1x128xf32>
    %299 = arith.negf %298 : vector<1x128xf32>
    %300 = math.exp %299 : vector<1x128xf32>
    %cst_72 = arith.constant 1.000000e+00 : f32
    %301 = vector.broadcast %cst_72 : f32 to vector<1x128xf32>
    %302 = arith.addf %301, %300 : vector<1x128xf32>
    %303 = arith.divf %301, %302 : vector<1x128xf32>
    %304 = arith.mulf %295, %280 : vector<1x128xf32>
    %305 = arith.mulf %289, %297 : vector<1x128xf32>
    %306 = arith.addf %304, %305 : vector<1x128xf32>
    %307 = math.tanh %306 : vector<1x128xf32>
    %308 = arith.mulf %303, %307 : vector<1x128xf32>
    %309 = arith.negf %308 : vector<1x128xf32>
    %310 = math.exp %309 : vector<1x128xf32>
    %cst_73 = arith.constant 1.000000e+00 : f32
    %311 = vector.broadcast %cst_73 : f32 to vector<1x128xf32>
    %312 = arith.addf %311, %310 : vector<1x128xf32>
    %313 = arith.divf %311, %312 : vector<1x128xf32>
    %c0_74 = arith.constant 0 : index
    %c0_75 = arith.constant 0 : index
    %314 = vector.load %arg12[%c0_74, %c0_75] : memref<8x128xf32, #tpu.memory_space<vmem>>, vector<1x128xf32>
    tpu.vector_store %arg12[%c0_74, %c0_75], %313 {strides = array<i32>} : memref<8x128xf32, #tpu.memory_space<vmem>>, vector<1x128xf32>,
    %315 = vector.extract_strided_slice %278 {offsets = [1, 0], sizes = [1, 512], strides = [1, 1]} : vector<8x512xf32> to vector<1x512xf32>
    %cst_76 = arith.constant dense<0.000000e+00> : vector<1x512xf32>
    %316 = tpu.matmul %308, %273, %cst_76 {dimension_numbers = #tpu.dot_dimension_numbers<[1], [0], [0], [1], [0, 0, 1, 1], [], []>} : vector<1x128xf32>, vector<128x512xf32>, vector<1x512xf32> -> vector<1x512xf32>
    %317 = arith.addf %315, %316 : vector<1x512xf32>
    %318 = vector.extract_strided_slice %317 {offsets = [0, 0], sizes = [1, 128], strides = [1, 1]} : vector<1x512xf32> to vector<1x128xf32>
    %319 = arith.negf %318 : vector<1x128xf32>
    %320 = math.exp %319 : vector<1x128xf32>
    %cst_77 = arith.constant 1.000000e+00 : f32
    %321 = vector.broadcast %cst_77 : f32 to vector<1x128xf32>
    %322 = arith.addf %321, %320 : vector<1x128xf32>
    %323 = arith.divf %321, %322 : vector<1x128xf32>
    %324 = vector.extract_strided_slice %317 {offsets = [0, 128], sizes = [1, 128], strides = [1, 1]} : vector<1x512xf32> to vector<1x128xf32>
    %325 = arith.negf %324 : vector<1x128xf32>
    %326 = math.exp %325 : vector<1x128xf32>
    %cst_78 = arith.constant 1.000000e+00 : f32
    %327 = vector.broadcast %cst_78 : f32 to vector<1x128xf32>
    %328 = arith.addf %327, %326 : vector<1x128xf32>
    %329 = arith.divf %327, %328 : vector<1x128xf32>
    %330 = vector.extract_strided_slice %317 {offsets = [0, 256], sizes = [1, 128], strides = [1, 1]} : vector<1x512xf32> to vector<1x128xf32>
    %331 = math.tanh %330 : vector<1x128xf32>
    %332 = vector.extract_strided_slice %317 {offsets = [0, 384], sizes = [1, 128], strides = [1, 1]} : vector<1x512xf32> to vector<1x128xf32>
    %333 = arith.negf %332 : vector<1x128xf32>
    %334 = math.exp %333 : vector<1x128xf32>
    %cst_79 = arith.constant 1.000000e+00 : f32
    %335 = vector.broadcast %cst_79 : f32 to vector<1x128xf32>
    %336 = arith.addf %335, %334 : vector<1x128xf32>
    %337 = arith.divf %335, %336 : vector<1x128xf32>
    %338 = arith.mulf %329, %306 : vector<1x128xf32>
    %339 = arith.mulf %323, %331 : vector<1x128xf32>
    %340 = arith.addf %338, %339 : vector<1x128xf32>
    %341 = math.tanh %340 : vector<1x128xf32>
    %342 = arith.mulf %337, %341 : vector<1x128xf32>
    %343 = arith.negf %342 : vector<1x128xf32>
    %344 = math.exp %343 : vector<1x128xf32>
    %cst_80 = arith.constant 1.000000e+00 : f32
    %345 = vector.broadcast %cst_80 : f32 to vector<1x128xf32>
    %346 = arith.addf %345, %344 : vector<1x128xf32>
    %347 = arith.divf %345, %346 : vector<1x128xf32>
    %c1_81 = arith.constant 1 : index
    %c0_82 = arith.constant 0 : index
    %348 = vector.load %arg12[%c1_81, %c0_82] : memref<8x128xf32, #tpu.memory_space<vmem>>, vector<1x128xf32>
    tpu.vector_store %arg12[%c1_81, %c0_82], %347 {strides = array<i32>} : memref<8x128xf32, #tpu.memory_space<vmem>>, vector<1x128xf32>,
    %349 = vector.extract_strided_slice %278 {offsets = [2, 0], sizes = [1, 512], strides = [1, 1]} : vector<8x512xf32> to vector<1x512xf32>
    %cst_83 = arith.constant dense<0.000000e+00> : vector<1x512xf32>
    %350 = tpu.matmul %342, %273, %cst_83 {dimension_numbers = #tpu.dot_dimension_numbers<[1], [0], [0], [1], [0, 0, 1, 1], [], []>} : vector<1x128xf32>, vector<128x512xf32>, vector<1x512xf32> -> vector<1x512xf32>
    %351 = arith.addf %349, %350 : vector<1x512xf32>
    %352 = vector.extract_strided_slice %351 {offsets = [0, 0], sizes = [1, 128], strides = [1, 1]} : vector<1x512xf32> to vector<1x128xf32>
    %353 = arith.negf %352 : vector<1x128xf32>
    %354 = math.exp %353 : vector<1x128xf32>
    %cst_84 = arith.constant 1.000000e+00 : f32
    %355 = vector.broadcast %cst_84 : f32 to vector<1x128xf32>
    %356 = arith.addf %355, %354 : vector<1x128xf32>
    %357 = arith.divf %355, %356 : vector<1x128xf32>
    %358 = vector.extract_strided_slice %351 {offsets = [0, 128], sizes = [1, 128], strides = [1, 1]} : vector<1x512xf32> to vector<1x128xf32>
    %359 = arith.negf %358 : vector<1x128xf32>
    %360 = math.exp %359 : vector<1x128xf32>
    %cst_85 = arith.constant 1.000000e+00 : f32
    %361 = vector.broadcast %cst_85 : f32 to vector<1x128xf32>
    %362 = arith.addf %361, %360 : vector<1x128xf32>
    %363 = arith.divf %361, %362 : vector<1x128xf32>
    %364 = vector.extract_strided_slice %351 {offsets = [0, 256], sizes = [1, 128], strides = [1, 1]} : vector<1x512xf32> to vector<1x128xf32>
    %365 = math.tanh %364 : vector<1x128xf32>
    %366 = vector.extract_strided_slice %351 {offsets = [0, 384], sizes = [1, 128], strides = [1, 1]} : vector<1x512xf32> to vector<1x128xf32>
    %367 = arith.negf %366 : vector<1x128xf32>
    %368 = math.exp %367 : vector<1x128xf32>
    %cst_86 = arith.constant 1.000000e+00 : f32
    %369 = vector.broadcast %cst_86 : f32 to vector<1x128xf32>
    %370 = arith.addf %369, %368 : vector<1x128xf32>
    %371 = arith.divf %369, %370 : vector<1x128xf32>
    %372 = arith.mulf %363, %340 : vector<1x128xf32>
    %373 = arith.mulf %357, %365 : vector<1x128xf32>
    %374 = arith.addf %372, %373 : vector<1x128xf32>
    %375 = math.tanh %374 : vector<1x128xf32>
    %376 = arith.mulf %371, %375 : vector<1x128xf32>
    %377 = arith.negf %376 : vector<1x128xf32>
    %378 = math.exp %377 : vector<1x128xf32>
    %cst_87 = arith.constant 1.000000e+00 : f32
    %379 = vector.broadcast %cst_87 : f32 to vector<1x128xf32>
    %380 = arith.addf %379, %378 : vector<1x128xf32>
    %381 = arith.divf %379, %380 : vector<1x128xf32>
    %c2_88 = arith.constant 2 : index
    %c0_89 = arith.constant 0 : index
    %382 = vector.load %arg12[%c2_88, %c0_89] : memref<8x128xf32, #tpu.memory_space<vmem>>, vector<1x128xf32>
    tpu.vector_store %arg12[%c2_88, %c0_89], %381 {strides = array<i32>} : memref<8x128xf32, #tpu.memory_space<vmem>>, vector<1x128xf32>,
    %383 = vector.extract_strided_slice %278 {offsets = [3, 0], sizes = [1, 512], strides = [1, 1]} : vector<8x512xf32> to vector<1x512xf32>
    %cst_90 = arith.constant dense<0.000000e+00> : vector<1x512xf32>
    %384 = tpu.matmul %376, %273, %cst_90 {dimension_numbers = #tpu.dot_dimension_numbers<[1], [0], [0], [1], [0, 0, 1, 1], [], []>} : vector<1x128xf32>, vector<128x512xf32>, vector<1x512xf32> -> vector<1x512xf32>
    %385 = arith.addf %383, %384 : vector<1x512xf32>
    %386 = vector.extract_strided_slice %385 {offsets = [0, 0], sizes = [1, 128], strides = [1, 1]} : vector<1x512xf32> to vector<1x128xf32>
    %387 = arith.negf %386 : vector<1x128xf32>
    %388 = math.exp %387 : vector<1x128xf32>
    %cst_91 = arith.constant 1.000000e+00 : f32
    %389 = vector.broadcast %cst_91 : f32 to vector<1x128xf32>
    %390 = arith.addf %389, %388 : vector<1x128xf32>
    %391 = arith.divf %389, %390 : vector<1x128xf32>
    %392 = vector.extract_strided_slice %385 {offsets = [0, 128], sizes = [1, 128], strides = [1, 1]} : vector<1x512xf32> to vector<1x128xf32>
    %393 = arith.negf %392 : vector<1x128xf32>
    %394 = math.exp %393 : vector<1x128xf32>
    %cst_92 = arith.constant 1.000000e+00 : f32
    %395 = vector.broadcast %cst_92 : f32 to vector<1x128xf32>
    %396 = arith.addf %395, %394 : vector<1x128xf32>
    %397 = arith.divf %395, %396 : vector<1x128xf32>
    %398 = vector.extract_strided_slice %385 {offsets = [0, 256], sizes = [1, 128], strides = [1, 1]} : vector<1x512xf32> to vector<1x128xf32>
    %399 = math.tanh %398 : vector<1x128xf32>
    %400 = vector.extract_strided_slice %385 {offsets = [0, 384], sizes = [1, 128], strides = [1, 1]} : vector<1x512xf32> to vector<1x128xf32>
    %401 = arith.negf %400 : vector<1x128xf32>
    %402 = math.exp %401 : vector<1x128xf32>
    %cst_93 = arith.constant 1.000000e+00 : f32
    %403 = vector.broadcast %cst_93 : f32 to vector<1x128xf32>
    %404 = arith.addf %403, %402 : vector<1x128xf32>
    %405 = arith.divf %403, %404 : vector<1x128xf32>
    %406 = arith.mulf %397, %374 : vector<1x128xf32>
    %407 = arith.mulf %391, %399 : vector<1x128xf32>
    %408 = arith.addf %406, %407 : vector<1x128xf32>
    %409 = math.tanh %408 : vector<1x128xf32>
    %410 = arith.mulf %405, %409 : vector<1x128xf32>
    %411 = arith.negf %410 : vector<1x128xf32>
    %412 = math.exp %411 : vector<1x128xf32>
    %cst_94 = arith.constant 1.000000e+00 : f32
    %413 = vector.broadcast %cst_94 : f32 to vector<1x128xf32>
    %414 = arith.addf %413, %412 : vector<1x128xf32>
    %415 = arith.divf %413, %414 : vector<1x128xf32>
    %c3_95 = arith.constant 3 : index
    %c0_96 = arith.constant 0 : index
    %416 = vector.load %arg12[%c3_95, %c0_96] : memref<8x128xf32, #tpu.memory_space<vmem>>, vector<1x128xf32>
    tpu.vector_store %arg12[%c3_95, %c0_96], %415 {strides = array<i32>} : memref<8x128xf32, #tpu.memory_space<vmem>>, vector<1x128xf32>,
    %417 = vector.extract_strided_slice %278 {offsets = [4, 0], sizes = [1, 512], strides = [1, 1]} : vector<8x512xf32> to vector<1x512xf32>
    %cst_97 = arith.constant dense<0.000000e+00> : vector<1x512xf32>
    %418 = tpu.matmul %410, %273, %cst_97 {dimension_numbers = #tpu.dot_dimension_numbers<[1], [0], [0], [1], [0, 0, 1, 1], [], []>} : vector<1x128xf32>, vector<128x512xf32>, vector<1x512xf32> -> vector<1x512xf32>
    %419 = arith.addf %417, %418 : vector<1x512xf32>
    %420 = vector.extract_strided_slice %419 {offsets = [0, 0], sizes = [1, 128], strides = [1, 1]} : vector<1x512xf32> to vector<1x128xf32>
    %421 = arith.negf %420 : vector<1x128xf32>
    %422 = math.exp %421 : vector<1x128xf32>
    %cst_98 = arith.constant 1.000000e+00 : f32
    %423 = vector.broadcast %cst_98 : f32 to vector<1x128xf32>
    %424 = arith.addf %423, %422 : vector<1x128xf32>
    %425 = arith.divf %423, %424 : vector<1x128xf32>
    %426 = vector.extract_strided_slice %419 {offsets = [0, 128], sizes = [1, 128], strides = [1, 1]} : vector<1x512xf32> to vector<1x128xf32>
    %427 = arith.negf %426 : vector<1x128xf32>
    %428 = math.exp %427 : vector<1x128xf32>
    %cst_99 = arith.constant 1.000000e+00 : f32
    %429 = vector.broadcast %cst_99 : f32 to vector<1x128xf32>
    %430 = arith.addf %429, %428 : vector<1x128xf32>
    %431 = arith.divf %429, %430 : vector<1x128xf32>
    %432 = vector.extract_strided_slice %419 {offsets = [0, 256], sizes = [1, 128], strides = [1, 1]} : vector<1x512xf32> to vector<1x128xf32>
    %433 = math.tanh %432 : vector<1x128xf32>
    %434 = vector.extract_strided_slice %419 {offsets = [0, 384], sizes = [1, 128], strides = [1, 1]} : vector<1x512xf32> to vector<1x128xf32>
    %435 = arith.negf %434 : vector<1x128xf32>
    %436 = math.exp %435 : vector<1x128xf32>
    %cst_100 = arith.constant 1.000000e+00 : f32
    %437 = vector.broadcast %cst_100 : f32 to vector<1x128xf32>
    %438 = arith.addf %437, %436 : vector<1x128xf32>
    %439 = arith.divf %437, %438 : vector<1x128xf32>
    %440 = arith.mulf %431, %408 : vector<1x128xf32>
    %441 = arith.mulf %425, %433 : vector<1x128xf32>
    %442 = arith.addf %440, %441 : vector<1x128xf32>
    %443 = math.tanh %442 : vector<1x128xf32>
    %444 = arith.mulf %439, %443 : vector<1x128xf32>
    %445 = arith.negf %444 : vector<1x128xf32>
    %446 = math.exp %445 : vector<1x128xf32>
    %cst_101 = arith.constant 1.000000e+00 : f32
    %447 = vector.broadcast %cst_101 : f32 to vector<1x128xf32>
    %448 = arith.addf %447, %446 : vector<1x128xf32>
    %449 = arith.divf %447, %448 : vector<1x128xf32>
    %c4_102 = arith.constant 4 : index
    %c0_103 = arith.constant 0 : index
    %450 = vector.load %arg12[%c4_102, %c0_103] : memref<8x128xf32, #tpu.memory_space<vmem>>, vector<1x128xf32>
    tpu.vector_store %arg12[%c4_102, %c0_103], %449 {strides = array<i32>} : memref<8x128xf32, #tpu.memory_space<vmem>>, vector<1x128xf32>,
    %451 = vector.extract_strided_slice %278 {offsets = [5, 0], sizes = [1, 512], strides = [1, 1]} : vector<8x512xf32> to vector<1x512xf32>
    %cst_104 = arith.constant dense<0.000000e+00> : vector<1x512xf32>
    %452 = tpu.matmul %444, %273, %cst_104 {dimension_numbers = #tpu.dot_dimension_numbers<[1], [0], [0], [1], [0, 0, 1, 1], [], []>} : vector<1x128xf32>, vector<128x512xf32>, vector<1x512xf32> -> vector<1x512xf32>
    %453 = arith.addf %451, %452 : vector<1x512xf32>
    %454 = vector.extract_strided_slice %453 {offsets = [0, 0], sizes = [1, 128], strides = [1, 1]} : vector<1x512xf32> to vector<1x128xf32>
    %455 = arith.negf %454 : vector<1x128xf32>
    %456 = math.exp %455 : vector<1x128xf32>
    %cst_105 = arith.constant 1.000000e+00 : f32
    %457 = vector.broadcast %cst_105 : f32 to vector<1x128xf32>
    %458 = arith.addf %457, %456 : vector<1x128xf32>
    %459 = arith.divf %457, %458 : vector<1x128xf32>
    %460 = vector.extract_strided_slice %453 {offsets = [0, 128], sizes = [1, 128], strides = [1, 1]} : vector<1x512xf32> to vector<1x128xf32>
    %461 = arith.negf %460 : vector<1x128xf32>
    %462 = math.exp %461 : vector<1x128xf32>
    %cst_106 = arith.constant 1.000000e+00 : f32
    %463 = vector.broadcast %cst_106 : f32 to vector<1x128xf32>
    %464 = arith.addf %463, %462 : vector<1x128xf32>
    %465 = arith.divf %463, %464 : vector<1x128xf32>
    %466 = vector.extract_strided_slice %453 {offsets = [0, 256], sizes = [1, 128], strides = [1, 1]} : vector<1x512xf32> to vector<1x128xf32>
    %467 = math.tanh %466 : vector<1x128xf32>
    %468 = vector.extract_strided_slice %453 {offsets = [0, 384], sizes = [1, 128], strides = [1, 1]} : vector<1x512xf32> to vector<1x128xf32>
    %469 = arith.negf %468 : vector<1x128xf32>
    %470 = math.exp %469 : vector<1x128xf32>
    %cst_107 = arith.constant 1.000000e+00 : f32
    %471 = vector.broadcast %cst_107 : f32 to vector<1x128xf32>
    %472 = arith.addf %471, %470 : vector<1x128xf32>
    %473 = arith.divf %471, %472 : vector<1x128xf32>
    %474 = arith.mulf %465, %442 : vector<1x128xf32>
    %475 = arith.mulf %459, %467 : vector<1x128xf32>
    %476 = arith.addf %474, %475 : vector<1x128xf32>
    %477 = math.tanh %476 : vector<1x128xf32>
    %478 = arith.mulf %473, %477 : vector<1x128xf32>
    %479 = arith.negf %478 : vector<1x128xf32>
    %480 = math.exp %479 : vector<1x128xf32>
    %cst_108 = arith.constant 1.000000e+00 : f32
    %481 = vector.broadcast %cst_108 : f32 to vector<1x128xf32>
    %482 = arith.addf %481, %480 : vector<1x128xf32>
    %483 = arith.divf %481, %482 : vector<1x128xf32>
    %c5_109 = arith.constant 5 : index
    %c0_110 = arith.constant 0 : index
    %484 = vector.load %arg12[%c5_109, %c0_110] : memref<8x128xf32, #tpu.memory_space<vmem>>, vector<1x128xf32>
    tpu.vector_store %arg12[%c5_109, %c0_110], %483 {strides = array<i32>} : memref<8x128xf32, #tpu.memory_space<vmem>>, vector<1x128xf32>,
    %485 = vector.extract_strided_slice %278 {offsets = [6, 0], sizes = [1, 512], strides = [1, 1]} : vector<8x512xf32> to vector<1x512xf32>
    %cst_111 = arith.constant dense<0.000000e+00> : vector<1x512xf32>
    %486 = tpu.matmul %478, %273, %cst_111 {dimension_numbers = #tpu.dot_dimension_numbers<[1], [0], [0], [1], [0, 0, 1, 1], [], []>} : vector<1x128xf32>, vector<128x512xf32>, vector<1x512xf32> -> vector<1x512xf32>
    %487 = arith.addf %485, %486 : vector<1x512xf32>
    %488 = vector.extract_strided_slice %487 {offsets = [0, 0], sizes = [1, 128], strides = [1, 1]} : vector<1x512xf32> to vector<1x128xf32>
    %489 = arith.negf %488 : vector<1x128xf32>
    %490 = math.exp %489 : vector<1x128xf32>
    %cst_112 = arith.constant 1.000000e+00 : f32
    %491 = vector.broadcast %cst_112 : f32 to vector<1x128xf32>
    %492 = arith.addf %491, %490 : vector<1x128xf32>
    %493 = arith.divf %491, %492 : vector<1x128xf32>
    %494 = vector.extract_strided_slice %487 {offsets = [0, 128], sizes = [1, 128], strides = [1, 1]} : vector<1x512xf32> to vector<1x128xf32>
    %495 = arith.negf %494 : vector<1x128xf32>
    %496 = math.exp %495 : vector<1x128xf32>
    %cst_113 = arith.constant 1.000000e+00 : f32
    %497 = vector.broadcast %cst_113 : f32 to vector<1x128xf32>
    %498 = arith.addf %497, %496 : vector<1x128xf32>
    %499 = arith.divf %497, %498 : vector<1x128xf32>
    %500 = vector.extract_strided_slice %487 {offsets = [0, 256], sizes = [1, 128], strides = [1, 1]} : vector<1x512xf32> to vector<1x128xf32>
    %501 = math.tanh %500 : vector<1x128xf32>
    %502 = vector.extract_strided_slice %487 {offsets = [0, 384], sizes = [1, 128], strides = [1, 1]} : vector<1x512xf32> to vector<1x128xf32>
    %503 = arith.negf %502 : vector<1x128xf32>
    %504 = math.exp %503 : vector<1x128xf32>
    %cst_114 = arith.constant 1.000000e+00 : f32
    %505 = vector.broadcast %cst_114 : f32 to vector<1x128xf32>
    %506 = arith.addf %505, %504 : vector<1x128xf32>
    %507 = arith.divf %505, %506 : vector<1x128xf32>
    %508 = arith.mulf %499, %476 : vector<1x128xf32>
    %509 = arith.mulf %493, %501 : vector<1x128xf32>
    %510 = arith.addf %508, %509 : vector<1x128xf32>
    %511 = math.tanh %510 : vector<1x128xf32>
    %512 = arith.mulf %507, %511 : vector<1x128xf32>
    %513 = arith.negf %512 : vector<1x128xf32>
    %514 = math.exp %513 : vector<1x128xf32>
    %cst_115 = arith.constant 1.000000e+00 : f32
    %515 = vector.broadcast %cst_115 : f32 to vector<1x128xf32>
    %516 = arith.addf %515, %514 : vector<1x128xf32>
    %517 = arith.divf %515, %516 : vector<1x128xf32>
    %c6_116 = arith.constant 6 : index
    %c0_117 = arith.constant 0 : index
    %518 = vector.load %arg12[%c6_116, %c0_117] : memref<8x128xf32, #tpu.memory_space<vmem>>, vector<1x128xf32>
    tpu.vector_store %arg12[%c6_116, %c0_117], %517 {strides = array<i32>} : memref<8x128xf32, #tpu.memory_space<vmem>>, vector<1x128xf32>,
    %519 = vector.extract_strided_slice %278 {offsets = [7, 0], sizes = [1, 512], strides = [1, 1]} : vector<8x512xf32> to vector<1x512xf32>
    %cst_118 = arith.constant dense<0.000000e+00> : vector<1x512xf32>
    %520 = tpu.matmul %512, %273, %cst_118 {dimension_numbers = #tpu.dot_dimension_numbers<[1], [0], [0], [1], [0, 0, 1, 1], [], []>} : vector<1x128xf32>, vector<128x512xf32>, vector<1x512xf32> -> vector<1x512xf32>
    %521 = arith.addf %519, %520 : vector<1x512xf32>
    %522 = vector.extract_strided_slice %521 {offsets = [0, 0], sizes = [1, 128], strides = [1, 1]} : vector<1x512xf32> to vector<1x128xf32>
    %523 = arith.negf %522 : vector<1x128xf32>
    %524 = math.exp %523 : vector<1x128xf32>
    %cst_119 = arith.constant 1.000000e+00 : f32
    %525 = vector.broadcast %cst_119 : f32 to vector<1x128xf32>
    %526 = arith.addf %525, %524 : vector<1x128xf32>
    %527 = arith.divf %525, %526 : vector<1x128xf32>
    %528 = vector.extract_strided_slice %521 {offsets = [0, 128], sizes = [1, 128], strides = [1, 1]} : vector<1x512xf32> to vector<1x128xf32>
    %529 = arith.negf %528 : vector<1x128xf32>
    %530 = math.exp %529 : vector<1x128xf32>
    %cst_120 = arith.constant 1.000000e+00 : f32
    %531 = vector.broadcast %cst_120 : f32 to vector<1x128xf32>
    %532 = arith.addf %531, %530 : vector<1x128xf32>
    %533 = arith.divf %531, %532 : vector<1x128xf32>
    %534 = vector.extract_strided_slice %521 {offsets = [0, 256], sizes = [1, 128], strides = [1, 1]} : vector<1x512xf32> to vector<1x128xf32>
    %535 = math.tanh %534 : vector<1x128xf32>
    %536 = vector.extract_strided_slice %521 {offsets = [0, 384], sizes = [1, 128], strides = [1, 1]} : vector<1x512xf32> to vector<1x128xf32>
    %537 = arith.negf %536 : vector<1x128xf32>
    %538 = math.exp %537 : vector<1x128xf32>
    %cst_121 = arith.constant 1.000000e+00 : f32
    %539 = vector.broadcast %cst_121 : f32 to vector<1x128xf32>
    %540 = arith.addf %539, %538 : vector<1x128xf32>
    %541 = arith.divf %539, %540 : vector<1x128xf32>
    %542 = arith.mulf %533, %510 : vector<1x128xf32>
    %543 = arith.mulf %527, %535 : vector<1x128xf32>
    %544 = arith.addf %542, %543 : vector<1x128xf32>
    %545 = math.tanh %544 : vector<1x128xf32>
    %546 = arith.mulf %541, %545 : vector<1x128xf32>
    %547 = arith.negf %546 : vector<1x128xf32>
    %548 = math.exp %547 : vector<1x128xf32>
    %cst_122 = arith.constant 1.000000e+00 : f32
    %549 = vector.broadcast %cst_122 : f32 to vector<1x128xf32>
    %550 = arith.addf %549, %548 : vector<1x128xf32>
    %551 = arith.divf %549, %550 : vector<1x128xf32>
    %c7_123 = arith.constant 7 : index
    %c0_124 = arith.constant 0 : index
    %552 = vector.load %arg12[%c7_123, %c0_124] : memref<8x128xf32, #tpu.memory_space<vmem>>, vector<1x128xf32>
    tpu.vector_store %arg12[%c7_123, %c0_124], %551 {strides = array<i32>} : memref<8x128xf32, #tpu.memory_space<vmem>>, vector<1x128xf32>,
    %c0_125 = arith.constant 0 : index
    %c0_126 = arith.constant 0 : index
    %553 = vector.load %arg7[%c0_125, %c0_126] : memref<128x512xf32, #tpu.memory_space<vmem>>, vector<128x512xf32>
    %c0_127 = arith.constant 0 : index
    %c0_128 = arith.constant 0 : index
    %554 = vector.load %arg8[%c0_127, %c0_128] : memref<128x512xf32, #tpu.memory_space<vmem>>, vector<128x512xf32>
    %c0_129 = arith.constant 0 : index
    %c0_130 = arith.constant 0 : index
    %555 = vector.load %arg9[%c0_129, %c0_130] : memref<1x512xf32, #tpu.memory_space<vmem>>, vector<1x512xf32>
    %c0_131 = arith.constant 0 : index
    %c0_132 = arith.constant 0 : index
    %556 = vector.load %arg12[%c0_131, %c0_132] : memref<8x128xf32, #tpu.memory_space<vmem>>, vector<8x128xf32>
    %cst_133 = arith.constant dense<0.000000e+00> : vector<8x512xf32>
    %557 = tpu.matmul %556, %553, %cst_133 {dimension_numbers = #tpu.dot_dimension_numbers<[1], [0], [0], [1], [0, 0, 1, 1], [], []>} : vector<8x128xf32>, vector<128x512xf32>, vector<8x512xf32> -> vector<8x512xf32>
    %558 = vector.broadcast %555 : vector<1x512xf32> to vector<8x512xf32>
    %559 = arith.addf %557, %558 : vector<8x512xf32>
    %cst_134 = arith.constant 0.000000e+00 : f32
    %560 = vector.broadcast %cst_134 : f32 to vector<1x128xf32>
    %cst_135 = arith.constant 0.000000e+00 : f32
    %561 = vector.broadcast %cst_135 : f32 to vector<1x128xf32>
    %562 = vector.extract_strided_slice %559 {offsets = [0, 0], sizes = [1, 512], strides = [1, 1]} : vector<8x512xf32> to vector<1x512xf32>
    %cst_136 = arith.constant dense<0.000000e+00> : vector<1x512xf32>
    %563 = tpu.matmul %560, %554, %cst_136 {dimension_numbers = #tpu.dot_dimension_numbers<[1], [0], [0], [1], [0, 0, 1, 1], [], []>} : vector<1x128xf32>, vector<128x512xf32>, vector<1x512xf32> -> vector<1x512xf32>
    %564 = arith.addf %562, %563 : vector<1x512xf32>
    %565 = vector.extract_strided_slice %564 {offsets = [0, 0], sizes = [1, 128], strides = [1, 1]} : vector<1x512xf32> to vector<1x128xf32>
    %566 = arith.negf %565 : vector<1x128xf32>
    %567 = math.exp %566 : vector<1x128xf32>
    %cst_137 = arith.constant 1.000000e+00 : f32
    %568 = vector.broadcast %cst_137 : f32 to vector<1x128xf32>
    %569 = arith.addf %568, %567 : vector<1x128xf32>
    %570 = arith.divf %568, %569 : vector<1x128xf32>
    %571 = vector.extract_strided_slice %564 {offsets = [0, 128], sizes = [1, 128], strides = [1, 1]} : vector<1x512xf32> to vector<1x128xf32>
    %572 = arith.negf %571 : vector<1x128xf32>
    %573 = math.exp %572 : vector<1x128xf32>
    %cst_138 = arith.constant 1.000000e+00 : f32
    %574 = vector.broadcast %cst_138 : f32 to vector<1x128xf32>
    %575 = arith.addf %574, %573 : vector<1x128xf32>
    %576 = arith.divf %574, %575 : vector<1x128xf32>
    %577 = vector.extract_strided_slice %564 {offsets = [0, 256], sizes = [1, 128], strides = [1, 1]} : vector<1x512xf32> to vector<1x128xf32>
    %578 = math.tanh %577 : vector<1x128xf32>
    %579 = vector.extract_strided_slice %564 {offsets = [0, 384], sizes = [1, 128], strides = [1, 1]} : vector<1x512xf32> to vector<1x128xf32>
    %580 = arith.negf %579 : vector<1x128xf32>
    %581 = math.exp %580 : vector<1x128xf32>
    %cst_139 = arith.constant 1.000000e+00 : f32
    %582 = vector.broadcast %cst_139 : f32 to vector<1x128xf32>
    %583 = arith.addf %582, %581 : vector<1x128xf32>
    %584 = arith.divf %582, %583 : vector<1x128xf32>
    %585 = arith.mulf %576, %561 : vector<1x128xf32>
    %586 = arith.mulf %570, %578 : vector<1x128xf32>
    %587 = arith.addf %585, %586 : vector<1x128xf32>
    %588 = math.tanh %587 : vector<1x128xf32>
    %589 = arith.mulf %584, %588 : vector<1x128xf32>
    %c0_140 = arith.constant 0 : index
    %c0_141 = arith.constant 0 : index
    %590 = vector.load %arg12[%c0_140, %c0_141] : memref<8x128xf32, #tpu.memory_space<vmem>>, vector<1x128xf32>
    tpu.vector_store %arg12[%c0_140, %c0_141], %589 {strides = array<i32>} : memref<8x128xf32, #tpu.memory_space<vmem>>, vector<1x128xf32>,
    %591 = vector.extract_strided_slice %559 {offsets = [1, 0], sizes = [1, 512], strides = [1, 1]} : vector<8x512xf32> to vector<1x512xf32>
    %cst_142 = arith.constant dense<0.000000e+00> : vector<1x512xf32>
    %592 = tpu.matmul %589, %554, %cst_142 {dimension_numbers = #tpu.dot_dimension_numbers<[1], [0], [0], [1], [0, 0, 1, 1], [], []>} : vector<1x128xf32>, vector<128x512xf32>, vector<1x512xf32> -> vector<1x512xf32>
    %593 = arith.addf %591, %592 : vector<1x512xf32>
    %594 = vector.extract_strided_slice %593 {offsets = [0, 0], sizes = [1, 128], strides = [1, 1]} : vector<1x512xf32> to vector<1x128xf32>
    %595 = arith.negf %594 : vector<1x128xf32>
    %596 = math.exp %595 : vector<1x128xf32>
    %cst_143 = arith.constant 1.000000e+00 : f32
    %597 = vector.broadcast %cst_143 : f32 to vector<1x128xf32>
    %598 = arith.addf %597, %596 : vector<1x128xf32>
    %599 = arith.divf %597, %598 : vector<1x128xf32>
    %600 = vector.extract_strided_slice %593 {offsets = [0, 128], sizes = [1, 128], strides = [1, 1]} : vector<1x512xf32> to vector<1x128xf32>
    %601 = arith.negf %600 : vector<1x128xf32>
    %602 = math.exp %601 : vector<1x128xf32>
    %cst_144 = arith.constant 1.000000e+00 : f32
    %603 = vector.broadcast %cst_144 : f32 to vector<1x128xf32>
    %604 = arith.addf %603, %602 : vector<1x128xf32>
    %605 = arith.divf %603, %604 : vector<1x128xf32>
    %606 = vector.extract_strided_slice %593 {offsets = [0, 256], sizes = [1, 128], strides = [1, 1]} : vector<1x512xf32> to vector<1x128xf32>
    %607 = math.tanh %606 : vector<1x128xf32>
    %608 = vector.extract_strided_slice %593 {offsets = [0, 384], sizes = [1, 128], strides = [1, 1]} : vector<1x512xf32> to vector<1x128xf32>
    %609 = arith.negf %608 : vector<1x128xf32>
    %610 = math.exp %609 : vector<1x128xf32>
    %cst_145 = arith.constant 1.000000e+00 : f32
    %611 = vector.broadcast %cst_145 : f32 to vector<1x128xf32>
    %612 = arith.addf %611, %610 : vector<1x128xf32>
    %613 = arith.divf %611, %612 : vector<1x128xf32>
    %614 = arith.mulf %605, %587 : vector<1x128xf32>
    %615 = arith.mulf %599, %607 : vector<1x128xf32>
    %616 = arith.addf %614, %615 : vector<1x128xf32>
    %617 = math.tanh %616 : vector<1x128xf32>
    %618 = arith.mulf %613, %617 : vector<1x128xf32>
    %c1_146 = arith.constant 1 : index
    %c0_147 = arith.constant 0 : index
    %619 = vector.load %arg12[%c1_146, %c0_147] : memref<8x128xf32, #tpu.memory_space<vmem>>, vector<1x128xf32>
    tpu.vector_store %arg12[%c1_146, %c0_147], %618 {strides = array<i32>} : memref<8x128xf32, #tpu.memory_space<vmem>>, vector<1x128xf32>,
    %620 = vector.extract_strided_slice %559 {offsets = [2, 0], sizes = [1, 512], strides = [1, 1]} : vector<8x512xf32> to vector<1x512xf32>
    %cst_148 = arith.constant dense<0.000000e+00> : vector<1x512xf32>
    %621 = tpu.matmul %618, %554, %cst_148 {dimension_numbers = #tpu.dot_dimension_numbers<[1], [0], [0], [1], [0, 0, 1, 1], [], []>} : vector<1x128xf32>, vector<128x512xf32>, vector<1x512xf32> -> vector<1x512xf32>
    %622 = arith.addf %620, %621 : vector<1x512xf32>
    %623 = vector.extract_strided_slice %622 {offsets = [0, 0], sizes = [1, 128], strides = [1, 1]} : vector<1x512xf32> to vector<1x128xf32>
    %624 = arith.negf %623 : vector<1x128xf32>
    %625 = math.exp %624 : vector<1x128xf32>
    %cst_149 = arith.constant 1.000000e+00 : f32
    %626 = vector.broadcast %cst_149 : f32 to vector<1x128xf32>
    %627 = arith.addf %626, %625 : vector<1x128xf32>
    %628 = arith.divf %626, %627 : vector<1x128xf32>
    %629 = vector.extract_strided_slice %622 {offsets = [0, 128], sizes = [1, 128], strides = [1, 1]} : vector<1x512xf32> to vector<1x128xf32>
    %630 = arith.negf %629 : vector<1x128xf32>
    %631 = math.exp %630 : vector<1x128xf32>
    %cst_150 = arith.constant 1.000000e+00 : f32
    %632 = vector.broadcast %cst_150 : f32 to vector<1x128xf32>
    %633 = arith.addf %632, %631 : vector<1x128xf32>
    %634 = arith.divf %632, %633 : vector<1x128xf32>
    %635 = vector.extract_strided_slice %622 {offsets = [0, 256], sizes = [1, 128], strides = [1, 1]} : vector<1x512xf32> to vector<1x128xf32>
    %636 = math.tanh %635 : vector<1x128xf32>
    %637 = vector.extract_strided_slice %622 {offsets = [0, 384], sizes = [1, 128], strides = [1, 1]} : vector<1x512xf32> to vector<1x128xf32>
    %638 = arith.negf %637 : vector<1x128xf32>
    %639 = math.exp %638 : vector<1x128xf32>
    %cst_151 = arith.constant 1.000000e+00 : f32
    %640 = vector.broadcast %cst_151 : f32 to vector<1x128xf32>
    %641 = arith.addf %640, %639 : vector<1x128xf32>
    %642 = arith.divf %640, %641 : vector<1x128xf32>
    %643 = arith.mulf %634, %616 : vector<1x128xf32>
    %644 = arith.mulf %628, %636 : vector<1x128xf32>
    %645 = arith.addf %643, %644 : vector<1x128xf32>
    %646 = math.tanh %645 : vector<1x128xf32>
    %647 = arith.mulf %642, %646 : vector<1x128xf32>
    %c2_152 = arith.constant 2 : index
    %c0_153 = arith.constant 0 : index
    %648 = vector.load %arg12[%c2_152, %c0_153] : memref<8x128xf32, #tpu.memory_space<vmem>>, vector<1x128xf32>
    tpu.vector_store %arg12[%c2_152, %c0_153], %647 {strides = array<i32>} : memref<8x128xf32, #tpu.memory_space<vmem>>, vector<1x128xf32>,
    %649 = vector.extract_strided_slice %559 {offsets = [3, 0], sizes = [1, 512], strides = [1, 1]} : vector<8x512xf32> to vector<1x512xf32>
    %cst_154 = arith.constant dense<0.000000e+00> : vector<1x512xf32>
    %650 = tpu.matmul %647, %554, %cst_154 {dimension_numbers = #tpu.dot_dimension_numbers<[1], [0], [0], [1], [0, 0, 1, 1], [], []>} : vector<1x128xf32>, vector<128x512xf32>, vector<1x512xf32> -> vector<1x512xf32>
    %651 = arith.addf %649, %650 : vector<1x512xf32>
    %652 = vector.extract_strided_slice %651 {offsets = [0, 0], sizes = [1, 128], strides = [1, 1]} : vector<1x512xf32> to vector<1x128xf32>
    %653 = arith.negf %652 : vector<1x128xf32>
    %654 = math.exp %653 : vector<1x128xf32>
    %cst_155 = arith.constant 1.000000e+00 : f32
    %655 = vector.broadcast %cst_155 : f32 to vector<1x128xf32>
    %656 = arith.addf %655, %654 : vector<1x128xf32>
    %657 = arith.divf %655, %656 : vector<1x128xf32>
    %658 = vector.extract_strided_slice %651 {offsets = [0, 128], sizes = [1, 128], strides = [1, 1]} : vector<1x512xf32> to vector<1x128xf32>
    %659 = arith.negf %658 : vector<1x128xf32>
    %660 = math.exp %659 : vector<1x128xf32>
    %cst_156 = arith.constant 1.000000e+00 : f32
    %661 = vector.broadcast %cst_156 : f32 to vector<1x128xf32>
    %662 = arith.addf %661, %660 : vector<1x128xf32>
    %663 = arith.divf %661, %662 : vector<1x128xf32>
    %664 = vector.extract_strided_slice %651 {offsets = [0, 256], sizes = [1, 128], strides = [1, 1]} : vector<1x512xf32> to vector<1x128xf32>
    %665 = math.tanh %664 : vector<1x128xf32>
    %666 = vector.extract_strided_slice %651 {offsets = [0, 384], sizes = [1, 128], strides = [1, 1]} : vector<1x512xf32> to vector<1x128xf32>
    %667 = arith.negf %666 : vector<1x128xf32>
    %668 = math.exp %667 : vector<1x128xf32>
    %cst_157 = arith.constant 1.000000e+00 : f32
    %669 = vector.broadcast %cst_157 : f32 to vector<1x128xf32>
    %670 = arith.addf %669, %668 : vector<1x128xf32>
    %671 = arith.divf %669, %670 : vector<1x128xf32>
    %672 = arith.mulf %663, %645 : vector<1x128xf32>
    %673 = arith.mulf %657, %665 : vector<1x128xf32>
    %674 = arith.addf %672, %673 : vector<1x128xf32>
    %675 = math.tanh %674 : vector<1x128xf32>
    %676 = arith.mulf %671, %675 : vector<1x128xf32>
    %c3_158 = arith.constant 3 : index
    %c0_159 = arith.constant 0 : index
    %677 = vector.load %arg12[%c3_158, %c0_159] : memref<8x128xf32, #tpu.memory_space<vmem>>, vector<1x128xf32>
    tpu.vector_store %arg12[%c3_158, %c0_159], %676 {strides = array<i32>} : memref<8x128xf32, #tpu.memory_space<vmem>>, vector<1x128xf32>,
    %678 = vector.extract_strided_slice %559 {offsets = [4, 0], sizes = [1, 512], strides = [1, 1]} : vector<8x512xf32> to vector<1x512xf32>
    %cst_160 = arith.constant dense<0.000000e+00> : vector<1x512xf32>
    %679 = tpu.matmul %676, %554, %cst_160 {dimension_numbers = #tpu.dot_dimension_numbers<[1], [0], [0], [1], [0, 0, 1, 1], [], []>} : vector<1x128xf32>, vector<128x512xf32>, vector<1x512xf32> -> vector<1x512xf32>
    %680 = arith.addf %678, %679 : vector<1x512xf32>
    %681 = vector.extract_strided_slice %680 {offsets = [0, 0], sizes = [1, 128], strides = [1, 1]} : vector<1x512xf32> to vector<1x128xf32>
    %682 = arith.negf %681 : vector<1x128xf32>
    %683 = math.exp %682 : vector<1x128xf32>
    %cst_161 = arith.constant 1.000000e+00 : f32
    %684 = vector.broadcast %cst_161 : f32 to vector<1x128xf32>
    %685 = arith.addf %684, %683 : vector<1x128xf32>
    %686 = arith.divf %684, %685 : vector<1x128xf32>
    %687 = vector.extract_strided_slice %680 {offsets = [0, 128], sizes = [1, 128], strides = [1, 1]} : vector<1x512xf32> to vector<1x128xf32>
    %688 = arith.negf %687 : vector<1x128xf32>
    %689 = math.exp %688 : vector<1x128xf32>
    %cst_162 = arith.constant 1.000000e+00 : f32
    %690 = vector.broadcast %cst_162 : f32 to vector<1x128xf32>
    %691 = arith.addf %690, %689 : vector<1x128xf32>
    %692 = arith.divf %690, %691 : vector<1x128xf32>
    %693 = vector.extract_strided_slice %680 {offsets = [0, 256], sizes = [1, 128], strides = [1, 1]} : vector<1x512xf32> to vector<1x128xf32>
    %694 = math.tanh %693 : vector<1x128xf32>
    %695 = vector.extract_strided_slice %680 {offsets = [0, 384], sizes = [1, 128], strides = [1, 1]} : vector<1x512xf32> to vector<1x128xf32>
    %696 = arith.negf %695 : vector<1x128xf32>
    %697 = math.exp %696 : vector<1x128xf32>
    %cst_163 = arith.constant 1.000000e+00 : f32
    %698 = vector.broadcast %cst_163 : f32 to vector<1x128xf32>
    %699 = arith.addf %698, %697 : vector<1x128xf32>
    %700 = arith.divf %698, %699 : vector<1x128xf32>
    %701 = arith.mulf %692, %674 : vector<1x128xf32>
    %702 = arith.mulf %686, %694 : vector<1x128xf32>
    %703 = arith.addf %701, %702 : vector<1x128xf32>
    %704 = math.tanh %703 : vector<1x128xf32>
    %705 = arith.mulf %700, %704 : vector<1x128xf32>
    %c4_164 = arith.constant 4 : index
    %c0_165 = arith.constant 0 : index
    %706 = vector.load %arg12[%c4_164, %c0_165] : memref<8x128xf32, #tpu.memory_space<vmem>>, vector<1x128xf32>
    tpu.vector_store %arg12[%c4_164, %c0_165], %705 {strides = array<i32>} : memref<8x128xf32, #tpu.memory_space<vmem>>, vector<1x128xf32>,
    %707 = vector.extract_strided_slice %559 {offsets = [5, 0], sizes = [1, 512], strides = [1, 1]} : vector<8x512xf32> to vector<1x512xf32>
    %cst_166 = arith.constant dense<0.000000e+00> : vector<1x512xf32>
    %708 = tpu.matmul %705, %554, %cst_166 {dimension_numbers = #tpu.dot_dimension_numbers<[1], [0], [0], [1], [0, 0, 1, 1], [], []>} : vector<1x128xf32>, vector<128x512xf32>, vector<1x512xf32> -> vector<1x512xf32>
    %709 = arith.addf %707, %708 : vector<1x512xf32>
    %710 = vector.extract_strided_slice %709 {offsets = [0, 0], sizes = [1, 128], strides = [1, 1]} : vector<1x512xf32> to vector<1x128xf32>
    %711 = arith.negf %710 : vector<1x128xf32>
    %712 = math.exp %711 : vector<1x128xf32>
    %cst_167 = arith.constant 1.000000e+00 : f32
    %713 = vector.broadcast %cst_167 : f32 to vector<1x128xf32>
    %714 = arith.addf %713, %712 : vector<1x128xf32>
    %715 = arith.divf %713, %714 : vector<1x128xf32>
    %716 = vector.extract_strided_slice %709 {offsets = [0, 128], sizes = [1, 128], strides = [1, 1]} : vector<1x512xf32> to vector<1x128xf32>
    %717 = arith.negf %716 : vector<1x128xf32>
    %718 = math.exp %717 : vector<1x128xf32>
    %cst_168 = arith.constant 1.000000e+00 : f32
    %719 = vector.broadcast %cst_168 : f32 to vector<1x128xf32>
    %720 = arith.addf %719, %718 : vector<1x128xf32>
    %721 = arith.divf %719, %720 : vector<1x128xf32>
    %722 = vector.extract_strided_slice %709 {offsets = [0, 256], sizes = [1, 128], strides = [1, 1]} : vector<1x512xf32> to vector<1x128xf32>
    %723 = math.tanh %722 : vector<1x128xf32>
    %724 = vector.extract_strided_slice %709 {offsets = [0, 384], sizes = [1, 128], strides = [1, 1]} : vector<1x512xf32> to vector<1x128xf32>
    %725 = arith.negf %724 : vector<1x128xf32>
    %726 = math.exp %725 : vector<1x128xf32>
    %cst_169 = arith.constant 1.000000e+00 : f32
    %727 = vector.broadcast %cst_169 : f32 to vector<1x128xf32>
    %728 = arith.addf %727, %726 : vector<1x128xf32>
    %729 = arith.divf %727, %728 : vector<1x128xf32>
    %730 = arith.mulf %721, %703 : vector<1x128xf32>
    %731 = arith.mulf %715, %723 : vector<1x128xf32>
    %732 = arith.addf %730, %731 : vector<1x128xf32>
    %733 = math.tanh %732 : vector<1x128xf32>
    %734 = arith.mulf %729, %733 : vector<1x128xf32>
    %c5_170 = arith.constant 5 : index
    %c0_171 = arith.constant 0 : index
    %735 = vector.load %arg12[%c5_170, %c0_171] : memref<8x128xf32, #tpu.memory_space<vmem>>, vector<1x128xf32>
    tpu.vector_store %arg12[%c5_170, %c0_171], %734 {strides = array<i32>} : memref<8x128xf32, #tpu.memory_space<vmem>>, vector<1x128xf32>,
    %736 = vector.extract_strided_slice %559 {offsets = [6, 0], sizes = [1, 512], strides = [1, 1]} : vector<8x512xf32> to vector<1x512xf32>
    %cst_172 = arith.constant dense<0.000000e+00> : vector<1x512xf32>
    %737 = tpu.matmul %734, %554, %cst_172 {dimension_numbers = #tpu.dot_dimension_numbers<[1], [0], [0], [1], [0, 0, 1, 1], [], []>} : vector<1x128xf32>, vector<128x512xf32>, vector<1x512xf32> -> vector<1x512xf32>
    %738 = arith.addf %736, %737 : vector<1x512xf32>
    %739 = vector.extract_strided_slice %738 {offsets = [0, 0], sizes = [1, 128], strides = [1, 1]} : vector<1x512xf32> to vector<1x128xf32>
    %740 = arith.negf %739 : vector<1x128xf32>
    %741 = math.exp %740 : vector<1x128xf32>
    %cst_173 = arith.constant 1.000000e+00 : f32
    %742 = vector.broadcast %cst_173 : f32 to vector<1x128xf32>
    %743 = arith.addf %742, %741 : vector<1x128xf32>
    %744 = arith.divf %742, %743 : vector<1x128xf32>
    %745 = vector.extract_strided_slice %738 {offsets = [0, 128], sizes = [1, 128], strides = [1, 1]} : vector<1x512xf32> to vector<1x128xf32>
    %746 = arith.negf %745 : vector<1x128xf32>
    %747 = math.exp %746 : vector<1x128xf32>
    %cst_174 = arith.constant 1.000000e+00 : f32
    %748 = vector.broadcast %cst_174 : f32 to vector<1x128xf32>
    %749 = arith.addf %748, %747 : vector<1x128xf32>
    %750 = arith.divf %748, %749 : vector<1x128xf32>
    %751 = vector.extract_strided_slice %738 {offsets = [0, 256], sizes = [1, 128], strides = [1, 1]} : vector<1x512xf32> to vector<1x128xf32>
    %752 = math.tanh %751 : vector<1x128xf32>
    %753 = vector.extract_strided_slice %738 {offsets = [0, 384], sizes = [1, 128], strides = [1, 1]} : vector<1x512xf32> to vector<1x128xf32>
    %754 = arith.negf %753 : vector<1x128xf32>
    %755 = math.exp %754 : vector<1x128xf32>
    %cst_175 = arith.constant 1.000000e+00 : f32
    %756 = vector.broadcast %cst_175 : f32 to vector<1x128xf32>
    %757 = arith.addf %756, %755 : vector<1x128xf32>
    %758 = arith.divf %756, %757 : vector<1x128xf32>
    %759 = arith.mulf %750, %732 : vector<1x128xf32>
    %760 = arith.mulf %744, %752 : vector<1x128xf32>
    %761 = arith.addf %759, %760 : vector<1x128xf32>
    %762 = math.tanh %761 : vector<1x128xf32>
    %763 = arith.mulf %758, %762 : vector<1x128xf32>
    %c6_176 = arith.constant 6 : index
    %c0_177 = arith.constant 0 : index
    %764 = vector.load %arg12[%c6_176, %c0_177] : memref<8x128xf32, #tpu.memory_space<vmem>>, vector<1x128xf32>
    tpu.vector_store %arg12[%c6_176, %c0_177], %763 {strides = array<i32>} : memref<8x128xf32, #tpu.memory_space<vmem>>, vector<1x128xf32>,
    %765 = vector.extract_strided_slice %559 {offsets = [7, 0], sizes = [1, 512], strides = [1, 1]} : vector<8x512xf32> to vector<1x512xf32>
    %cst_178 = arith.constant dense<0.000000e+00> : vector<1x512xf32>
    %766 = tpu.matmul %763, %554, %cst_178 {dimension_numbers = #tpu.dot_dimension_numbers<[1], [0], [0], [1], [0, 0, 1, 1], [], []>} : vector<1x128xf32>, vector<128x512xf32>, vector<1x512xf32> -> vector<1x512xf32>
    %767 = arith.addf %765, %766 : vector<1x512xf32>
    %768 = vector.extract_strided_slice %767 {offsets = [0, 0], sizes = [1, 128], strides = [1, 1]} : vector<1x512xf32> to vector<1x128xf32>
    %769 = arith.negf %768 : vector<1x128xf32>
    %770 = math.exp %769 : vector<1x128xf32>
    %cst_179 = arith.constant 1.000000e+00 : f32
    %771 = vector.broadcast %cst_179 : f32 to vector<1x128xf32>
    %772 = arith.addf %771, %770 : vector<1x128xf32>
    %773 = arith.divf %771, %772 : vector<1x128xf32>
    %774 = vector.extract_strided_slice %767 {offsets = [0, 128], sizes = [1, 128], strides = [1, 1]} : vector<1x512xf32> to vector<1x128xf32>
    %775 = arith.negf %774 : vector<1x128xf32>
    %776 = math.exp %775 : vector<1x128xf32>
    %cst_180 = arith.constant 1.000000e+00 : f32
    %777 = vector.broadcast %cst_180 : f32 to vector<1x128xf32>
    %778 = arith.addf %777, %776 : vector<1x128xf32>
    %779 = arith.divf %777, %778 : vector<1x128xf32>
    %780 = vector.extract_strided_slice %767 {offsets = [0, 256], sizes = [1, 128], strides = [1, 1]} : vector<1x512xf32> to vector<1x128xf32>
    %781 = math.tanh %780 : vector<1x128xf32>
    %782 = vector.extract_strided_slice %767 {offsets = [0, 384], sizes = [1, 128], strides = [1, 1]} : vector<1x512xf32> to vector<1x128xf32>
    %783 = arith.negf %782 : vector<1x128xf32>
    %784 = math.exp %783 : vector<1x128xf32>
    %cst_181 = arith.constant 1.000000e+00 : f32
    %785 = vector.broadcast %cst_181 : f32 to vector<1x128xf32>
    %786 = arith.addf %785, %784 : vector<1x128xf32>
    %787 = arith.divf %785, %786 : vector<1x128xf32>
    %788 = arith.mulf %779, %761 : vector<1x128xf32>
    %789 = arith.mulf %773, %781 : vector<1x128xf32>
    %790 = arith.addf %788, %789 : vector<1x128xf32>
    %791 = math.tanh %790 : vector<1x128xf32>
    %792 = arith.mulf %787, %791 : vector<1x128xf32>
    %c7_182 = arith.constant 7 : index
    %c0_183 = arith.constant 0 : index
    %793 = vector.load %arg12[%c7_182, %c0_183] : memref<8x128xf32, #tpu.memory_space<vmem>>, vector<1x128xf32>
    tpu.vector_store %arg12[%c7_182, %c0_183], %792 {strides = array<i32>} : memref<8x128xf32, #tpu.memory_space<vmem>>, vector<1x128xf32>,
    %c0_184 = arith.constant 0 : index
    %c0_185 = arith.constant 0 : index
    %794 = vector.load %arg12[%c0_184, %c0_185] : memref<8x128xf32, #tpu.memory_space<vmem>>, vector<8x128xf32>
    %c0_186 = arith.constant 0 : index
    %c0_187 = arith.constant 0 : index
    %795 = vector.load %arg10[%c0_186, %c0_187] : memref<128x128xf32, #tpu.memory_space<vmem>>, vector<128x128xf32>
    %cst_188 = arith.constant dense<0.000000e+00> : vector<8x128xf32>
    %796 = tpu.matmul %794, %795, %cst_188 {dimension_numbers = #tpu.dot_dimension_numbers<[1], [0], [0], [1], [0, 0, 1, 1], [], []>} : vector<8x128xf32>, vector<128x128xf32>, vector<8x128xf32> -> vector<8x128xf32>
    %c0_189 = arith.constant 0 : index
    %c0_190 = arith.constant 0 : index
    %797 = vector.load %arg11[%c0_189, %c0_190] : memref<8x128xf32, #tpu.memory_space<vmem>>, vector<8x128xf32>
    tpu.vector_store %arg11[%c0_189, %c0_190], %796 {strides = array<i32>} : memref<8x128xf32, #tpu.memory_space<vmem>>, vector<8x128xf32>,
    return
  }
}

</mosaic_0001>

<llo_original>
// kernel: decoder_forward.1
$region0: #{decoder_forward.1}
  #allocation0 [shape = 'u32[]', space=smem, size = 0x4, offset = 0x4, fixed_abs, tag = 'smem constant byte address 0x4 - core index']
  #allocation1 [shape = 'u32[72,128]{1,0:T(1,128)}', space=vmem, size = 0x9000, scoped, tag = 'internal scratch']
  #allocation2 [shape = 'f32[8,128]{1,0:T(8,128)}', space=vmem, size = 0x1000, scoped, tag = 'scratch operand']
  %s0 = inlined_call_operand.vmem [shape: f32[1,128], index: 0, kind: input, shape index: {}]
  %s1 = inlined_call_operand.hbm [shape: f32[128,512], index: 1, kind: input, shape index: {}]
  %s2 = inlined_call_operand.hbm [shape: f32[128,512], index: 2, kind: input, shape index: {}]
  %s3 = inlined_call_operand.vmem [shape: f32[1,512], index: 3, kind: input, shape index: {}]
  %s4 = inlined_call_operand.hbm [shape: f32[128,512], index: 4, kind: input, shape index: {}]
  %s5 = inlined_call_operand.hbm [shape: f32[128,512], index: 5, kind: input, shape index: {}]
  %s6 = inlined_call_operand.hbm [shape: f32[1,512], index: 6, kind: input, shape index: {}]
  %s7 = inlined_call_operand.hbm [shape: f32[128,512], index: 7, kind: input, shape index: {}]
  %s8 = inlined_call_operand.hbm [shape: f32[128,512], index: 8, kind: input, shape index: {}]
  %s9 = inlined_call_operand.vmem [shape: f32[1,512], index: 9, kind: input, shape index: {}]
  %s10 = inlined_call_operand.hbm [shape: f32[128,128], index: 10, kind: input, shape index: {}]
  %s11 = inlined_call_operand.hbm [shape: f32[8,128], index: 11, kind: output, shape index: {}]
  %s12 = sld [smem:[#allocation0]]
  $region86: #{decoder_forward.1} parent=0
    _
  %s14 = ssub.s32 1, %s12
  %s15 = scalar_select 0, %s14, %s12
  $region1: #{decoder_forward.1} parent=0
    #allocation3 [shape = 'u8[262144]{0}', space=vmem, size = 0x40000, scoped, tag = 'input window, operand 1, single buffered']
    #allocation4 [shape = 's32[1]{0}', space=sflag, size = 0x4, scoped, tag = 'scoped memory for decoder_forward.1']
    #allocation5 [shape = 's32[1]{0}', space=sflag, size = 0x4, scoped, tag = 'scoped memory for decoder_forward.1']
    #allocation6 [shape = 'u8[262144]{0}', space=vmem, size = 0x40000, scoped, tag = 'input window, operand 2, single buffered']
    #allocation7 [shape = 's32[1]{0}', space=sflag, size = 0x4, scoped, tag = 'scoped memory for decoder_forward.1']
    #allocation8 [shape = 'u8[262144]{0}', space=vmem, size = 0x40000, scoped, tag = 'input window, operand 4, single buffered']
    #allocation9 [shape = 'u8[262144]{0}', space=vmem, size = 0x40000, scoped, tag = 'input window, operand 5, single buffered']
    #allocation10 [shape = 's32[1]{0}', space=sflag, size = 0x4, scoped, tag = 'scoped memory for decoder_forward.1']
    #allocation11 [shape = 'u8[2048]{0}', space=vmem, size = 0x800, scoped, tag = 'input window, operand 6, single buffered']
    #allocation12 [shape = 'u8[262144]{0}', space=vmem, size = 0x40000, scoped, tag = 'input window, operand 7, single buffered']
    #allocation13 [shape = 's32[1]{0}', space=sflag, size = 0x4, scoped, tag = 'scoped memory for decoder_forward.1']
    #allocation14 [shape = 'u8[262144]{0}', space=vmem, size = 0x40000, scoped, tag = 'input window, operand 8, single buffered']
    #allocation15 [shape = 'u8[65536]{0}', space=vmem, size = 0x10000, scoped, tag = 'input window, operand 10, single buffered']
    #allocation16 [shape = 's32[1]{0}', space=sflag, size = 0x4, scoped, tag = 'scoped memory for decoder_forward.1']
    #allocation17 [shape = 'u8[4096]{0}', space=vmem, size = 0x1000, scoped, tag = 'output window, operand 0, single buffered']
    %16 = vsyncpa [#allocation4], 0
    %17 = vsyncpa [#allocation7], 0
    %18 = vsyncpa [#allocation10], 0
    %19 = vsyncpa [#allocation13], 0
    %20 = vsyncpa [#allocation16], 0
    %21 = vsyncpa [#allocation5], 0
    // Predicated region
    $region2: #{decoder_forward.1} parent=1 // pred_check
      _
    $region3: #{decoder_forward.1} parent=1 // pred_check_branch
      %23 = sbr.rel (0) target = $region5
    $region4: #{decoder_forward.1} parent=1 // pred_region
      _
    $region5: #{decoder_forward.1} parent=1 // pred_fallthru
      _
    // Predicated region
    $region6: #{decoder_forward.1} parent=1 // pred_check
      _
    $region7: #{decoder_forward.1} parent=1 // pred_check_branch
      %25 = sbr.rel (0) target = $region9
    $region8: #{decoder_forward.1} parent=1 // pred_region
      %27 = vsyncadd [#allocation4], 0
      %s28 = sshll.u32 %s1, 4
      %s29 = int_to_ptr.hbm [resolvable:$true] %s28
      %s30 = sshll.u32 [#allocation3], 4
      %s31 = int_to_ptr.vmem [resolvable:$true] %s30
      %36 = dma.hbm_to_vmem [thread:$0]  %s29, 8192, %s31, [#allocation4], 512, 512, 32
    $region9: #{decoder_forward.1} parent=1 // pred_fallthru
      _
    // Predicated region
    $region10: #{decoder_forward.1} parent=1 // pred_check
      _
    $region11: #{decoder_forward.1} parent=1 // pred_check_branch
      %38 = sbr.rel (0) target = $region13
    $region12: #{decoder_forward.1} parent=1 // pred_region
      %40 = vsyncadd [#allocation7], 0
      %s41 = sshll.u32 %s2, 4
      %s42 = int_to_ptr.hbm [resolvable:$true] %s41
      %s43 = sshll.u32 [#allocation6], 4
      %s44 = int_to_ptr.vmem [resolvable:$true] %s43
      %49 = dma.hbm_to_vmem [thread:$0]  %s42, 8192, %s44, [#allocation7], 512, 512, 32
    $region13: #{decoder_forward.1} parent=1 // pred_fallthru
      _
    // Predicated region
    $region14: #{decoder_forward.1} parent=1 // pred_check
      _
    $region15: #{decoder_forward.1} parent=1 // pred_check_branch
      %51 = sbr.rel (0) target = $region17
    $region16: #{decoder_forward.1} parent=1 // pred_region
      _
    $region17: #{decoder_forward.1} parent=1 // pred_fallthru
      _
    // Predicated region
    $region18: #{decoder_forward.1} parent=1 // pred_check
      _
    $region19: #{decoder_forward.1} parent=1 // pred_check_branch
      %53 = sbr.rel (0) target = $region21
    $region20: #{decoder_forward.1} parent=1 // pred_region
      %55 = vsyncadd [#allocation7], 0
      %s56 = sshll.u32 %s4, 4
      %s57 = int_to_ptr.hbm [resolvable:$true] %s56
      %s58 = sshll.u32 [#allocation8], 4
      %s59 = int_to_ptr.vmem [resolvable:$true] %s58
      %64 = dma.hbm_to_vmem [thread:$0]  %s57, 8192, %s59, [#allocation7], 512, 512, 32
    $region21: #{decoder_forward.1} parent=1 // pred_fallthru
      _
    // Predicated region
    $region22: #{decoder_forward.1} parent=1 // pred_check
      _
    $region23: #{decoder_forward.1} parent=1 // pred_check_branch
      %66 = sbr.rel (0) target = $region25
    $region24: #{decoder_forward.1} parent=1 // pred_region
      %68 = vsyncadd [#allocation10], 0
      %s69 = sshll.u32 %s5, 4
      %s70 = int_to_ptr.hbm [resolvable:$true] %s69
      %s71 = sshll.u32 [#allocation9], 4
      %s72 = int_to_ptr.vmem [resolvable:$true] %s71
      %77 = dma.hbm_to_vmem [thread:$0]  %s70, 8192, %s72, [#allocation10], 512, 512, 32
    $region25: #{decoder_forward.1} parent=1 // pred_fallthru
      _
    // Predicated region
    $region26: #{decoder_forward.1} parent=1 // pred_check
      _
    $region27: #{decoder_forward.1} parent=1 // pred_check_branch
      %79 = sbr.rel (0) target = $region29
    $region28: #{decoder_forward.1} parent=1 // pred_region
      %81 = vsyncadd [#allocation10], 0
      %s83 = sshll.u32 %s6, 4
      %s84 = int_to_ptr.hbm [resolvable:$true] %s83
      %s85 = sshll.u32 [#allocation11], 4
      %s86 = int_to_ptr.vmem [resolvable:$true] %s85
      %88 = dma.hbm_to_vmem [thread:$0]  %s84, 64, %s86, [#allocation10]
    $region29: #{decoder_forward.1} parent=1 // pred_fallthru
      _
    // Predicated region
    $region30: #{decoder_forward.1} parent=1 // pred_check
      _
    $region31: #{decoder_forward.1} parent=1 // pred_check_branch
      %90 = sbr.rel (0) target = $region33
    $region32: #{decoder_forward.1} parent=1 // pred_region
      %92 = vsyncadd [#allocation13], 0
      %s93 = sshll.u32 %s7, 4
      %s94 = int_to_ptr.hbm [resolvable:$true] %s93
      %s95 = sshll.u32 [#allocation12], 4
      %s96 = int_to_ptr.vmem [resolvable:$true] %s95
      %101 = dma.hbm_to_vmem [thread:$0]  %s94, 8192, %s96, [#allocation13], 512, 512, 32
    $region33: #{decoder_forward.1} parent=1 // pred_fallthru
      _
    // Predicated region
    $region34: #{decoder_forward.1} parent=1 // pred_check
      _
    $region35: #{decoder_forward.1} parent=1 // pred_check_branch
      %103 = sbr.rel (0) target = $region37
    $region36: #{decoder_forward.1} parent=1 // pred_region
      %105 = vsyncadd [#allocation13], 0
      %s106 = sshll.u32 %s8, 4
      %s107 = int_to_ptr.hbm [resolvable:$true] %s106
      %s108 = sshll.u32 [#allocation14], 4
      %s109 = int_to_ptr.vmem [resolvable:$true] %s108
      %114 = dma.hbm_to_vmem [thread:$0]  %s107, 8192, %s109, [#allocation13], 512, 512, 32
    $region37: #{decoder_forward.1} parent=1 // pred_fallthru
      _
    // Predicated region
    $region38: #{decoder_forward.1} parent=1 // pred_check
      _
    $region39: #{decoder_forward.1} parent=1 // pred_check_branch
      %116 = sbr.rel (0) target = $region41
    $region40: #{decoder_forward.1} parent=1 // pred_region
      _
    $region41: #{decoder_forward.1} parent=1 // pred_fallthru
      _
    // Predicated region
    $region42: #{decoder_forward.1} parent=1 // pred_check
      _
    $region43: #{decoder_forward.1} parent=1 // pred_check_branch
      %118 = sbr.rel (0) target = $region45
    $region44: #{decoder_forward.1} parent=1 // pred_region
      %120 = vsyncadd [#allocation16], 0
      %s121 = sshll.u32 %s10, 4
      %s122 = int_to_ptr.hbm [resolvable:$true] %s121
      %s123 = sshll.u32 [#allocation15], 4
      %s124 = int_to_ptr.vmem [resolvable:$true] %s123
      %129 = dma.hbm_to_vmem [thread:$0]  %s122, 2048, %s124, [#allocation16], 128, 128, 8
    $region45: #{decoder_forward.1} parent=1 // pred_fallthru
      _
    // Predicated region
    $region46: #{decoder_forward.1} parent=1 // pred_check
      _
    $region47: #{decoder_forward.1} parent=1 // pred_check_branch
      %131 = sbr.rel (0) target = $region49
    $region48: #{decoder_forward.1} parent=1 // pred_region
      %133 = dma.done [#allocation4], 8192
    $region49: #{decoder_forward.1} parent=1 // pred_fallthru
      _
    // Predicated region
    $region50: #{decoder_forward.1} parent=1 // pred_check
      _
    $region51: #{decoder_forward.1} parent=1 // pred_check_branch
      %135 = sbr.rel (0) target = $region53
    $region52: #{decoder_forward.1} parent=1 // pred_region
      %137 = dma.done [#allocation7], 8192
    $region53: #{decoder_forward.1} parent=1 // pred_fallthru
      _
    // Predicated region
    $region54: #{decoder_forward.1} parent=1 // pred_check
      _
    $region55: #{decoder_forward.1} parent=1 // pred_check_branch
      %139 = sbr.rel (0) target = $region57
    $region56: #{decoder_forward.1} parent=1 // pred_region
      %141 = dma.done [#allocation7], 8192
    $region57: #{decoder_forward.1} parent=1 // pred_fallthru
      _
    // Predicated region
    $region58: #{decoder_forward.1} parent=1 // pred_check
      _
    $region59: #{decoder_forward.1} parent=1 // pred_check_branch
      %143 = sbr.rel (0) target = $region61
    $region60: #{decoder_forward.1} parent=1 // pred_region
      %145 = dma.done [#allocation10], 8192
    $region61: #{decoder_forward.1} parent=1 // pred_fallthru
      _
    // Predicated region
    $region62: #{decoder_forward.1} parent=1 // pred_check
      _
    $region63: #{decoder_forward.1} parent=1 // pred_check_branch
      %147 = sbr.rel (0) target = $region65
    $region64: #{decoder_forward.1} parent=1 // pred_region
      %149 = dma.done [#allocation10], 64
    $region65: #{decoder_forward.1} parent=1 // pred_fallthru
      _
    // Predicated region
    $region66: #{decoder_forward.1} parent=1 // pred_check
      _
    $region67: #{decoder_forward.1} parent=1 // pred_check_branch
      %151 = sbr.rel (0) target = $region69
    $region68: #{decoder_forward.1} parent=1 // pred_region
      %153 = dma.done [#allocation13], 8192
    $region69: #{decoder_forward.1} parent=1 // pred_fallthru
      _
    // Predicated region
    $region70: #{decoder_forward.1} parent=1 // pred_check
      _
    $region71: #{decoder_forward.1} parent=1 // pred_check_branch
      %155 = sbr.rel (0) target = $region73
    $region72: #{decoder_forward.1} parent=1 // pred_region
      %157 = dma.done [#allocation13], 8192
    $region73: #{decoder_forward.1} parent=1 // pred_fallthru
      _
    // Predicated region
    $region74: #{decoder_forward.1} parent=1 // pred_check
      _
    $region75: #{decoder_forward.1} parent=1 // pred_check_branch
      %159 = sbr.rel (0) target = $region77
    $region76: #{decoder_forward.1} parent=1 // pred_region
      %161 = dma.done [#allocation16], 2048
    $region77: #{decoder_forward.1} parent=1 // pred_fallthru
      _
    %v162 = vld [vmem:[#allocation3] sm:$0xff]
    %v163 = vld [vmem:[#allocation3 + $0x8] sm:$0xff]
    %v164 = vld [vmem:[#allocation3 + $0x10] sm:$0xff]
    %v165 = vld [vmem:[#allocation3 + $0x18] sm:$0xff]
    %v166 = vld [vmem:[#allocation3 + $0x20] sm:$0xff]
    %v167 = vld [vmem:[#allocation3 + $0x28] sm:$0xff]
    %v168 = vld [vmem:[#allocation3 + $0x30] sm:$0xff]
    %v169 = vld [vmem:[#allocation3 + $0x38] sm:$0xff]
    %v170 = vld [vmem:[#allocation3 + $0x40] sm:$0xff]
    %v171 = vld [vmem:[#allocation3 + $0x48] sm:$0xff]
    %v172 = vld [vmem:[#allocation3 + $0x50] sm:$0xff]
    %v173 = vld [vmem:[#allocation3 + $0x58] sm:$0xff]
    %v174 = vld [vmem:[#allocation3 + $0x60] sm:$0xff]
    %v175 = vld [vmem:[#allocation3 + $0x68] sm:$0xff]
    %v176 = vld [vmem:[#allocation3 + $0x70] sm:$0xff]
    %v177 = vld [vmem:[#allocation3 + $0x78] sm:$0xff]
    %v178 = vld [vmem:[#allocation3 + $0x80] sm:$0xff]
    %v179 = vld [vmem:[#allocation3 + $0x88] sm:$0xff]
    %v180 = vld [vmem:[#allocation3 + $0x90] sm:$0xff]
    %v181 = vld [vmem:[#allocation3 + $0x98] sm:$0xff]
    %v182 = vld [vmem:[#allocation3 + $0xa0] sm:$0xff]
    %v183 = vld [vmem:[#allocation3 + $0xa8] sm:$0xff]
    %v184 = vld [vmem:[#allocation3 + $0xb0] sm:$0xff]
    %v185 = vld [vmem:[#allocation3 + $0xb8] sm:$0xff]
    %v186 = vld [vmem:[#allocation3 + $0xc0] sm:$0xff]
    %v187 = vld [vmem:[#allocation3 + $0xc8] sm:$0xff]
    %v188 = vld [vmem:[#allocation3 + $0xd0] sm:$0xff]
    %v189 = vld [vmem:[#allocation3 + $0xd8] sm:$0xff]
    %v190 = vld [vmem:[#allocation3 + $0xe0] sm:$0xff]
    %v191 = vld [vmem:[#allocation3 + $0xe8] sm:$0xff]
    %v192 = vld [vmem:[#allocation3 + $0xf0] sm:$0xff]
    %v193 = vld [vmem:[#allocation3 + $0xf8] sm:$0xff]
    %v194 = vld [vmem:[#allocation3 + $0x100] sm:$0xff]
    %v195 = vld [vmem:[#allocation3 + $0x108] sm:$0xff]
    %v196 = vld [vmem:[#allocation3 + $0x110] sm:$0xff]
    %v197 = vld [vmem:[#allocation3 + $0x118] sm:$0xff]
    %v198 = vld [vmem:[#allocation3 + $0x120] sm:$0xff]
    %v199 = vld [vmem:[#allocation3 + $0x128] sm:$0xff]
    %v200 = vld [vmem:[#allocation3 + $0x130] sm:$0xff]
    %v201 = vld [vmem:[#allocation3 + $0x138] sm:$0xff]
    %v202 = vld [vmem:[#allocation3 + $0x140] sm:$0xff]
    %v203 = vld [vmem:[#allocation3 + $0x148] sm:$0xff]
    %v204 = vld [vmem:[#allocation3 + $0x150] sm:$0xff]
    %v205 = vld [vmem:[#allocation3 + $0x158] sm:$0xff]
    %v206 = vld [vmem:[#allocation3 + $0x160] sm:$0xff]
    %v207 = vld [vmem:[#allocation3 + $0x168] sm:$0xff]
    %v208 = vld [vmem:[#allocation3 + $0x170] sm:$0xff]
    %v209 = vld [vmem:[#allocation3 + $0x178] sm:$0xff]
    %v210 = vld [vmem:[#allocation3 + $0x180] sm:$0xff]
    %v211 = vld [vmem:[#allocation3 + $0x188] sm:$0xff]
    %v212 = vld [vmem:[#allocation3 + $0x190] sm:$0xff]
    %v213 = vld [vmem:[#allocation3 + $0x198] sm:$0xff]
    %v214 = vld [vmem:[#allocation3 + $0x1a0] sm:$0xff]
    %v215 = vld [vmem:[#allocation3 + $0x1a8] sm:$0xff]
    %v216 = vld [vmem:[#allocation3 + $0x1b0] sm:$0xff]
    %v217 = vld [vmem:[#allocation3 + $0x1b8] sm:$0xff]
    %v218 = vld [vmem:[#allocation3 + $0x1c0] sm:$0xff]
    %v219 = vld [vmem:[#allocation3 + $0x1c8] sm:$0xff]
    %v220 = vld [vmem:[#allocation3 + $0x1d0] sm:$0xff]
    %v221 = vld [vmem:[#allocation3 + $0x1d8] sm:$0xff]
    %v222 = vld [vmem:[#allocation3 + $0x1e0] sm:$0xff]
    %v223 = vld [vmem:[#allocation3 + $0x1e8] sm:$0xff]
    %v224 = vld [vmem:[#allocation3 + $0x1f0] sm:$0xff]
    %v225 = vld [vmem:[#allocation3 + $0x1f8] sm:$0xff]
    %v226 = vld [vmem:[#allocation6] sm:$0xff]
    %v227 = vld [vmem:[#allocation6 + $0x8] sm:$0xff]
    %v228 = vld [vmem:[#allocation6 + $0x10] sm:$0xff]
    %v229 = vld [vmem:[#allocation6 + $0x18] sm:$0xff]
    %v230 = vld [vmem:[#allocation6 + $0x20] sm:$0xff]
    %v231 = vld [vmem:[#allocation6 + $0x28] sm:$0xff]
    %v232 = vld [vmem:[#allocation6 + $0x30] sm:$0xff]
    %v233 = vld [vmem:[#allocation6 + $0x38] sm:$0xff]
    %v234 = vld [vmem:[#allocation6 + $0x40] sm:$0xff]
    %v235 = vld [vmem:[#allocation6 + $0x48] sm:$0xff]
    %v236 = vld [vmem:[#allocation6 + $0x50] sm:$0xff]
    %v237 = vld [vmem:[#allocation6 + $0x58] sm:$0xff]
    %v238 = vld [vmem:[#allocation6 + $0x60] sm:$0xff]
    %v239 = vld [vmem:[#allocation6 + $0x68] sm:$0xff]
    %v240 = vld [vmem:[#allocation6 + $0x70] sm:$0xff]
    %v241 = vld [vmem:[#allocation6 + $0x78] sm:$0xff]
    %v242 = vld [vmem:[#allocation6 + $0x80] sm:$0xff]
    %v243 = vld [vmem:[#allocation6 + $0x88] sm:$0xff]
    %v244 = vld [vmem:[#allocation6 + $0x90] sm:$0xff]
    %v245 = vld [vmem:[#allocation6 + $0x98] sm:$0xff]
    %v246 = vld [vmem:[#allocation6 + $0xa0] sm:$0xff]
    %v247 = vld [vmem:[#allocation6 + $0xa8] sm:$0xff]
    %v248 = vld [vmem:[#allocation6 + $0xb0] sm:$0xff]
    %v249 = vld [vmem:[#allocation6 + $0xb8] sm:$0xff]
    %v250 = vld [vmem:[#allocation6 + $0xc0] sm:$0xff]
    %v251 = vld [vmem:[#allocation6 + $0xc8] sm:$0xff]
    %v252 = vld [vmem:[#allocation6 + $0xd0] sm:$0xff]
    %v253 = vld [vmem:[#allocation6 + $0xd8] sm:$0xff]
    %v254 = vld [vmem:[#allocation6 + $0xe0] sm:$0xff]
    %v255 = vld [vmem:[#allocation6 + $0xe8] sm:$0xff]
    %v256 = vld [vmem:[#allocation6 + $0xf0] sm:$0xff]
    %v257 = vld [vmem:[#allocation6 + $0xf8] sm:$0xff]
    %v258 = vld [vmem:[#allocation6 + $0x100] sm:$0xff]
    %v259 = vld [vmem:[#allocation6 + $0x108] sm:$0xff]
    %v260 = vld [vmem:[#allocation6 + $0x110] sm:$0xff]
    %v261 = vld [vmem:[#allocation6 + $0x118] sm:$0xff]
    %v262 = vld [vmem:[#allocation6 + $0x120] sm:$0xff]
    %v263 = vld [vmem:[#allocation6 + $0x128] sm:$0xff]
    %v264 = vld [vmem:[#allocation6 + $0x130] sm:$0xff]
    %v265 = vld [vmem:[#allocation6 + $0x138] sm:$0xff]
    %v266 = vld [vmem:[#allocation6 + $0x140] sm:$0xff]
    %v267 = vld [vmem:[#allocation6 + $0x148] sm:$0xff]
    %v268 = vld [vmem:[#allocation6 + $0x150] sm:$0xff]
    %v269 = vld [vmem:[#allocation6 + $0x158] sm:$0xff]
    %v270 = vld [vmem:[#allocation6 + $0x160] sm:$0xff]
    %v271 = vld [vmem:[#allocation6 + $0x168] sm:$0xff]
    %v272 = vld [vmem:[#allocation6 + $0x170] sm:$0xff]
    %v273 = vld [vmem:[#allocation6 + $0x178] sm:$0xff]
    %v274 = vld [vmem:[#allocation6 + $0x180] sm:$0xff]
    %v275 = vld [vmem:[#allocation6 + $0x188] sm:$0xff]
    %v276 = vld [vmem:[#allocation6 + $0x190] sm:$0xff]
    %v277 = vld [vmem:[#allocation6 + $0x198] sm:$0xff]
    %v278 = vld [vmem:[#allocation6 + $0x1a0] sm:$0xff]
    %v279 = vld [vmem:[#allocation6 + $0x1a8] sm:$0xff]
    %v280 = vld [vmem:[#allocation6 + $0x1b0] sm:$0xff]
    %v281 = vld [vmem:[#allocation6 + $0x1b8] sm:$0xff]
    %v282 = vld [vmem:[#allocation6 + $0x1c0] sm:$0xff]
    %v283 = vld [vmem:[#allocation6 + $0x1c8] sm:$0xff]
    %v284 = vld [vmem:[#allocation6 + $0x1d0] sm:$0xff]
    %v285 = vld [vmem:[#allocation6 + $0x1d8] sm:$0xff]
    %v286 = vld [vmem:[#allocation6 + $0x1e0] sm:$0xff]
    %v287 = vld [vmem:[#allocation6 + $0x1e8] sm:$0xff]
    %v288 = vld [vmem:[#allocation6 + $0x1f0] sm:$0xff]
    %v289 = vld [vmem:[#allocation6 + $0x1f8] sm:$0xff]
    %v290 = vld [vmem:[%s3] sm:$0xf]
    %v291 = vld [vmem:[%s0] sm:$0x1]
    %v293 = vperm.slane %v290, 0
    %v294 = vperm.slane %v290, 1
    %v295 = vperm.slane %v290, 2
    %v296 = vperm.slane %v290, 3
    %301 = vmatpush.msra.mxu0 %v222
    %302 = vmatpush.msra.mxu0 %v218
    %303 = vmatpush.msra.mxu0 %v214
    %304 = vmatpush.msra.mxu0 %v210
    %305 = vmatpush.msra.mxu0 %v206
    %306 = vmatpush.msra.mxu0 %v202
    %307 = vmatpush.msra.mxu0 %v198
    %308 = vmatpush.msra.mxu0 %v194
    %309 = vmatpush.msra.mxu0 %v190
    %310 = vmatpush.msra.mxu0 %v186
    %311 = vmatpush.msra.mxu0 %v182
    %312 = vmatpush.msra.mxu0 %v178
    %313 = vmatpush.msra.mxu0 %v174
    %314 = vmatpush.msra.mxu0 %v170
    %315 = vmatpush.msra.mxu0 %v166
    %316 = vmatpush.msra.mxu0 %v162
    %317 = vmatmul.f32.gmra.mxu0 %v291
    %v318 = vpop.f32.mrf.mxu0
    %v319 = vadd.f32 %v293, %v318
    %320 = vdwg.mxu0
    %321 = vmatpush.msra.mxu0 %v223
    %322 = vmatpush.msra.mxu0 %v219
    %323 = vmatpush.msra.mxu0 %v215
    %324 = vmatpush.msra.mxu0 %v211
    %325 = vmatpush.msra.mxu0 %v207
    %326 = vmatpush.msra.mxu0 %v203
    %327 = vmatpush.msra.mxu0 %v199
    %328 = vmatpush.msra.mxu0 %v195
    %329 = vmatpush.msra.mxu0 %v191
    %330 = vmatpush.msra.mxu0 %v187
    %331 = vmatpush.msra.mxu0 %v183
    %332 = vmatpush.msra.mxu0 %v179
    %333 = vmatpush.msra.mxu0 %v175
    %334 = vmatpush.msra.mxu0 %v171
    %335 = vmatpush.msra.mxu0 %v167
    %336 = vmatpush.msra.mxu0 %v163
    %337 = vmatmul.f32.gmra.mxu0 %v291
    %v338 = vpop.f32.mrf.mxu0
    %v339 = vadd.f32 %v294, %v338
    %340 = vdwg.mxu0
    %341 = vmatpush.msra.mxu0 %v224
    %342 = vmatpush.msra.mxu0 %v220
    %343 = vmatpush.msra.mxu0 %v216
    %344 = vmatpush.msra.mxu0 %v212
    %345 = vmatpush.msra.mxu0 %v208
    %346 = vmatpush.msra.mxu0 %v204
    %347 = vmatpush.msra.mxu0 %v200
    %348 = vmatpush.msra.mxu0 %v196
    %349 = vmatpush.msra.mxu0 %v192
    %350 = vmatpush.msra.mxu0 %v188
    %351 = vmatpush.msra.mxu0 %v184
    %352 = vmatpush.msra.mxu0 %v180
    %353 = vmatpush.msra.mxu0 %v176
    %354 = vmatpush.msra.mxu0 %v172
    %355 = vmatpush.msra.mxu0 %v168
    %356 = vmatpush.msra.mxu0 %v164
    %357 = vmatmul.f32.gmra.mxu0 %v291
    %v358 = vpop.f32.mrf.mxu0
    %v359 = vadd.f32 %v295, %v358
    %360 = vdwg.mxu0
    %361 = vmatpush.msra.mxu0 %v225
    %362 = vmatpush.msra.mxu0 %v221
    %363 = vmatpush.msra.mxu0 %v217
    %364 = vmatpush.msra.mxu0 %v213
    %365 = vmatpush.msra.mxu0 %v209
    %366 = vmatpush.msra.mxu0 %v205
    %367 = vmatpush.msra.mxu0 %v201
    %368 = vmatpush.msra.mxu0 %v197
    %369 = vmatpush.msra.mxu0 %v193
    %370 = vmatpush.msra.mxu0 %v189
    %371 = vmatpush.msra.mxu0 %v185
    %372 = vmatpush.msra.mxu0 %v181
    %373 = vmatpush.msra.mxu0 %v177
    %374 = vmatpush.msra.mxu0 %v173
    %375 = vmatpush.msra.mxu0 %v169
    %376 = vmatpush.msra.mxu0 %v165
    %377 = vmatmul.f32.gmra.mxu0 %v291
    %v378 = vpop.f32.mrf.mxu0
    %v379 = vadd.f32 %v296, %v378
    %380 = vdwg.mxu0
    %381 = vmatpush.msra.mxu0 %v286
    %382 = vmatpush.msra.mxu0 %v282
    %383 = vmatpush.msra.mxu0 %v278
    %384 = vmatpush.msra.mxu0 %v274
    %385 = vmatpush.msra.mxu0 %v270
    %386 = vmatpush.msra.mxu0 %v266
    %387 = vmatpush.msra.mxu0 %v262
    %388 = vmatpush.msra.mxu0 %v258
    %389 = vmatpush.msra.mxu0 %v254
    %390 = vmatpush.msra.mxu0 %v250
    %391 = vmatpush.msra.mxu0 %v246
    %392 = vmatpush.msra.mxu0 %v242
    %393 = vmatpush.msra.mxu0 %v238
    %394 = vmatpush.msra.mxu0 %v234
    %395 = vmatpush.msra.mxu0 %v230
    %396 = vmatpush.msra.mxu0 %v226
    %397 = vmatmul.f32.gmra.mxu0 0.0
    %v398 = vpop.f32.mrf.mxu0
    %v399 = vadd.f32 0.0, %v398
    %400 = vdwg.mxu0
    %401 = vmatpush.msra.mxu0 %v287
    %402 = vmatpush.msra.mxu0 %v283
    %403 = vmatpush.msra.mxu0 %v279
    %404 = vmatpush.msra.mxu0 %v275
    %405 = vmatpush.msra.mxu0 %v271
    %406 = vmatpush.msra.mxu0 %v267
    %407 = vmatpush.msra.mxu0 %v263
    %408 = vmatpush.msra.mxu0 %v259
    %409 = vmatpush.msra.mxu0 %v255
    %410 = vmatpush.msra.mxu0 %v251
    %411 = vmatpush.msra.mxu0 %v247
    %412 = vmatpush.msra.mxu0 %v243
    %413 = vmatpush.msra.mxu0 %v239
    %414 = vmatpush.msra.mxu0 %v235
    %415 = vmatpush.msra.mxu0 %v231
    %416 = vmatpush.msra.mxu0 %v227
    %417 = vmatmul.f32.gmra.mxu0 0.0
    %v418 = vpop.f32.mrf.mxu0
    %v419 = vadd.f32 0.0, %v418
    %420 = vdwg.mxu0
    %421 = vmatpush.msra.mxu0 %v288
    %422 = vmatpush.msra.mxu0 %v284
    %423 = vmatpush.msra.mxu0 %v280
    %424 = vmatpush.msra.mxu0 %v276
    %425 = vmatpush.msra.mxu0 %v272
    %426 = vmatpush.msra.mxu0 %v268
    %427 = vmatpush.msra.mxu0 %v264
    %428 = vmatpush.msra.mxu0 %v260
    %429 = vmatpush.msra.mxu0 %v256
    %430 = vmatpush.msra.mxu0 %v252
    %431 = vmatpush.msra.mxu0 %v248
    %432 = vmatpush.msra.mxu0 %v244
    %433 = vmatpush.msra.mxu0 %v240
    %434 = vmatpush.msra.mxu0 %v236
    %435 = vmatpush.msra.mxu0 %v232
    %436 = vmatpush.msra.mxu0 %v228
    %437 = vmatmul.f32.gmra.mxu0 0.0
    %v438 = vpop.f32.mrf.mxu0
    %v439 = vadd.f32 0.0, %v438
    %440 = vdwg.mxu0
    %441 = vmatpush.msra.mxu0 %v289
    %442 = vmatpush.msra.mxu0 %v285
    %443 = vmatpush.msra.mxu0 %v281
    %444 = vmatpush.msra.mxu0 %v277
    %445 = vmatpush.msra.mxu0 %v273
    %446 = vmatpush.msra.mxu0 %v269
    %447 = vmatpush.msra.mxu0 %v265
    %448 = vmatpush.msra.mxu0 %v261
    %449 = vmatpush.msra.mxu0 %v257
    %450 = vmatpush.msra.mxu0 %v253
    %451 = vmatpush.msra.mxu0 %v249
    %452 = vmatpush.msra.mxu0 %v245
    %453 = vmatpush.msra.mxu0 %v241
    %454 = vmatpush.msra.mxu0 %v237
    %455 = vmatpush.msra.mxu0 %v233
    %456 = vmatpush.msra.mxu0 %v229
    %457 = vmatmul.f32.gmra.mxu0 0.0
    %v458 = vpop.f32.mrf.mxu0
    %v459 = vadd.f32 0.0, %v458
    %460 = vdwg.mxu0
    %v461 = vadd.f32 %v319, %v399
    %v462 = vadd.f32 %v339, %v419
    %v463 = vadd.f32 %v359, %v439
    %v464 = vadd.f32 %v379, %v459
    %v465 = vxor.u32 %v461, 2147483648
    %v466 = vmul.f32 %v465, 1.442695
    %v467 = vpow.pop %v466
    %v468 = vadd.f32 %v467, 1.0
    %v469 = vrcp.pop %v468
    %v470 = vmul.f32 %v468, %v469
    %v471 = vsub.f32 1.0, %v470
    %v472 = vmul.f32 %v469, %v471
    %v473 = vadd.f32 %v469, %v472
    %vm474 = vweird.f32 %v468
    %vm475 = vweird.f32 %v469
    %vm476 = vmor %vm474, %vm475
    %v477 = vsel %vm476, %v469, %v473
    %v478 = vand.u32 2147483647, %v468
    %vm479 = vcmp.eq.f32.partialorder %v478, 8.507059e+37
    %v480 = vand.u32 %v468, 2147483648
    %v481 = vor.u32 1.1754944e-38, %v480
    %v482 = vsel %vm479, %v481, %v477
    %v483 = vmul.f32 1.0, %v482
    %v484 = vxor.u32 %v462, 2147483648
    %v485 = vmul.f32 %v484, 1.442695
    %v486 = vpow.pop %v485
    %v487 = vadd.f32 %v486, 1.0
    %v488 = vrcp.pop %v487
    %v489 = vmul.f32 %v487, %v488
    %v490 = vsub.f32 1.0, %v489
    %v491 = vmul.f32 %v488, %v490
    %v492 = vadd.f32 %v488, %v491
    %vm493 = vweird.f32 %v487
    %vm494 = vweird.f32 %v488
    %vm495 = vmor %vm493, %vm494
    %v496 = vsel %vm495, %v488, %v492
    %v497 = vand.u32 2147483647, %v487
    %vm498 = vcmp.eq.f32.partialorder %v497, 8.507059e+37
    %v499 = vand.u32 %v487, 2147483648
    %v500 = vor.u32 1.1754944e-38, %v499
    %v501 = vsel %vm498, %v500, %v496
    %v502 = vmul.f32 1.0, %v501
    %v503 = vtanh.pop %v463
    %v504 = vxor.u32 %v464, 2147483648
    %v505 = vmul.f32 %v504, 1.442695
    %v506 = vpow.pop %v505
    %v507 = vadd.f32 %v506, 1.0
    %v508 = vrcp.pop %v507
    %v509 = vmul.f32 %v507, %v508
    %v510 = vsub.f32 1.0, %v509
    %v511 = vmul.f32 %v508, %v510
    %v512 = vadd.f32 %v508, %v511
    %vm513 = vweird.f32 %v507
    %vm514 = vweird.f32 %v508
    %vm515 = vmor %vm513, %vm514
    %v516 = vsel %vm515, %v508, %v512
    %v517 = vand.u32 2147483647, %v507
    %vm518 = vcmp.eq.f32.partialorder %v517, 8.507059e+37
    %v519 = vand.u32 %v507, 2147483648
    %v520 = vor.u32 1.1754944e-38, %v519
    %v521 = vsel %vm518, %v520, %v516
    %v522 = vmul.f32 1.0, %v521
    %v523 = vmul.f32 %v502, 0.0
    %v524 = vmul.f32 %v483, %v503
    %v525 = vadd.f32 %v523, %v524
    %v526 = vtanh.pop %v525
    %v527 = vmul.f32 %v522, %v526
    %v528 = vxor.u32 %v527, 2147483648
    %v529 = vmul.f32 %v528, 1.442695
    %v530 = vpow.pop %v529
    %v531 = vadd.f32 %v530, 1.0
    %v532 = vrcp.pop %v531
    %v533 = vmul.f32 %v531, %v532
    %v534 = vsub.f32 1.0, %v533
    %v535 = vmul.f32 %v532, %v534
    %v536 = vadd.f32 %v532, %v535
    %vm537 = vweird.f32 %v531
    %vm538 = vweird.f32 %v532
    %vm539 = vmor %vm537, %vm538
    %v540 = vsel %vm539, %v532, %v536
    %v541 = vand.u32 2147483647, %v531
    %vm542 = vcmp.eq.f32.partialorder %v541, 8.507059e+37
    %v543 = vand.u32 %v531, 2147483648
    %v544 = vor.u32 1.1754944e-38, %v543
    %v545 = vsel %vm542, %v544, %v540
    %v546 = vmul.f32 1.0, %v545
    %547 = vst [vmem:[#allocation2] sm:$0x1] %v546
    %548 = vmatpush.msra.mxu0 %v286
    %549 = vmatpush.msra.mxu0 %v282
    %550 = vmatpush.msra.mxu0 %v278
    %551 = vmatpush.msra.mxu0 %v274
    %552 = vmatpush.msra.mxu0 %v270
    %553 = vmatpush.msra.mxu0 %v266
    %554 = vmatpush.msra.mxu0 %v262
    %555 = vmatpush.msra.mxu0 %v258
    %556 = vmatpush.msra.mxu0 %v254
    %557 = vmatpush.msra.mxu0 %v250
    %558 = vmatpush.msra.mxu0 %v246
    %559 = vmatpush.msra.mxu0 %v242
    %560 = vmatpush.msra.mxu0 %v238
    %561 = vmatpush.msra.mxu0 %v234
    %562 = vmatpush.msra.mxu0 %v230
    %563 = vmatpush.msra.mxu0 %v226
    %564 = vmatmul.f32.gmra.mxu0 %v527
    %v565 = vpop.f32.mrf.mxu0
    %v566 = vadd.f32 0.0, %v565
    %567 = vdwg.mxu0
    %568 = vmatpush.msra.mxu0 %v287
    %569 = vmatpush.msra.mxu0 %v283
    %570 = vmatpush.msra.mxu0 %v279
    %571 = vmatpush.msra.mxu0 %v275
    %572 = vmatpush.msra.mxu0 %v271
    %573 = vmatpush.msra.mxu0 %v267
    %574 = vmatpush.msra.mxu0 %v263
    %575 = vmatpush.msra.mxu0 %v259
    %576 = vmatpush.msra.mxu0 %v255
    %577 = vmatpush.msra.mxu0 %v251
    %578 = vmatpush.msra.mxu0 %v247
    %579 = vmatpush.msra.mxu0 %v243
    %580 = vmatpush.msra.mxu0 %v239
    %581 = vmatpush.msra.mxu0 %v235
    %582 = vmatpush.msra.mxu0 %v231
    %583 = vmatpush.msra.mxu0 %v227
    %584 = vmatmul.f32.gmra.mxu0 %v527
    %v585 = vpop.f32.mrf.mxu0
    %v586 = vadd.f32 0.0, %v585
    %587 = vdwg.mxu0
    %588 = vmatpush.msra.mxu0 %v288
    %589 = vmatpush.msra.mxu0 %v284
    %590 = vmatpush.msra.mxu0 %v280
    %591 = vmatpush.msra.mxu0 %v276
    %592 = vmatpush.msra.mxu0 %v272
    %593 = vmatpush.msra.mxu0 %v268
    %594 = vmatpush.msra.mxu0 %v264
    %595 = vmatpush.msra.mxu0 %v260
    %596 = vmatpush.msra.mxu0 %v256
    %597 = vmatpush.msra.mxu0 %v252
    %598 = vmatpush.msra.mxu0 %v248
    %599 = vmatpush.msra.mxu0 %v244
    %600 = vmatpush.msra.mxu0 %v240
    %601 = vmatpush.msra.mxu0 %v236
    %602 = vmatpush.msra.mxu0 %v232
    %603 = vmatpush.msra.mxu0 %v228
    %604 = vmatmul.f32.gmra.mxu0 %v527
    %v605 = vpop.f32.mrf.mxu0
    %v606 = vadd.f32 0.0, %v605
    %607 = vdwg.mxu0
    %608 = vmatpush.msra.mxu0 %v289
    %609 = vmatpush.msra.mxu0 %v285
    %610 = vmatpush.msra.mxu0 %v281
    %611 = vmatpush.msra.mxu0 %v277
    %612 = vmatpush.msra.mxu0 %v273
    %613 = vmatpush.msra.mxu0 %v269
    %614 = vmatpush.msra.mxu0 %v265
    %615 = vmatpush.msra.mxu0 %v261
    %616 = vmatpush.msra.mxu0 %v257
    %617 = vmatpush.msra.mxu0 %v253
    %618 = vmatpush.msra.mxu0 %v249
    %619 = vmatpush.msra.mxu0 %v245
    %620 = vmatpush.msra.mxu0 %v241
    %621 = vmatpush.msra.mxu0 %v237
    %622 = vmatpush.msra.mxu0 %v233
    %623 = vmatpush.msra.mxu0 %v229
    %624 = vmatmul.f32.gmra.mxu0 %v527
    %v625 = vpop.f32.mrf.mxu0
    %v626 = vadd.f32 0.0, %v625
    %627 = vdwg.mxu0
    %v628 = vadd.f32 %v319, %v566
    %v629 = vadd.f32 %v339, %v586
    %v630 = vadd.f32 %v359, %v606
    %v631 = vadd.f32 %v379, %v626
    %v632 = vxor.u32 %v628, 2147483648
    %v633 = vmul.f32 %v632, 1.442695
    %v634 = vpow.pop %v633
    %v635 = vadd.f32 %v634, 1.0
    %v636 = vrcp.pop %v635
    %v637 = vmul.f32 %v635, %v636
    %v638 = vsub.f32 1.0, %v637
    %v639 = vmul.f32 %v636, %v638
    %v640 = vadd.f32 %v636, %v639
    %vm641 = vweird.f32 %v635
    %vm642 = vweird.f32 %v636
    %vm643 = vmor %vm641, %vm642
    %v644 = vsel %vm643, %v636, %v640
    %v645 = vand.u32 2147483647, %v635
    %vm646 = vcmp.eq.f32.partialorder %v645, 8.507059e+37
    %v647 = vand.u32 %v635, 2147483648
    %v648 = vor.u32 1.1754944e-38, %v647
    %v649 = vsel %vm646, %v648, %v644
    %v650 = vmul.f32 1.0, %v649
    %v651 = vxor.u32 %v629, 2147483648
    %v652 = vmul.f32 %v651, 1.442695
    %v653 = vpow.pop %v652
    %v654 = vadd.f32 %v653, 1.0
    %v655 = vrcp.pop %v654
    %v656 = vmul.f32 %v654, %v655
    %v657 = vsub.f32 1.0, %v656
    %v658 = vmul.f32 %v655, %v657
    %v659 = vadd.f32 %v655, %v658
    %vm660 = vweird.f32 %v654
    %vm661 = vweird.f32 %v655
    %vm662 = vmor %vm660, %vm661
    %v663 = vsel %vm662, %v655, %v659
    %v664 = vand.u32 2147483647, %v654
    %vm665 = vcmp.eq.f32.partialorder %v664, 8.507059e+37
    %v666 = vand.u32 %v654, 2147483648
    %v667 = vor.u32 1.1754944e-38, %v666
    %v668 = vsel %vm665, %v667, %v663
    %v669 = vmul.f32 1.0, %v668
    %v670 = vtanh.pop %v630
    %v671 = vxor.u32 %v631, 2147483648
    %v672 = vmul.f32 %v671, 1.442695
    %v673 = vpow.pop %v672
    %v674 = vadd.f32 %v673, 1.0
    %v675 = vrcp.pop %v674
    %v676 = vmul.f32 %v674, %v675
    %v677 = vsub.f32 1.0, %v676
    %v678 = vmul.f32 %v675, %v677
    %v679 = vadd.f32 %v675, %v678
    %vm680 = vweird.f32 %v674
    %vm681 = vweird.f32 %v675
    %vm682 = vmor %vm680, %vm681
    %v683 = vsel %vm682, %v675, %v679
    %v684 = vand.u32 2147483647, %v674
    %vm685 = vcmp.eq.f32.partialorder %v684, 8.507059e+37
    %v686 = vand.u32 %v674, 2147483648
    %v687 = vor.u32 1.1754944e-38, %v686
    %v688 = vsel %vm685, %v687, %v683
    %v689 = vmul.f32 1.0, %v688
    %v690 = vmul.f32 %v669, %v525
    %v691 = vmul.f32 %v650, %v670
    %v692 = vadd.f32 %v690, %v691
    %v693 = vtanh.pop %v692
    %v694 = vmul.f32 %v689, %v693
    %v695 = vxor.u32 %v694, 2147483648
    %v696 = vmul.f32 %v695, 1.442695
    %v697 = vpow.pop %v696
    %v698 = vadd.f32 %v697, 1.0
    %v699 = vrcp.pop %v698
    %v700 = vmul.f32 %v698, %v699
    %v701 = vsub.f32 1.0, %v700
    %v702 = vmul.f32 %v699, %v701
    %v703 = vadd.f32 %v699, %v702
    %vm704 = vweird.f32 %v698
    %vm705 = vweird.f32 %v699
    %vm706 = vmor %vm704, %vm705
    %v707 = vsel %vm706, %v699, %v703
    %v708 = vand.u32 2147483647, %v698
    %vm709 = vcmp.eq.f32.partialorder %v708, 8.507059e+37
    %v710 = vand.u32 %v698, 2147483648
    %v711 = vor.u32 1.1754944e-38, %v710
    %v712 = vsel %vm709, %v711, %v707
    %v713 = vmul.f32 1.0, %v712
    %714 = vst [vmem:[#allocation2 + $0x1] sm:$0x1] %v713
    %715 = vmatpush.msra.mxu0 %v286
    %716 = vmatpush.msra.mxu0 %v282
    %717 = vmatpush.msra.mxu0 %v278
    %718 = vmatpush.msra.mxu0 %v274
    %719 = vmatpush.msra.mxu0 %v270
    %720 = vmatpush.msra.mxu0 %v266
    %721 = vmatpush.msra.mxu0 %v262
    %722 = vmatpush.msra.mxu0 %v258
    %723 = vmatpush.msra.mxu0 %v254
    %724 = vmatpush.msra.mxu0 %v250
    %725 = vmatpush.msra.mxu0 %v246
    %726 = vmatpush.msra.mxu0 %v242
    %727 = vmatpush.msra.mxu0 %v238
    %728 = vmatpush.msra.mxu0 %v234
    %729 = vmatpush.msra.mxu0 %v230
    %730 = vmatpush.msra.mxu0 %v226
    %731 = vmatmul.f32.gmra.mxu0 %v694
    %v732 = vpop.f32.mrf.mxu0
    %v733 = vadd.f32 0.0, %v732
    %734 = vdwg.mxu0
    %735 = vmatpush.msra.mxu0 %v287
    %736 = vmatpush.msra.mxu0 %v283
    %737 = vmatpush.msra.mxu0 %v279
    %738 = vmatpush.msra.mxu0 %v275
    %739 = vmatpush.msra.mxu0 %v271
    %740 = vmatpush.msra.mxu0 %v267
    %741 = vmatpush.msra.mxu0 %v263
    %742 = vmatpush.msra.mxu0 %v259
    %743 = vmatpush.msra.mxu0 %v255
    %744 = vmatpush.msra.mxu0 %v251
    %745 = vmatpush.msra.mxu0 %v247
    %746 = vmatpush.msra.mxu0 %v243
    %747 = vmatpush.msra.mxu0 %v239
    %748 = vmatpush.msra.mxu0 %v235
    %749 = vmatpush.msra.mxu0 %v231
    %750 = vmatpush.msra.mxu0 %v227
    %751 = vmatmul.f32.gmra.mxu0 %v694
    %v752 = vpop.f32.mrf.mxu0
    %v753 = vadd.f32 0.0, %v752
    %754 = vdwg.mxu0
    %755 = vmatpush.msra.mxu0 %v288
    %756 = vmatpush.msra.mxu0 %v284
    %757 = vmatpush.msra.mxu0 %v280
    %758 = vmatpush.msra.mxu0 %v276
    %759 = vmatpush.msra.mxu0 %v272
    %760 = vmatpush.msra.mxu0 %v268
    %761 = vmatpush.msra.mxu0 %v264
    %762 = vmatpush.msra.mxu0 %v260
    %763 = vmatpush.msra.mxu0 %v256
    %764 = vmatpush.msra.mxu0 %v252
    %765 = vmatpush.msra.mxu0 %v248
    %766 = vmatpush.msra.mxu0 %v244
    %767 = vmatpush.msra.mxu0 %v240
    %768 = vmatpush.msra.mxu0 %v236
    %769 = vmatpush.msra.mxu0 %v232
    %770 = vmatpush.msra.mxu0 %v228
    %771 = vmatmul.f32.gmra.mxu0 %v694
    %v772 = vpop.f32.mrf.mxu0
    %v773 = vadd.f32 0.0, %v772
    %774 = vdwg.mxu0
    %775 = vmatpush.msra.mxu0 %v289
    %776 = vmatpush.msra.mxu0 %v285
    %777 = vmatpush.msra.mxu0 %v281
    %778 = vmatpush.msra.mxu0 %v277
    %779 = vmatpush.msra.mxu0 %v273
    %780 = vmatpush.msra.mxu0 %v269
    %781 = vmatpush.msra.mxu0 %v265
    %782 = vmatpush.msra.mxu0 %v261
    %783 = vmatpush.msra.mxu0 %v257
    %784 = vmatpush.msra.mxu0 %v253
    %785 = vmatpush.msra.mxu0 %v249
    %786 = vmatpush.msra.mxu0 %v245
    %787 = vmatpush.msra.mxu0 %v241
    %788 = vmatpush.msra.mxu0 %v237
    %789 = vmatpush.msra.mxu0 %v233
    %790 = vmatpush.msra.mxu0 %v229
    %791 = vmatmul.f32.gmra.mxu0 %v694
    %v792 = vpop.f32.mrf.mxu0
    %v793 = vadd.f32 0.0, %v792
    %794 = vdwg.mxu0
    %v795 = vadd.f32 %v319, %v733
    %v796 = vadd.f32 %v339, %v753
    %v797 = vadd.f32 %v359, %v773
    %v798 = vadd.f32 %v379, %v793
    %v799 = vxor.u32 %v795, 2147483648
    %v800 = vmul.f32 %v799, 1.442695
    %v801 = vpow.pop %v800
    %v802 = vadd.f32 %v801, 1.0
    %v803 = vrcp.pop %v802
    %v804 = vmul.f32 %v802, %v803
    %v805 = vsub.f32 1.0, %v804
    %v806 = vmul.f32 %v803, %v805
    %v807 = vadd.f32 %v803, %v806
    %vm808 = vweird.f32 %v802
    %vm809 = vweird.f32 %v803
    %vm810 = vmor %vm808, %vm809
    %v811 = vsel %vm810, %v803, %v807
    %v812 = vand.u32 2147483647, %v802
    %vm813 = vcmp.eq.f32.partialorder %v812, 8.507059e+37
    %v814 = vand.u32 %v802, 2147483648
    %v815 = vor.u32 1.1754944e-38, %v814
    %v816 = vsel %vm813, %v815, %v811
    %v817 = vmul.f32 1.0, %v816
    %v818 = vxor.u32 %v796, 2147483648
    %v819 = vmul.f32 %v818, 1.442695
    %v820 = vpow.pop %v819
    %v821 = vadd.f32 %v820, 1.0
    %v822 = vrcp.pop %v821
    %v823 = vmul.f32 %v821, %v822
    %v824 = vsub.f32 1.0, %v823
    %v825 = vmul.f32 %v822, %v824
    %v826 = vadd.f32 %v822, %v825
    %vm827 = vweird.f32 %v821
    %vm828 = vweird.f32 %v822
    %vm829 = vmor %vm827, %vm828
    %v830 = vsel %vm829, %v822, %v826
    %v831 = vand.u32 2147483647, %v821
    %vm832 = vcmp.eq.f32.partialorder %v831, 8.507059e+37
    %v833 = vand.u32 %v821, 2147483648
    %v834 = vor.u32 1.1754944e-38, %v833
    %v835 = vsel %vm832, %v834, %v830
    %v836 = vmul.f32 1.0, %v835
    %v837 = vtanh.pop %v797
    %v838 = vxor.u32 %v798, 2147483648
    %v839 = vmul.f32 %v838, 1.442695
    %v840 = vpow.pop %v839
    %v841 = vadd.f32 %v840, 1.0
    %v842 = vrcp.pop %v841
    %v843 = vmul.f32 %v841, %v842
    %v844 = vsub.f32 1.0, %v843
    %v845 = vmul.f32 %v842, %v844
    %v846 = vadd.f32 %v842, %v845
    %vm847 = vweird.f32 %v841
    %vm848 = vweird.f32 %v842
    %vm849 = vmor %vm847, %vm848
    %v850 = vsel %vm849, %v842, %v846
    %v851 = vand.u32 2147483647, %v841
    %vm852 = vcmp.eq.f32.partialorder %v851, 8.507059e+37
    %v853 = vand.u32 %v841, 2147483648
    %v854 = vor.u32 1.1754944e-38, %v853
    %v855 = vsel %vm852, %v854, %v850
    %v856 = vmul.f32 1.0, %v855
    %v857 = vmul.f32 %v836, %v692
    %v858 = vmul.f32 %v817, %v837
    %v859 = vadd.f32 %v857, %v858
    %v860 = vtanh.pop %v859
    %v861 = vmul.f32 %v856, %v860
    %v862 = vxor.u32 %v861, 2147483648
    %v863 = vmul.f32 %v862, 1.442695
    %v864 = vpow.pop %v863
    %v865 = vadd.f32 %v864, 1.0
    %v866 = vrcp.pop %v865
    %v867 = vmul.f32 %v865, %v866
    %v868 = vsub.f32 1.0, %v867
    %v869 = vmul.f32 %v866, %v868
    %v870 = vadd.f32 %v866, %v869
    %vm871 = vweird.f32 %v865
    %vm872 = vweird.f32 %v866
    %vm873 = vmor %vm871, %vm872
    %v874 = vsel %vm873, %v866, %v870
    %v875 = vand.u32 2147483647, %v865
    %vm876 = vcmp.eq.f32.partialorder %v875, 8.507059e+37
    %v877 = vand.u32 %v865, 2147483648
    %v878 = vor.u32 1.1754944e-38, %v877
    %v879 = vsel %vm876, %v878, %v874
    %v880 = vmul.f32 1.0, %v879
    %881 = vst [vmem:[#allocation2 + $0x2] sm:$0x1] %v880
    %882 = vmatpush.msra.mxu0 %v286
    %883 = vmatpush.msra.mxu0 %v282
    %884 = vmatpush.msra.mxu0 %v278
    %885 = vmatpush.msra.mxu0 %v274
    %886 = vmatpush.msra.mxu0 %v270
    %887 = vmatpush.msra.mxu0 %v266
    %888 = vmatpush.msra.mxu0 %v262
    %889 = vmatpush.msra.mxu0 %v258
    %890 = vmatpush.msra.mxu0 %v254
    %891 = vmatpush.msra.mxu0 %v250
    %892 = vmatpush.msra.mxu0 %v246
    %893 = vmatpush.msra.mxu0 %v242
    %894 = vmatpush.msra.mxu0 %v238
    %895 = vmatpush.msra.mxu0 %v234
    %896 = vmatpush.msra.mxu0 %v230
    %897 = vmatpush.msra.mxu0 %v226
    %898 = vmatmul.f32.gmra.mxu0 %v861
    %v899 = vpop.f32.mrf.mxu0
    %v900 = vadd.f32 0.0, %v899
    %901 = vdwg.mxu0
    %902 = vmatpush.msra.mxu0 %v287
    %903 = vmatpush.msra.mxu0 %v283
    %904 = vmatpush.msra.mxu0 %v279
    %905 = vmatpush.msra.mxu0 %v275
    %906 = vmatpush.msra.mxu0 %v271
    %907 = vmatpush.msra.mxu0 %v267
    %908 = vmatpush.msra.mxu0 %v263
    %909 = vmatpush.msra.mxu0 %v259
    %910 = vmatpush.msra.mxu0 %v255
    %911 = vmatpush.msra.mxu0 %v251
    %912 = vmatpush.msra.mxu0 %v247
    %913 = vmatpush.msra.mxu0 %v243
    %914 = vmatpush.msra.mxu0 %v239
    %915 = vmatpush.msra.mxu0 %v235
    %916 = vmatpush.msra.mxu0 %v231
    %917 = vmatpush.msra.mxu0 %v227
    %918 = vmatmul.f32.gmra.mxu0 %v861
    %v919 = vpop.f32.mrf.mxu0
    %v920 = vadd.f32 0.0, %v919
    %921 = vdwg.mxu0
    %922 = vmatpush.msra.mxu0 %v288
    %923 = vmatpush.msra.mxu0 %v284
    %924 = vmatpush.msra.mxu0 %v280
    %925 = vmatpush.msra.mxu0 %v276
    %926 = vmatpush.msra.mxu0 %v272
    %927 = vmatpush.msra.mxu0 %v268
    %928 = vmatpush.msra.mxu0 %v264
    %929 = vmatpush.msra.mxu0 %v260
    %930 = vmatpush.msra.mxu0 %v256
    %931 = vmatpush.msra.mxu0 %v252
    %932 = vmatpush.msra.mxu0 %v248
    %933 = vmatpush.msra.mxu0 %v244
    %934 = vmatpush.msra.mxu0 %v240
    %935 = vmatpush.msra.mxu0 %v236
    %936 = vmatpush.msra.mxu0 %v232
    %937 = vmatpush.msra.mxu0 %v228
    %938 = vmatmul.f32.gmra.mxu0 %v861
    %v939 = vpop.f32.mrf.mxu0
    %v940 = vadd.f32 0.0, %v939
    %941 = vdwg.mxu0
    %942 = vmatpush.msra.mxu0 %v289
    %943 = vmatpush.msra.mxu0 %v285
    %944 = vmatpush.msra.mxu0 %v281
    %945 = vmatpush.msra.mxu0 %v277
    %946 = vmatpush.msra.mxu0 %v273
    %947 = vmatpush.msra.mxu0 %v269
    %948 = vmatpush.msra.mxu0 %v265
    %949 = vmatpush.msra.mxu0 %v261
    %950 = vmatpush.msra.mxu0 %v257
    %951 = vmatpush.msra.mxu0 %v253
    %952 = vmatpush.msra.mxu0 %v249
    %953 = vmatpush.msra.mxu0 %v245
    %954 = vmatpush.msra.mxu0 %v241
    %955 = vmatpush.msra.mxu0 %v237
    %956 = vmatpush.msra.mxu0 %v233
    %957 = vmatpush.msra.mxu0 %v229
    %958 = vmatmul.f32.gmra.mxu0 %v861
    %v959 = vpop.f32.mrf.mxu0
    %v960 = vadd.f32 0.0, %v959
    %961 = vdwg.mxu0
    %v962 = vadd.f32 %v319, %v900
    %v963 = vadd.f32 %v339, %v920
    %v964 = vadd.f32 %v359, %v940
    %v965 = vadd.f32 %v379, %v960
    %v966 = vxor.u32 %v962, 2147483648
    %v967 = vmul.f32 %v966, 1.442695
    %v968 = vpow.pop %v967
    %v969 = vadd.f32 %v968, 1.0
    %v970 = vrcp.pop %v969
    %v971 = vmul.f32 %v969, %v970
    %v972 = vsub.f32 1.0, %v971
    %v973 = vmul.f32 %v970, %v972
    %v974 = vadd.f32 %v970, %v973
    %vm975 = vweird.f32 %v969
    %vm976 = vweird.f32 %v970
    %vm977 = vmor %vm975, %vm976
    %v978 = vsel %vm977, %v970, %v974
    %v979 = vand.u32 2147483647, %v969
    %vm980 = vcmp.eq.f32.partialorder %v979, 8.507059e+37
    %v981 = vand.u32 %v969, 2147483648
    %v982 = vor.u32 1.1754944e-38, %v981
    %v983 = vsel %vm980, %v982, %v978
    %v984 = vmul.f32 1.0, %v983
    %v985 = vxor.u32 %v963, 2147483648
    %v986 = vmul.f32 %v985, 1.442695
    %v987 = vpow.pop %v986
    %v988 = vadd.f32 %v987, 1.0
    %v989 = vrcp.pop %v988
    %v990 = vmul.f32 %v988, %v989
    %v991 = vsub.f32 1.0, %v990
    %v992 = vmul.f32 %v989, %v991
    %v993 = vadd.f32 %v989, %v992
    %vm994 = vweird.f32 %v988
    %vm995 = vweird.f32 %v989
    %vm996 = vmor %vm994, %vm995
    %v997 = vsel %vm996, %v989, %v993
    %v998 = vand.u32 2147483647, %v988
    %vm999 = vcmp.eq.f32.partialorder %v998, 8.507059e+37
    %v1000 = vand.u32 %v988, 2147483648
    %v1001 = vor.u32 1.1754944e-38, %v1000
    %v1002 = vsel %vm999, %v1001, %v997
    %v1003 = vmul.f32 1.0, %v1002
    %v1004 = vtanh.pop %v964
    %v1005 = vxor.u32 %v965, 2147483648
    %v1006 = vmul.f32 %v1005, 1.442695
    %v1007 = vpow.pop %v1006
    %v1008 = vadd.f32 %v1007, 1.0
    %v1009 = vrcp.pop %v1008
    %v1010 = vmul.f32 %v1008, %v1009
    %v1011 = vsub.f32 1.0, %v1010
    %v1012 = vmul.f32 %v1009, %v1011
    %v1013 = vadd.f32 %v1009, %v1012
    %vm1014 = vweird.f32 %v1008
    %vm1015 = vweird.f32 %v1009
    %vm1016 = vmor %vm1014, %vm1015
    %v1017 = vsel %vm1016, %v1009, %v1013
    %v1018 = vand.u32 2147483647, %v1008
    %vm1019 = vcmp.eq.f32.partialorder %v1018, 8.507059e+37
    %v1020 = vand.u32 %v1008, 2147483648
    %v1021 = vor.u32 1.1754944e-38, %v1020
    %v1022 = vsel %vm1019, %v1021, %v1017
    %v1023 = vmul.f32 1.0, %v1022
    %v1024 = vmul.f32 %v1003, %v859
    %v1025 = vmul.f32 %v984, %v1004
    %v1026 = vadd.f32 %v1024, %v1025
    %v1027 = vtanh.pop %v1026
    %v1028 = vmul.f32 %v1023, %v1027
    %v1029 = vxor.u32 %v1028, 2147483648
    %v1030 = vmul.f32 %v1029, 1.442695
    %v1031 = vpow.pop %v1030
    %v1032 = vadd.f32 %v1031, 1.0
    %v1033 = vrcp.pop %v1032
    %v1034 = vmul.f32 %v1032, %v1033
    %v1035 = vsub.f32 1.0, %v1034
    %v1036 = vmul.f32 %v1033, %v1035
    %v1037 = vadd.f32 %v1033, %v1036
    %vm1038 = vweird.f32 %v1032
    %vm1039 = vweird.f32 %v1033
    %vm1040 = vmor %vm1038, %vm1039
    %v1041 = vsel %vm1040, %v1033, %v1037
    %v1042 = vand.u32 2147483647, %v1032
    %vm1043 = vcmp.eq.f32.partialorder %v1042, 8.507059e+37
    %v1044 = vand.u32 %v1032, 2147483648
    %v1045 = vor.u32 1.1754944e-38, %v1044
    %v1046 = vsel %vm1043, %v1045, %v1041
    %v1047 = vmul.f32 1.0, %v1046
    %1048 = vst [vmem:[#allocation2 + $0x3] sm:$0x1] %v1047
    %1049 = vmatpush.msra.mxu0 %v286
    %1050 = vmatpush.msra.mxu0 %v282
    %1051 = vmatpush.msra.mxu0 %v278
    %1052 = vmatpush.msra.mxu0 %v274
    %1053 = vmatpush.msra.mxu0 %v270
    %1054 = vmatpush.msra.mxu0 %v266
    %1055 = vmatpush.msra.mxu0 %v262
    %1056 = vmatpush.msra.mxu0 %v258
    %1057 = vmatpush.msra.mxu0 %v254
    %1058 = vmatpush.msra.mxu0 %v250
    %1059 = vmatpush.msra.mxu0 %v246
    %1060 = vmatpush.msra.mxu0 %v242
    %1061 = vmatpush.msra.mxu0 %v238
    %1062 = vmatpush.msra.mxu0 %v234
    %1063 = vmatpush.msra.mxu0 %v230
    %1064 = vmatpush.msra.mxu0 %v226
    %1065 = vmatmul.f32.gmra.mxu0 %v1028
    %v1066 = vpop.f32.mrf.mxu0
    %v1067 = vadd.f32 0.0, %v1066
    %1068 = vdwg.mxu0
    %1069 = vmatpush.msra.mxu0 %v287
    %1070 = vmatpush.msra.mxu0 %v283
    %1071 = vmatpush.msra.mxu0 %v279
    %1072 = vmatpush.msra.mxu0 %v275
    %1073 = vmatpush.msra.mxu0 %v271
    %1074 = vmatpush.msra.mxu0 %v267
    %1075 = vmatpush.msra.mxu0 %v263
    %1076 = vmatpush.msra.mxu0 %v259
    %1077 = vmatpush.msra.mxu0 %v255
    %1078 = vmatpush.msra.mxu0 %v251
    %1079 = vmatpush.msra.mxu0 %v247
    %1080 = vmatpush.msra.mxu0 %v243
    %1081 = vmatpush.msra.mxu0 %v239
    %1082 = vmatpush.msra.mxu0 %v235
    %1083 = vmatpush.msra.mxu0 %v231
    %1084 = vmatpush.msra.mxu0 %v227
    %1085 = vmatmul.f32.gmra.mxu0 %v1028
    %v1086 = vpop.f32.mrf.mxu0
    %v1087 = vadd.f32 0.0, %v1086
    %1088 = vdwg.mxu0
    %1089 = vmatpush.msra.mxu0 %v288
    %1090 = vmatpush.msra.mxu0 %v284
    %1091 = vmatpush.msra.mxu0 %v280
    %1092 = vmatpush.msra.mxu0 %v276
    %1093 = vmatpush.msra.mxu0 %v272
    %1094 = vmatpush.msra.mxu0 %v268
    %1095 = vmatpush.msra.mxu0 %v264
    %1096 = vmatpush.msra.mxu0 %v260
    %1097 = vmatpush.msra.mxu0 %v256
    %1098 = vmatpush.msra.mxu0 %v252
    %1099 = vmatpush.msra.mxu0 %v248
    %1100 = vmatpush.msra.mxu0 %v244
    %1101 = vmatpush.msra.mxu0 %v240
    %1102 = vmatpush.msra.mxu0 %v236
    %1103 = vmatpush.msra.mxu0 %v232
    %1104 = vmatpush.msra.mxu0 %v228
    %1105 = vmatmul.f32.gmra.mxu0 %v1028
    %v1106 = vpop.f32.mrf.mxu0
    %v1107 = vadd.f32 0.0, %v1106
    %1108 = vdwg.mxu0
    %1109 = vmatpush.msra.mxu0 %v289
    %1110 = vmatpush.msra.mxu0 %v285
    %1111 = vmatpush.msra.mxu0 %v281
    %1112 = vmatpush.msra.mxu0 %v277
    %1113 = vmatpush.msra.mxu0 %v273
    %1114 = vmatpush.msra.mxu0 %v269
    %1115 = vmatpush.msra.mxu0 %v265
    %1116 = vmatpush.msra.mxu0 %v261
    %1117 = vmatpush.msra.mxu0 %v257
    %1118 = vmatpush.msra.mxu0 %v253
    %1119 = vmatpush.msra.mxu0 %v249
    %1120 = vmatpush.msra.mxu0 %v245
    %1121 = vmatpush.msra.mxu0 %v241
    %1122 = vmatpush.msra.mxu0 %v237
    %1123 = vmatpush.msra.mxu0 %v233
    %1124 = vmatpush.msra.mxu0 %v229
    %1125 = vmatmul.f32.gmra.mxu0 %v1028
    %v1126 = vpop.f32.mrf.mxu0
    %v1127 = vadd.f32 0.0, %v1126
    %1128 = vdwg.mxu0
    %v1129 = vadd.f32 %v319, %v1067
    %v1130 = vadd.f32 %v339, %v1087
    %v1131 = vadd.f32 %v359, %v1107
    %v1132 = vadd.f32 %v379, %v1127
    %v1133 = vxor.u32 %v1129, 2147483648
    %v1134 = vmul.f32 %v1133, 1.442695
    %v1135 = vpow.pop %v1134
    %v1136 = vadd.f32 %v1135, 1.0
    %v1137 = vrcp.pop %v1136
    %v1138 = vmul.f32 %v1136, %v1137
    %v1139 = vsub.f32 1.0, %v1138
    %v1140 = vmul.f32 %v1137, %v1139
    %v1141 = vadd.f32 %v1137, %v1140
    %vm1142 = vweird.f32 %v1136
    %vm1143 = vweird.f32 %v1137
    %vm1144 = vmor %vm1142, %vm1143
    %v1145 = vsel %vm1144, %v1137, %v1141
    %v1146 = vand.u32 2147483647, %v1136
    %vm1147 = vcmp.eq.f32.partialorder %v1146, 8.507059e+37
    %v1148 = vand.u32 %v1136, 2147483648
    %v1149 = vor.u32 1.1754944e-38, %v1148
    %v1150 = vsel %vm1147, %v1149, %v1145
    %v1151 = vmul.f32 1.0, %v1150
    %v1152 = vxor.u32 %v1130, 2147483648
    %v1153 = vmul.f32 %v1152, 1.442695
    %v1154 = vpow.pop %v1153
    %v1155 = vadd.f32 %v1154, 1.0
    %v1156 = vrcp.pop %v1155
    %v1157 = vmul.f32 %v1155, %v1156
    %v1158 = vsub.f32 1.0, %v1157
    %v1159 = vmul.f32 %v1156, %v1158
    %v1160 = vadd.f32 %v1156, %v1159
    %vm1161 = vweird.f32 %v1155
    %vm1162 = vweird.f32 %v1156
    %vm1163 = vmor %vm1161, %vm1162
    %v1164 = vsel %vm1163, %v1156, %v1160
    %v1165 = vand.u32 2147483647, %v1155
    %vm1166 = vcmp.eq.f32.partialorder %v1165, 8.507059e+37
    %v1167 = vand.u32 %v1155, 2147483648
    %v1168 = vor.u32 1.1754944e-38, %v1167
    %v1169 = vsel %vm1166, %v1168, %v1164
    %v1170 = vmul.f32 1.0, %v1169
    %v1171 = vtanh.pop %v1131
    %v1172 = vxor.u32 %v1132, 2147483648
    %v1173 = vmul.f32 %v1172, 1.442695
    %v1174 = vpow.pop %v1173
    %v1175 = vadd.f32 %v1174, 1.0
    %v1176 = vrcp.pop %v1175
    %v1177 = vmul.f32 %v1175, %v1176
    %v1178 = vsub.f32 1.0, %v1177
    %v1179 = vmul.f32 %v1176, %v1178
    %v1180 = vadd.f32 %v1176, %v1179
    %vm1181 = vweird.f32 %v1175
    %vm1182 = vweird.f32 %v1176
    %vm1183 = vmor %vm1181, %vm1182
    %v1184 = vsel %vm1183, %v1176, %v1180
    %v1185 = vand.u32 2147483647, %v1175
    %vm1186 = vcmp.eq.f32.partialorder %v1185, 8.507059e+37
    %v1187 = vand.u32 %v1175, 2147483648
    %v1188 = vor.u32 1.1754944e-38, %v1187
    %v1189 = vsel %vm1186, %v1188, %v1184
    %v1190 = vmul.f32 1.0, %v1189
    %v1191 = vmul.f32 %v1170, %v1026
    %v1192 = vmul.f32 %v1151, %v1171
    %v1193 = vadd.f32 %v1191, %v1192
    %v1194 = vtanh.pop %v1193
    %v1195 = vmul.f32 %v1190, %v1194
    %v1196 = vxor.u32 %v1195, 2147483648
    %v1197 = vmul.f32 %v1196, 1.442695
    %v1198 = vpow.pop %v1197
    %v1199 = vadd.f32 %v1198, 1.0
    %v1200 = vrcp.pop %v1199
    %v1201 = vmul.f32 %v1199, %v1200
    %v1202 = vsub.f32 1.0, %v1201
    %v1203 = vmul.f32 %v1200, %v1202
    %v1204 = vadd.f32 %v1200, %v1203
    %vm1205 = vweird.f32 %v1199
    %vm1206 = vweird.f32 %v1200
    %vm1207 = vmor %vm1205, %vm1206
    %v1208 = vsel %vm1207, %v1200, %v1204
    %v1209 = vand.u32 2147483647, %v1199
    %vm1210 = vcmp.eq.f32.partialorder %v1209, 8.507059e+37
    %v1211 = vand.u32 %v1199, 2147483648
    %v1212 = vor.u32 1.1754944e-38, %v1211
    %v1213 = vsel %vm1210, %v1212, %v1208
    %v1214 = vmul.f32 1.0, %v1213
    %1215 = vst [vmem:[#allocation2 + $0x4] sm:$0x1] %v1214
    %1216 = vmatpush.msra.mxu0 %v286
    %1217 = vmatpush.msra.mxu0 %v282
    %1218 = vmatpush.msra.mxu0 %v278
    %1219 = vmatpush.msra.mxu0 %v274
    %1220 = vmatpush.msra.mxu0 %v270
    %1221 = vmatpush.msra.mxu0 %v266
    %1222 = vmatpush.msra.mxu0 %v262
    %1223 = vmatpush.msra.mxu0 %v258
    %1224 = vmatpush.msra.mxu0 %v254
    %1225 = vmatpush.msra.mxu0 %v250
    %1226 = vmatpush.msra.mxu0 %v246
    %1227 = vmatpush.msra.mxu0 %v242
    %1228 = vmatpush.msra.mxu0 %v238
    %1229 = vmatpush.msra.mxu0 %v234
    %1230 = vmatpush.msra.mxu0 %v230
    %1231 = vmatpush.msra.mxu0 %v226
    %1232 = vmatmul.f32.gmra.mxu0 %v1195
    %v1233 = vpop.f32.mrf.mxu0
    %v1234 = vadd.f32 0.0, %v1233
    %1235 = vdwg.mxu0
    %1236 = vmatpush.msra.mxu0 %v287
    %1237 = vmatpush.msra.mxu0 %v283
    %1238 = vmatpush.msra.mxu0 %v279
    %1239 = vmatpush.msra.mxu0 %v275
    %1240 = vmatpush.msra.mxu0 %v271
    %1241 = vmatpush.msra.mxu0 %v267
    %1242 = vmatpush.msra.mxu0 %v263
    %1243 = vmatpush.msra.mxu0 %v259
    %1244 = vmatpush.msra.mxu0 %v255
    %1245 = vmatpush.msra.mxu0 %v251
    %1246 = vmatpush.msra.mxu0 %v247
    %1247 = vmatpush.msra.mxu0 %v243
    %1248 = vmatpush.msra.mxu0 %v239
    %1249 = vmatpush.msra.mxu0 %v235
    %1250 = vmatpush.msra.mxu0 %v231
    %1251 = vmatpush.msra.mxu0 %v227
    %1252 = vmatmul.f32.gmra.mxu0 %v1195
    %v1253 = vpop.f32.mrf.mxu0
    %v1254 = vadd.f32 0.0, %v1253
    %1255 = vdwg.mxu0
    %1256 = vmatpush.msra.mxu0 %v288
    %1257 = vmatpush.msra.mxu0 %v284
    %1258 = vmatpush.msra.mxu0 %v280
    %1259 = vmatpush.msra.mxu0 %v276
    %1260 = vmatpush.msra.mxu0 %v272
    %1261 = vmatpush.msra.mxu0 %v268
    %1262 = vmatpush.msra.mxu0 %v264
    %1263 = vmatpush.msra.mxu0 %v260
    %1264 = vmatpush.msra.mxu0 %v256
    %1265 = vmatpush.msra.mxu0 %v252
    %1266 = vmatpush.msra.mxu0 %v248
    %1267 = vmatpush.msra.mxu0 %v244
    %1268 = vmatpush.msra.mxu0 %v240
    %1269 = vmatpush.msra.mxu0 %v236
    %1270 = vmatpush.msra.mxu0 %v232
    %1271 = vmatpush.msra.mxu0 %v228
    %1272 = vmatmul.f32.gmra.mxu0 %v1195
    %v1273 = vpop.f32.mrf.mxu0
    %v1274 = vadd.f32 0.0, %v1273
    %1275 = vdwg.mxu0
    %1276 = vmatpush.msra.mxu0 %v289
    %1277 = vmatpush.msra.mxu0 %v285
    %1278 = vmatpush.msra.mxu0 %v281
    %1279 = vmatpush.msra.mxu0 %v277
    %1280 = vmatpush.msra.mxu0 %v273
    %1281 = vmatpush.msra.mxu0 %v269
    %1282 = vmatpush.msra.mxu0 %v265
    %1283 = vmatpush.msra.mxu0 %v261
    %1284 = vmatpush.msra.mxu0 %v257
    %1285 = vmatpush.msra.mxu0 %v253
    %1286 = vmatpush.msra.mxu0 %v249
    %1287 = vmatpush.msra.mxu0 %v245
    %1288 = vmatpush.msra.mxu0 %v241
    %1289 = vmatpush.msra.mxu0 %v237
    %1290 = vmatpush.msra.mxu0 %v233
    %1291 = vmatpush.msra.mxu0 %v229
    %1292 = vmatmul.f32.gmra.mxu0 %v1195
    %v1293 = vpop.f32.mrf.mxu0
    %v1294 = vadd.f32 0.0, %v1293
    %1295 = vdwg.mxu0
    %v1296 = vadd.f32 %v319, %v1234
    %v1297 = vadd.f32 %v339, %v1254
    %v1298 = vadd.f32 %v359, %v1274
    %v1299 = vadd.f32 %v379, %v1294
    %v1300 = vxor.u32 %v1296, 2147483648
    %v1301 = vmul.f32 %v1300, 1.442695
    %v1302 = vpow.pop %v1301
    %v1303 = vadd.f32 %v1302, 1.0
    %v1304 = vrcp.pop %v1303
    %v1305 = vmul.f32 %v1303, %v1304
    %v1306 = vsub.f32 1.0, %v1305
    %v1307 = vmul.f32 %v1304, %v1306
    %v1308 = vadd.f32 %v1304, %v1307
    %vm1309 = vweird.f32 %v1303
    %vm1310 = vweird.f32 %v1304
    %vm1311 = vmor %vm1309, %vm1310
    %v1312 = vsel %vm1311, %v1304, %v1308
    %v1313 = vand.u32 2147483647, %v1303
    %vm1314 = vcmp.eq.f32.partialorder %v1313, 8.507059e+37
    %v1315 = vand.u32 %v1303, 2147483648
    %v1316 = vor.u32 1.1754944e-38, %v1315
    %v1317 = vsel %vm1314, %v1316, %v1312
    %v1318 = vmul.f32 1.0, %v1317
    %v1319 = vxor.u32 %v1297, 2147483648
    %v1320 = vmul.f32 %v1319, 1.442695
    %v1321 = vpow.pop %v1320
    %v1322 = vadd.f32 %v1321, 1.0
    %v1323 = vrcp.pop %v1322
    %v1324 = vmul.f32 %v1322, %v1323
    %v1325 = vsub.f32 1.0, %v1324
    %v1326 = vmul.f32 %v1323, %v1325
    %v1327 = vadd.f32 %v1323, %v1326
    %vm1328 = vweird.f32 %v1322
    %vm1329 = vweird.f32 %v1323
    %vm1330 = vmor %vm1328, %vm1329
    %v1331 = vsel %vm1330, %v1323, %v1327
    %v1332 = vand.u32 2147483647, %v1322
    %vm1333 = vcmp.eq.f32.partialorder %v1332, 8.507059e+37
    %v1334 = vand.u32 %v1322, 2147483648
    %v1335 = vor.u32 1.1754944e-38, %v1334
    %v1336 = vsel %vm1333, %v1335, %v1331
    %v1337 = vmul.f32 1.0, %v1336
    %v1338 = vtanh.pop %v1298
    %v1339 = vxor.u32 %v1299, 2147483648
    %v1340 = vmul.f32 %v1339, 1.442695
    %v1341 = vpow.pop %v1340
    %v1342 = vadd.f32 %v1341, 1.0
    %v1343 = vrcp.pop %v1342
    %v1344 = vmul.f32 %v1342, %v1343
    %v1345 = vsub.f32 1.0, %v1344
    %v1346 = vmul.f32 %v1343, %v1345
    %v1347 = vadd.f32 %v1343, %v1346
    %vm1348 = vweird.f32 %v1342
    %vm1349 = vweird.f32 %v1343
    %vm1350 = vmor %vm1348, %vm1349
    %v1351 = vsel %vm1350, %v1343, %v1347
    %v1352 = vand.u32 2147483647, %v1342
    %vm1353 = vcmp.eq.f32.partialorder %v1352, 8.507059e+37
    %v1354 = vand.u32 %v1342, 2147483648
    %v1355 = vor.u32 1.1754944e-38, %v1354
    %v1356 = vsel %vm1353, %v1355, %v1351
    %v1357 = vmul.f32 1.0, %v1356
    %v1358 = vmul.f32 %v1337, %v1193
    %v1359 = vmul.f32 %v1318, %v1338
    %v1360 = vadd.f32 %v1358, %v1359
    %v1361 = vtanh.pop %v1360
    %v1362 = vmul.f32 %v1357, %v1361
    %v1363 = vxor.u32 %v1362, 2147483648
    %v1364 = vmul.f32 %v1363, 1.442695
    %v1365 = vpow.pop %v1364
    %v1366 = vadd.f32 %v1365, 1.0
    %v1367 = vrcp.pop %v1366
    %v1368 = vmul.f32 %v1366, %v1367
    %v1369 = vsub.f32 1.0, %v1368
    %v1370 = vmul.f32 %v1367, %v1369
    %v1371 = vadd.f32 %v1367, %v1370
    %vm1372 = vweird.f32 %v1366
    %vm1373 = vweird.f32 %v1367
    %vm1374 = vmor %vm1372, %vm1373
    %v1375 = vsel %vm1374, %v1367, %v1371
    %v1376 = vand.u32 2147483647, %v1366
    %vm1377 = vcmp.eq.f32.partialorder %v1376, 8.507059e+37
    %v1378 = vand.u32 %v1366, 2147483648
    %v1379 = vor.u32 1.1754944e-38, %v1378
    %v1380 = vsel %vm1377, %v1379, %v1375
    %v1381 = vmul.f32 1.0, %v1380
    %1382 = vst [vmem:[#allocation2 + $0x5] sm:$0x1] %v1381
    %1383 = vmatpush.msra.mxu0 %v286
    %1384 = vmatpush.msra.mxu0 %v282
    %1385 = vmatpush.msra.mxu0 %v278
    %1386 = vmatpush.msra.mxu0 %v274
    %1387 = vmatpush.msra.mxu0 %v270
    %1388 = vmatpush.msra.mxu0 %v266
    %1389 = vmatpush.msra.mxu0 %v262
    %1390 = vmatpush.msra.mxu0 %v258
    %1391 = vmatpush.msra.mxu0 %v254
    %1392 = vmatpush.msra.mxu0 %v250
    %1393 = vmatpush.msra.mxu0 %v246
    %1394 = vmatpush.msra.mxu0 %v242
    %1395 = vmatpush.msra.mxu0 %v238
    %1396 = vmatpush.msra.mxu0 %v234
    %1397 = vmatpush.msra.mxu0 %v230
    %1398 = vmatpush.msra.mxu0 %v226
    %1399 = vmatmul.f32.gmra.mxu0 %v1362
    %v1400 = vpop.f32.mrf.mxu0
    %v1401 = vadd.f32 0.0, %v1400
    %1402 = vdwg.mxu0
    %1403 = vmatpush.msra.mxu0 %v287
    %1404 = vmatpush.msra.mxu0 %v283
    %1405 = vmatpush.msra.mxu0 %v279
    %1406 = vmatpush.msra.mxu0 %v275
    %1407 = vmatpush.msra.mxu0 %v271
    %1408 = vmatpush.msra.mxu0 %v267
    %1409 = vmatpush.msra.mxu0 %v263
    %1410 = vmatpush.msra.mxu0 %v259
    %1411 = vmatpush.msra.mxu0 %v255
    %1412 = vmatpush.msra.mxu0 %v251
    %1413 = vmatpush.msra.mxu0 %v247
    %1414 = vmatpush.msra.mxu0 %v243
    %1415 = vmatpush.msra.mxu0 %v239
    %1416 = vmatpush.msra.mxu0 %v235
    %1417 = vmatpush.msra.mxu0 %v231
    %1418 = vmatpush.msra.mxu0 %v227
    %1419 = vmatmul.f32.gmra.mxu0 %v1362
    %v1420 = vpop.f32.mrf.mxu0
    %v1421 = vadd.f32 0.0, %v1420
    %1422 = vdwg.mxu0
    %1423 = vmatpush.msra.mxu0 %v288
    %1424 = vmatpush.msra.mxu0 %v284
    %1425 = vmatpush.msra.mxu0 %v280
    %1426 = vmatpush.msra.mxu0 %v276
    %1427 = vmatpush.msra.mxu0 %v272
    %1428 = vmatpush.msra.mxu0 %v268
    %1429 = vmatpush.msra.mxu0 %v264
    %1430 = vmatpush.msra.mxu0 %v260
    %1431 = vmatpush.msra.mxu0 %v256
    %1432 = vmatpush.msra.mxu0 %v252
    %1433 = vmatpush.msra.mxu0 %v248
    %1434 = vmatpush.msra.mxu0 %v244
    %1435 = vmatpush.msra.mxu0 %v240
    %1436 = vmatpush.msra.mxu0 %v236
    %1437 = vmatpush.msra.mxu0 %v232
    %1438 = vmatpush.msra.mxu0 %v228
    %1439 = vmatmul.f32.gmra.mxu0 %v1362
    %v1440 = vpop.f32.mrf.mxu0
    %v1441 = vadd.f32 0.0, %v1440
    %1442 = vdwg.mxu0
    %1443 = vmatpush.msra.mxu0 %v289
    %1444 = vmatpush.msra.mxu0 %v285
    %1445 = vmatpush.msra.mxu0 %v281
    %1446 = vmatpush.msra.mxu0 %v277
    %1447 = vmatpush.msra.mxu0 %v273
    %1448 = vmatpush.msra.mxu0 %v269
    %1449 = vmatpush.msra.mxu0 %v265
    %1450 = vmatpush.msra.mxu0 %v261
    %1451 = vmatpush.msra.mxu0 %v257
    %1452 = vmatpush.msra.mxu0 %v253
    %1453 = vmatpush.msra.mxu0 %v249
    %1454 = vmatpush.msra.mxu0 %v245
    %1455 = vmatpush.msra.mxu0 %v241
    %1456 = vmatpush.msra.mxu0 %v237
    %1457 = vmatpush.msra.mxu0 %v233
    %1458 = vmatpush.msra.mxu0 %v229
    %1459 = vmatmul.f32.gmra.mxu0 %v1362
    %v1460 = vpop.f32.mrf.mxu0
    %v1461 = vadd.f32 0.0, %v1460
    %1462 = vdwg.mxu0
    %v1463 = vadd.f32 %v319, %v1401
    %v1464 = vadd.f32 %v339, %v1421
    %v1465 = vadd.f32 %v359, %v1441
    %v1466 = vadd.f32 %v379, %v1461
    %v1467 = vxor.u32 %v1463, 2147483648
    %v1468 = vmul.f32 %v1467, 1.442695
    %v1469 = vpow.pop %v1468
    %v1470 = vadd.f32 %v1469, 1.0
    %v1471 = vrcp.pop %v1470
    %v1472 = vmul.f32 %v1470, %v1471
    %v1473 = vsub.f32 1.0, %v1472
    %v1474 = vmul.f32 %v1471, %v1473
    %v1475 = vadd.f32 %v1471, %v1474
    %vm1476 = vweird.f32 %v1470
    %vm1477 = vweird.f32 %v1471
    %vm1478 = vmor %vm1476, %vm1477
    %v1479 = vsel %vm1478, %v1471, %v1475
    %v1480 = vand.u32 2147483647, %v1470
    %vm1481 = vcmp.eq.f32.partialorder %v1480, 8.507059e+37
    %v1482 = vand.u32 %v1470, 2147483648
    %v1483 = vor.u32 1.1754944e-38, %v1482
    %v1484 = vsel %vm1481, %v1483, %v1479
    %v1485 = vmul.f32 1.0, %v1484
    %v1486 = vxor.u32 %v1464, 2147483648
    %v1487 = vmul.f32 %v1486, 1.442695
    %v1488 = vpow.pop %v1487
    %v1489 = vadd.f32 %v1488, 1.0
    %v1490 = vrcp.pop %v1489
    %v1491 = vmul.f32 %v1489, %v1490
    %v1492 = vsub.f32 1.0, %v1491
    %v1493 = vmul.f32 %v1490, %v1492
    %v1494 = vadd.f32 %v1490, %v1493
    %vm1495 = vweird.f32 %v1489
    %vm1496 = vweird.f32 %v1490
    %vm1497 = vmor %vm1495, %vm1496
    %v1498 = vsel %vm1497, %v1490, %v1494
    %v1499 = vand.u32 2147483647, %v1489
    %vm1500 = vcmp.eq.f32.partialorder %v1499, 8.507059e+37
    %v1501 = vand.u32 %v1489, 2147483648
    %v1502 = vor.u32 1.1754944e-38, %v1501
    %v1503 = vsel %vm1500, %v1502, %v1498
    %v1504 = vmul.f32 1.0, %v1503
    %v1505 = vtanh.pop %v1465
    %v1506 = vxor.u32 %v1466, 2147483648
    %v1507 = vmul.f32 %v1506, 1.442695
    %v1508 = vpow.pop %v1507
    %v1509 = vadd.f32 %v1508, 1.0
    %v1510 = vrcp.pop %v1509
    %v1511 = vmul.f32 %v1509, %v1510
    %v1512 = vsub.f32 1.0, %v1511
    %v1513 = vmul.f32 %v1510, %v1512
    %v1514 = vadd.f32 %v1510, %v1513
    %vm1515 = vweird.f32 %v1509
    %vm1516 = vweird.f32 %v1510
    %vm1517 = vmor %vm1515, %vm1516
    %v1518 = vsel %vm1517, %v1510, %v1514
    %v1519 = vand.u32 2147483647, %v1509
    %vm1520 = vcmp.eq.f32.partialorder %v1519, 8.507059e+37
    %v1521 = vand.u32 %v1509, 2147483648
    %v1522 = vor.u32 1.1754944e-38, %v1521
    %v1523 = vsel %vm1520, %v1522, %v1518
    %v1524 = vmul.f32 1.0, %v1523
    %v1525 = vmul.f32 %v1504, %v1360
    %v1526 = vmul.f32 %v1485, %v1505
    %v1527 = vadd.f32 %v1525, %v1526
    %v1528 = vtanh.pop %v1527
    %v1529 = vmul.f32 %v1524, %v1528
    %v1530 = vxor.u32 %v1529, 2147483648
    %v1531 = vmul.f32 %v1530, 1.442695
    %v1532 = vpow.pop %v1531
    %v1533 = vadd.f32 %v1532, 1.0
    %v1534 = vrcp.pop %v1533
    %v1535 = vmul.f32 %v1533, %v1534
    %v1536 = vsub.f32 1.0, %v1535
    %v1537 = vmul.f32 %v1534, %v1536
    %v1538 = vadd.f32 %v1534, %v1537
    %vm1539 = vweird.f32 %v1533
    %vm1540 = vweird.f32 %v1534
    %vm1541 = vmor %vm1539, %vm1540
    %v1542 = vsel %vm1541, %v1534, %v1538
    %v1543 = vand.u32 2147483647, %v1533
    %vm1544 = vcmp.eq.f32.partialorder %v1543, 8.507059e+37
    %v1545 = vand.u32 %v1533, 2147483648
    %v1546 = vor.u32 1.1754944e-38, %v1545
    %v1547 = vsel %vm1544, %v1546, %v1542
    %v1548 = vmul.f32 1.0, %v1547
    %1549 = vst [vmem:[#allocation2 + $0x6] sm:$0x1] %v1548
    %1550 = vmatpush.msra.mxu0 %v286
    %1551 = vmatpush.msra.mxu0 %v282
    %1552 = vmatpush.msra.mxu0 %v278
    %1553 = vmatpush.msra.mxu0 %v274
    %1554 = vmatpush.msra.mxu0 %v270
    %1555 = vmatpush.msra.mxu0 %v266
    %1556 = vmatpush.msra.mxu0 %v262
    %1557 = vmatpush.msra.mxu0 %v258
    %1558 = vmatpush.msra.mxu0 %v254
    %1559 = vmatpush.msra.mxu0 %v250
    %1560 = vmatpush.msra.mxu0 %v246
    %1561 = vmatpush.msra.mxu0 %v242
    %1562 = vmatpush.msra.mxu0 %v238
    %1563 = vmatpush.msra.mxu0 %v234
    %1564 = vmatpush.msra.mxu0 %v230
    %1565 = vmatpush.msra.mxu0 %v226
    %1566 = vmatmul.f32.gmra.mxu0 %v1529
    %v1567 = vpop.f32.mrf.mxu0
    %v1568 = vadd.f32 0.0, %v1567
    %1569 = vdwg.mxu0
    %1570 = vmatpush.msra.mxu0 %v287
    %1571 = vmatpush.msra.mxu0 %v283
    %1572 = vmatpush.msra.mxu0 %v279
    %1573 = vmatpush.msra.mxu0 %v275
    %1574 = vmatpush.msra.mxu0 %v271
    %1575 = vmatpush.msra.mxu0 %v267
    %1576 = vmatpush.msra.mxu0 %v263
    %1577 = vmatpush.msra.mxu0 %v259
    %1578 = vmatpush.msra.mxu0 %v255
    %1579 = vmatpush.msra.mxu0 %v251
    %1580 = vmatpush.msra.mxu0 %v247
    %1581 = vmatpush.msra.mxu0 %v243
    %1582 = vmatpush.msra.mxu0 %v239
    %1583 = vmatpush.msra.mxu0 %v235
    %1584 = vmatpush.msra.mxu0 %v231
    %1585 = vmatpush.msra.mxu0 %v227
    %1586 = vmatmul.f32.gmra.mxu0 %v1529
    %v1587 = vpop.f32.mrf.mxu0
    %v1588 = vadd.f32 0.0, %v1587
    %1589 = vdwg.mxu0
    %1590 = vmatpush.msra.mxu0 %v288
    %1591 = vmatpush.msra.mxu0 %v284
    %1592 = vmatpush.msra.mxu0 %v280
    %1593 = vmatpush.msra.mxu0 %v276
    %1594 = vmatpush.msra.mxu0 %v272
    %1595 = vmatpush.msra.mxu0 %v268
    %1596 = vmatpush.msra.mxu0 %v264
    %1597 = vmatpush.msra.mxu0 %v260
    %1598 = vmatpush.msra.mxu0 %v256
    %1599 = vmatpush.msra.mxu0 %v252
    %1600 = vmatpush.msra.mxu0 %v248
    %1601 = vmatpush.msra.mxu0 %v244
    %1602 = vmatpush.msra.mxu0 %v240
    %1603 = vmatpush.msra.mxu0 %v236
    %1604 = vmatpush.msra.mxu0 %v232
    %1605 = vmatpush.msra.mxu0 %v228
    %1606 = vmatmul.f32.gmra.mxu0 %v1529
    %v1607 = vpop.f32.mrf.mxu0
    %v1608 = vadd.f32 0.0, %v1607
    %1609 = vdwg.mxu0
    %1610 = vmatpush.msra.mxu0 %v289
    %1611 = vmatpush.msra.mxu0 %v285
    %1612 = vmatpush.msra.mxu0 %v281
    %1613 = vmatpush.msra.mxu0 %v277
    %1614 = vmatpush.msra.mxu0 %v273
    %1615 = vmatpush.msra.mxu0 %v269
    %1616 = vmatpush.msra.mxu0 %v265
    %1617 = vmatpush.msra.mxu0 %v261
    %1618 = vmatpush.msra.mxu0 %v257
    %1619 = vmatpush.msra.mxu0 %v253
    %1620 = vmatpush.msra.mxu0 %v249
    %1621 = vmatpush.msra.mxu0 %v245
    %1622 = vmatpush.msra.mxu0 %v241
    %1623 = vmatpush.msra.mxu0 %v237
    %1624 = vmatpush.msra.mxu0 %v233
    %1625 = vmatpush.msra.mxu0 %v229
    %1626 = vmatmul.f32.gmra.mxu0 %v1529
    %v1627 = vpop.f32.mrf.mxu0
    %v1628 = vadd.f32 0.0, %v1627
    %1629 = vdwg.mxu0
    %v1630 = vadd.f32 %v319, %v1568
    %v1631 = vadd.f32 %v339, %v1588
    %v1632 = vadd.f32 %v359, %v1608
    %v1633 = vadd.f32 %v379, %v1628
    %v1634 = vxor.u32 %v1630, 2147483648
    %v1635 = vmul.f32 %v1634, 1.442695
    %v1636 = vpow.pop %v1635
    %v1637 = vadd.f32 %v1636, 1.0
    %v1638 = vrcp.pop %v1637
    %v1639 = vmul.f32 %v1637, %v1638
    %v1640 = vsub.f32 1.0, %v1639
    %v1641 = vmul.f32 %v1638, %v1640
    %v1642 = vadd.f32 %v1638, %v1641
    %vm1643 = vweird.f32 %v1637
    %vm1644 = vweird.f32 %v1638
    %vm1645 = vmor %vm1643, %vm1644
    %v1646 = vsel %vm1645, %v1638, %v1642
    %v1647 = vand.u32 2147483647, %v1637
    %vm1648 = vcmp.eq.f32.partialorder %v1647, 8.507059e+37
    %v1649 = vand.u32 %v1637, 2147483648
    %v1650 = vor.u32 1.1754944e-38, %v1649
    %v1651 = vsel %vm1648, %v1650, %v1646
    %v1652 = vmul.f32 1.0, %v1651
    %v1653 = vxor.u32 %v1631, 2147483648
    %v1654 = vmul.f32 %v1653, 1.442695
    %v1655 = vpow.pop %v1654
    %v1656 = vadd.f32 %v1655, 1.0
    %v1657 = vrcp.pop %v1656
    %v1658 = vmul.f32 %v1656, %v1657
    %v1659 = vsub.f32 1.0, %v1658
    %v1660 = vmul.f32 %v1657, %v1659
    %v1661 = vadd.f32 %v1657, %v1660
    %vm1662 = vweird.f32 %v1656
    %vm1663 = vweird.f32 %v1657
    %vm1664 = vmor %vm1662, %vm1663
    %v1665 = vsel %vm1664, %v1657, %v1661
    %v1666 = vand.u32 2147483647, %v1656
    %vm1667 = vcmp.eq.f32.partialorder %v1666, 8.507059e+37
    %v1668 = vand.u32 %v1656, 2147483648
    %v1669 = vor.u32 1.1754944e-38, %v1668
    %v1670 = vsel %vm1667, %v1669, %v1665
    %v1671 = vmul.f32 1.0, %v1670
    %v1672 = vtanh.pop %v1632
    %v1673 = vxor.u32 %v1633, 2147483648
    %v1674 = vmul.f32 %v1673, 1.442695
    %v1675 = vpow.pop %v1674
    %v1676 = vadd.f32 %v1675, 1.0
    %v1677 = vrcp.pop %v1676
    %v1678 = vmul.f32 %v1676, %v1677
    %v1679 = vsub.f32 1.0, %v1678
    %v1680 = vmul.f32 %v1677, %v1679
    %v1681 = vadd.f32 %v1677, %v1680
    %vm1682 = vweird.f32 %v1676
    %vm1683 = vweird.f32 %v1677
    %vm1684 = vmor %vm1682, %vm1683
    %v1685 = vsel %vm1684, %v1677, %v1681
    %v1686 = vand.u32 2147483647, %v1676
    %vm1687 = vcmp.eq.f32.partialorder %v1686, 8.507059e+37
    %v1688 = vand.u32 %v1676, 2147483648
    %v1689 = vor.u32 1.1754944e-38, %v1688
    %v1690 = vsel %vm1687, %v1689, %v1685
    %v1691 = vmul.f32 1.0, %v1690
    %v1692 = vmul.f32 %v1671, %v1527
    %v1693 = vmul.f32 %v1652, %v1672
    %v1694 = vadd.f32 %v1692, %v1693
    %v1695 = vtanh.pop %v1694
    %v1696 = vmul.f32 %v1691, %v1695
    %v1697 = vxor.u32 %v1696, 2147483648
    %v1698 = vmul.f32 %v1697, 1.442695
    %v1699 = vpow.pop %v1698
    %v1700 = vadd.f32 %v1699, 1.0
    %v1701 = vrcp.pop %v1700
    %v1702 = vmul.f32 %v1700, %v1701
    %v1703 = vsub.f32 1.0, %v1702
    %v1704 = vmul.f32 %v1701, %v1703
    %v1705 = vadd.f32 %v1701, %v1704
    %vm1706 = vweird.f32 %v1700
    %vm1707 = vweird.f32 %v1701
    %vm1708 = vmor %vm1706, %vm1707
    %v1709 = vsel %vm1708, %v1701, %v1705
    %v1710 = vand.u32 2147483647, %v1700
    %vm1711 = vcmp.eq.f32.partialorder %v1710, 8.507059e+37
    %v1712 = vand.u32 %v1700, 2147483648
    %v1713 = vor.u32 1.1754944e-38, %v1712
    %v1714 = vsel %vm1711, %v1713, %v1709
    %v1715 = vmul.f32 1.0, %v1714
    %1716 = vst [vmem:[#allocation2 + $0x7] sm:$0x1] %v1715
    %v1717 = vld [vmem:[#allocation8] sm:$0xff]
    %v1718 = vld [vmem:[#allocation8 + $0x8] sm:$0xff]
    %v1719 = vld [vmem:[#allocation8 + $0x10] sm:$0xff]
    %v1720 = vld [vmem:[#allocation8 + $0x18] sm:$0xff]
    %v1721 = vld [vmem:[#allocation8 + $0x20] sm:$0xff]
    %v1722 = vld [vmem:[#allocation8 + $0x28] sm:$0xff]
    %v1723 = vld [vmem:[#allocation8 + $0x30] sm:$0xff]
    %v1724 = vld [vmem:[#allocation8 + $0x38] sm:$0xff]
    %v1725 = vld [vmem:[#allocation8 + $0x40] sm:$0xff]
    %v1726 = vld [vmem:[#allocation8 + $0x48] sm:$0xff]
    %v1727 = vld [vmem:[#allocation8 + $0x50] sm:$0xff]
    %v1728 = vld [vmem:[#allocation8 + $0x58] sm:$0xff]
    %v1729 = vld [vmem:[#allocation8 + $0x60] sm:$0xff]
    %v1730 = vld [vmem:[#allocation8 + $0x68] sm:$0xff]
    %v1731 = vld [vmem:[#allocation8 + $0x70] sm:$0xff]
    %v1732 = vld [vmem:[#allocation8 + $0x78] sm:$0xff]
    %v1733 = vld [vmem:[#allocation8 + $0x80] sm:$0xff]
    %v1734 = vld [vmem:[#allocation8 + $0x88] sm:$0xff]
    %v1735 = vld [vmem:[#allocation8 + $0x90] sm:$0xff]
    %v1736 = vld [vmem:[#allocation8 + $0x98] sm:$0xff]
    %v1737 = vld [vmem:[#allocation8 + $0xa0] sm:$0xff]
    %v1738 = vld [vmem:[#allocation8 + $0xa8] sm:$0xff]
    %v1739 = vld [vmem:[#allocation8 + $0xb0] sm:$0xff]
    %v1740 = vld [vmem:[#allocation8 + $0xb8] sm:$0xff]
    %v1741 = vld [vmem:[#allocation8 + $0xc0] sm:$0xff]
    %v1742 = vld [vmem:[#allocation8 + $0xc8] sm:$0xff]
    %v1743 = vld [vmem:[#allocation8 + $0xd0] sm:$0xff]
    %v1744 = vld [vmem:[#allocation8 + $0xd8] sm:$0xff]
    %v1745 = vld [vmem:[#allocation8 + $0xe0] sm:$0xff]
    %v1746 = vld [vmem:[#allocation8 + $0xe8] sm:$0xff]
    %v1747 = vld [vmem:[#allocation8 + $0xf0] sm:$0xff]
    %v1748 = vld [vmem:[#allocation8 + $0xf8] sm:$0xff]
    %v1749 = vld [vmem:[#allocation8 + $0x100] sm:$0xff]
    %v1750 = vld [vmem:[#allocation8 + $0x108] sm:$0xff]
    %v1751 = vld [vmem:[#allocation8 + $0x110] sm:$0xff]
    %v1752 = vld [vmem:[#allocation8 + $0x118] sm:$0xff]
    %v1753 = vld [vmem:[#allocation8 + $0x120] sm:$0xff]
    %v1754 = vld [vmem:[#allocation8 + $0x128] sm:$0xff]
    %v1755 = vld [vmem:[#allocation8 + $0x130] sm:$0xff]
    %v1756 = vld [vmem:[#allocation8 + $0x138] sm:$0xff]
    %v1757 = vld [vmem:[#allocation8 + $0x140] sm:$0xff]
    %v1758 = vld [vmem:[#allocation8 + $0x148] sm:$0xff]
    %v1759 = vld [vmem:[#allocation8 + $0x150] sm:$0xff]
    %v1760 = vld [vmem:[#allocation8 + $0x158] sm:$0xff]
    %v1761 = vld [vmem:[#allocation8 + $0x160] sm:$0xff]
    %v1762 = vld [vmem:[#allocation8 + $0x168] sm:$0xff]
    %v1763 = vld [vmem:[#allocation8 + $0x170] sm:$0xff]
    %v1764 = vld [vmem:[#allocation8 + $0x178] sm:$0xff]
    %v1765 = vld [vmem:[#allocation8 + $0x180] sm:$0xff]
    %v1766 = vld [vmem:[#allocation8 + $0x188] sm:$0xff]
    %v1767 = vld [vmem:[#allocation8 + $0x190] sm:$0xff]
    %v1768 = vld [vmem:[#allocation8 + $0x198] sm:$0xff]
    %v1769 = vld [vmem:[#allocation8 + $0x1a0] sm:$0xff]
    %v1770 = vld [vmem:[#allocation8 + $0x1a8] sm:$0xff]
    %v1771 = vld [vmem:[#allocation8 + $0x1b0] sm:$0xff]
    %v1772 = vld [vmem:[#allocation8 + $0x1b8] sm:$0xff]
    %v1773 = vld [vmem:[#allocation8 + $0x1c0] sm:$0xff]
    %v1774 = vld [vmem:[#allocation8 + $0x1c8] sm:$0xff]
    %v1775 = vld [vmem:[#allocation8 + $0x1d0] sm:$0xff]
    %v1776 = vld [vmem:[#allocation8 + $0x1d8] sm:$0xff]
    %v1777 = vld [vmem:[#allocation8 + $0x1e0] sm:$0xff]
    %v1778 = vld [vmem:[#allocation8 + $0x1e8] sm:$0xff]
    %v1779 = vld [vmem:[#allocation8 + $0x1f0] sm:$0xff]
    %v1780 = vld [vmem:[#allocation8 + $0x1f8] sm:$0xff]
    %v1781 = vld [vmem:[#allocation9] sm:$0xff]
    %v1782 = vld [vmem:[#allocation9 + $0x8] sm:$0xff]
    %v1783 = vld [vmem:[#allocation9 + $0x10] sm:$0xff]
    %v1784 = vld [vmem:[#allocation9 + $0x18] sm:$0xff]
    %v1785 = vld [vmem:[#allocation9 + $0x20] sm:$0xff]
    %v1786 = vld [vmem:[#allocation9 + $0x28] sm:$0xff]
    %v1787 = vld [vmem:[#allocation9 + $0x30] sm:$0xff]
    %v1788 = vld [vmem:[#allocation9 + $0x38] sm:$0xff]
    %v1789 = vld [vmem:[#allocation9 + $0x40] sm:$0xff]
    %v1790 = vld [vmem:[#allocation9 + $0x48] sm:$0xff]
    %v1791 = vld [vmem:[#allocation9 + $0x50] sm:$0xff]
    %v1792 = vld [vmem:[#allocation9 + $0x58] sm:$0xff]
    %v1793 = vld [vmem:[#allocation9 + $0x60] sm:$0xff]
    %v1794 = vld [vmem:[#allocation9 + $0x68] sm:$0xff]
    %v1795 = vld [vmem:[#allocation9 + $0x70] sm:$0xff]
    %v1796 = vld [vmem:[#allocation9 + $0x78] sm:$0xff]
    %v1797 = vld [vmem:[#allocation9 + $0x80] sm:$0xff]
    %v1798 = vld [vmem:[#allocation9 + $0x88] sm:$0xff]
    %v1799 = vld [vmem:[#allocation9 + $0x90] sm:$0xff]
    %v1800 = vld [vmem:[#allocation9 + $0x98] sm:$0xff]
    %v1801 = vld [vmem:[#allocation9 + $0xa0] sm:$0xff]
    %v1802 = vld [vmem:[#allocation9 + $0xa8] sm:$0xff]
    %v1803 = vld [vmem:[#allocation9 + $0xb0] sm:$0xff]
    %v1804 = vld [vmem:[#allocation9 + $0xb8] sm:$0xff]
    %v1805 = vld [vmem:[#allocation9 + $0xc0] sm:$0xff]
    %v1806 = vld [vmem:[#allocation9 + $0xc8] sm:$0xff]
    %v1807 = vld [vmem:[#allocation9 + $0xd0] sm:$0xff]
    %v1808 = vld [vmem:[#allocation9 + $0xd8] sm:$0xff]
    %v1809 = vld [vmem:[#allocation9 + $0xe0] sm:$0xff]
    %v1810 = vld [vmem:[#allocation9 + $0xe8] sm:$0xff]
    %v1811 = vld [vmem:[#allocation9 + $0xf0] sm:$0xff]
    %v1812 = vld [vmem:[#allocation9 + $0xf8] sm:$0xff]
    %v1813 = vld [vmem:[#allocation9 + $0x100] sm:$0xff]
    %v1814 = vld [vmem:[#allocation9 + $0x108] sm:$0xff]
    %v1815 = vld [vmem:[#allocation9 + $0x110] sm:$0xff]
    %v1816 = vld [vmem:[#allocation9 + $0x118] sm:$0xff]
    %v1817 = vld [vmem:[#allocation9 + $0x120] sm:$0xff]
    %v1818 = vld [vmem:[#allocation9 + $0x128] sm:$0xff]
    %v1819 = vld [vmem:[#allocation9 + $0x130] sm:$0xff]
    %v1820 = vld [vmem:[#allocation9 + $0x138] sm:$0xff]
    %v1821 = vld [vmem:[#allocation9 + $0x140] sm:$0xff]
    %v1822 = vld [vmem:[#allocation9 + $0x148] sm:$0xff]
    %v1823 = vld [vmem:[#allocation9 + $0x150] sm:$0xff]
    %v1824 = vld [vmem:[#allocation9 + $0x158] sm:$0xff]
    %v1825 = vld [vmem:[#allocation9 + $0x160] sm:$0xff]
    %v1826 = vld [vmem:[#allocation9 + $0x168] sm:$0xff]
    %v1827 = vld [vmem:[#allocation9 + $0x170] sm:$0xff]
    %v1828 = vld [vmem:[#allocation9 + $0x178] sm:$0xff]
    %v1829 = vld [vmem:[#allocation9 + $0x180] sm:$0xff]
    %v1830 = vld [vmem:[#allocation9 + $0x188] sm:$0xff]
    %v1831 = vld [vmem:[#allocation9 + $0x190] sm:$0xff]
    %v1832 = vld [vmem:[#allocation9 + $0x198] sm:$0xff]
    %v1833 = vld [vmem:[#allocation9 + $0x1a0] sm:$0xff]
    %v1834 = vld [vmem:[#allocation9 + $0x1a8] sm:$0xff]
    %v1835 = vld [vmem:[#allocation9 + $0x1b0] sm:$0xff]
    %v1836 = vld [vmem:[#allocation9 + $0x1b8] sm:$0xff]
    %v1837 = vld [vmem:[#allocation9 + $0x1c0] sm:$0xff]
    %v1838 = vld [vmem:[#allocation9 + $0x1c8] sm:$0xff]
    %v1839 = vld [vmem:[#allocation9 + $0x1d0] sm:$0xff]
    %v1840 = vld [vmem:[#allocation9 + $0x1d8] sm:$0xff]
    %v1841 = vld [vmem:[#allocation9 + $0x1e0] sm:$0xff]
    %v1842 = vld [vmem:[#allocation9 + $0x1e8] sm:$0xff]
    %v1843 = vld [vmem:[#allocation9 + $0x1f0] sm:$0xff]
    %v1844 = vld [vmem:[#allocation9 + $0x1f8] sm:$0xff]
    %v1845 = vld [vmem:[#allocation11] sm:$0xf]
    %v1846 = vld [vmem:[#allocation2] sm:$0xff]
    %v1848 = vperm.slane %v1845, 0
    %v1849 = vperm.slane %v1845, 1
    %v1850 = vperm.slane %v1845, 2
    %v1851 = vperm.slane %v1845, 3
    %1856 = vmatpush.msra.mxu0 %v1777
    %1857 = vmatpush.msra.mxu0 %v1773
    %1858 = vmatpush.msra.mxu0 %v1769
    %1859 = vmatpush.msra.mxu0 %v1765
    %1860 = vmatpush.msra.mxu0 %v1761
    %1861 = vmatpush.msra.mxu0 %v1757
    %1862 = vmatpush.msra.mxu0 %v1753
    %1863 = vmatpush.msra.mxu0 %v1749
    %1864 = vmatpush.msra.mxu0 %v1745
    %1865 = vmatpush.msra.mxu0 %v1741
    %1866 = vmatpush.msra.mxu0 %v1737
    %1867 = vmatpush.msra.mxu0 %v1733
    %1868 = vmatpush.msra.mxu0 %v1729
    %1869 = vmatpush.msra.mxu0 %v1725
    %1870 = vmatpush.msra.mxu0 %v1721
    %1871 = vmatpush.msra.mxu0 %v1717
    %1872 = vmatmul.f32.gmra.mxu0 %v1846
    %v1873 = vpop.f32.mrf.mxu0
    %v1874 = vadd.f32 %v1848, %v1873
    %1875 = vdwg.mxu0
    %1876 = vmatpush.msra.mxu0 %v1778
    %1877 = vmatpush.msra.mxu0 %v1774
    %1878 = vmatpush.msra.mxu0 %v1770
    %1879 = vmatpush.msra.mxu0 %v1766
    %1880 = vmatpush.msra.mxu0 %v1762
    %1881 = vmatpush.msra.mxu0 %v1758
    %1882 = vmatpush.msra.mxu0 %v1754
    %1883 = vmatpush.msra.mxu0 %v1750
    %1884 = vmatpush.msra.mxu0 %v1746
    %1885 = vmatpush.msra.mxu0 %v1742
    %1886 = vmatpush.msra.mxu0 %v1738
    %1887 = vmatpush.msra.mxu0 %v1734
    %1888 = vmatpush.msra.mxu0 %v1730
    %1889 = vmatpush.msra.mxu0 %v1726
    %1890 = vmatpush.msra.mxu0 %v1722
    %1891 = vmatpush.msra.mxu0 %v1718
    %1892 = vmatmul.f32.gmra.mxu0 %v1846
    %v1893 = vpop.f32.mrf.mxu0
    %v1894 = vadd.f32 %v1849, %v1893
    %1895 = vdwg.mxu0
    %1896 = vmatpush.msra.mxu0 %v1779
    %1897 = vmatpush.msra.mxu0 %v1775
    %1898 = vmatpush.msra.mxu0 %v1771
    %1899 = vmatpush.msra.mxu0 %v1767
    %1900 = vmatpush.msra.mxu0 %v1763
    %1901 = vmatpush.msra.mxu0 %v1759
    %1902 = vmatpush.msra.mxu0 %v1755
    %1903 = vmatpush.msra.mxu0 %v1751
    %1904 = vmatpush.msra.mxu0 %v1747
    %1905 = vmatpush.msra.mxu0 %v1743
    %1906 = vmatpush.msra.mxu0 %v1739
    %1907 = vmatpush.msra.mxu0 %v1735
    %1908 = vmatpush.msra.mxu0 %v1731
    %1909 = vmatpush.msra.mxu0 %v1727
    %1910 = vmatpush.msra.mxu0 %v1723
    %1911 = vmatpush.msra.mxu0 %v1719
    %1912 = vmatmul.f32.gmra.mxu0 %v1846
    %v1913 = vpop.f32.mrf.mxu0
    %v1914 = vadd.f32 %v1850, %v1913
    %1915 = vdwg.mxu0
    %1916 = vmatpush.msra.mxu0 %v1780
    %1917 = vmatpush.msra.mxu0 %v1776
    %1918 = vmatpush.msra.mxu0 %v1772
    %1919 = vmatpush.msra.mxu0 %v1768
    %1920 = vmatpush.msra.mxu0 %v1764
    %1921 = vmatpush.msra.mxu0 %v1760
    %1922 = vmatpush.msra.mxu0 %v1756
    %1923 = vmatpush.msra.mxu0 %v1752
    %1924 = vmatpush.msra.mxu0 %v1748
    %1925 = vmatpush.msra.mxu0 %v1744
    %1926 = vmatpush.msra.mxu0 %v1740
    %1927 = vmatpush.msra.mxu0 %v1736
    %1928 = vmatpush.msra.mxu0 %v1732
    %1929 = vmatpush.msra.mxu0 %v1728
    %1930 = vmatpush.msra.mxu0 %v1724
    %1931 = vmatpush.msra.mxu0 %v1720
    %1932 = vmatmul.f32.gmra.mxu0 %v1846
    %v1933 = vpop.f32.mrf.mxu0
    %v1934 = vadd.f32 %v1851, %v1933
    %1935 = vdwg.mxu0
    %1936 = vmatpush.msra.mxu0 %v1841
    %1937 = vmatpush.msra.mxu0 %v1837
    %1938 = vmatpush.msra.mxu0 %v1833
    %1939 = vmatpush.msra.mxu0 %v1829
    %1940 = vmatpush.msra.mxu0 %v1825
    %1941 = vmatpush.msra.mxu0 %v1821
    %1942 = vmatpush.msra.mxu0 %v1817
    %1943 = vmatpush.msra.mxu0 %v1813
    %1944 = vmatpush.msra.mxu0 %v1809
    %1945 = vmatpush.msra.mxu0 %v1805
    %1946 = vmatpush.msra.mxu0 %v1801
    %1947 = vmatpush.msra.mxu0 %v1797
    %1948 = vmatpush.msra.mxu0 %v1793
    %1949 = vmatpush.msra.mxu0 %v1789
    %1950 = vmatpush.msra.mxu0 %v1785
    %1951 = vmatpush.msra.mxu0 %v1781
    %1952 = vmatmul.f32.gmra.mxu0 0.0
    %v1953 = vpop.f32.mrf.mxu0
    %v1954 = vadd.f32 0.0, %v1953
    %1955 = vdwg.mxu0
    %1956 = vmatpush.msra.mxu0 %v1842
    %1957 = vmatpush.msra.mxu0 %v1838
    %1958 = vmatpush.msra.mxu0 %v1834
    %1959 = vmatpush.msra.mxu0 %v1830
    %1960 = vmatpush.msra.mxu0 %v1826
    %1961 = vmatpush.msra.mxu0 %v1822
    %1962 = vmatpush.msra.mxu0 %v1818
    %1963 = vmatpush.msra.mxu0 %v1814
    %1964 = vmatpush.msra.mxu0 %v1810
    %1965 = vmatpush.msra.mxu0 %v1806
    %1966 = vmatpush.msra.mxu0 %v1802
    %1967 = vmatpush.msra.mxu0 %v1798
    %1968 = vmatpush.msra.mxu0 %v1794
    %1969 = vmatpush.msra.mxu0 %v1790
    %1970 = vmatpush.msra.mxu0 %v1786
    %1971 = vmatpush.msra.mxu0 %v1782
    %1972 = vmatmul.f32.gmra.mxu0 0.0
    %v1973 = vpop.f32.mrf.mxu0
    %v1974 = vadd.f32 0.0, %v1973
    %1975 = vdwg.mxu0
    %1976 = vmatpush.msra.mxu0 %v1843
    %1977 = vmatpush.msra.mxu0 %v1839
    %1978 = vmatpush.msra.mxu0 %v1835
    %1979 = vmatpush.msra.mxu0 %v1831
    %1980 = vmatpush.msra.mxu0 %v1827
    %1981 = vmatpush.msra.mxu0 %v1823
    %1982 = vmatpush.msra.mxu0 %v1819
    %1983 = vmatpush.msra.mxu0 %v1815
    %1984 = vmatpush.msra.mxu0 %v1811
    %1985 = vmatpush.msra.mxu0 %v1807
    %1986 = vmatpush.msra.mxu0 %v1803
    %1987 = vmatpush.msra.mxu0 %v1799
    %1988 = vmatpush.msra.mxu0 %v1795
    %1989 = vmatpush.msra.mxu0 %v1791
    %1990 = vmatpush.msra.mxu0 %v1787
    %1991 = vmatpush.msra.mxu0 %v1783
    %1992 = vmatmul.f32.gmra.mxu0 0.0
    %v1993 = vpop.f32.mrf.mxu0
    %v1994 = vadd.f32 0.0, %v1993
    %1995 = vdwg.mxu0
    %1996 = vmatpush.msra.mxu0 %v1844
    %1997 = vmatpush.msra.mxu0 %v1840
    %1998 = vmatpush.msra.mxu0 %v1836
    %1999 = vmatpush.msra.mxu0 %v1832
    %2000 = vmatpush.msra.mxu0 %v1828
    %2001 = vmatpush.msra.mxu0 %v1824
    %2002 = vmatpush.msra.mxu0 %v1820
    %2003 = vmatpush.msra.mxu0 %v1816
    %2004 = vmatpush.msra.mxu0 %v1812
    %2005 = vmatpush.msra.mxu0 %v1808
    %2006 = vmatpush.msra.mxu0 %v1804
    %2007 = vmatpush.msra.mxu0 %v1800
    %2008 = vmatpush.msra.mxu0 %v1796
    %2009 = vmatpush.msra.mxu0 %v1792
    %2010 = vmatpush.msra.mxu0 %v1788
    %2011 = vmatpush.msra.mxu0 %v1784
    %2012 = vmatmul.f32.gmra.mxu0 0.0
    %v2013 = vpop.f32.mrf.mxu0
    %v2014 = vadd.f32 0.0, %v2013
    %2015 = vdwg.mxu0
    %v2016 = vadd.f32 %v1874, %v1954
    %v2017 = vadd.f32 %v1894, %v1974
    %v2018 = vadd.f32 %v1914, %v1994
    %v2019 = vadd.f32 %v1934, %v2014
    %v2020 = vxor.u32 %v2016, 2147483648
    %v2021 = vmul.f32 %v2020, 1.442695
    %v2022 = vpow.pop %v2021
    %v2023 = vadd.f32 %v2022, 1.0
    %v2024 = vrcp.pop %v2023
    %v2025 = vmul.f32 %v2023, %v2024
    %v2026 = vsub.f32 1.0, %v2025
    %v2027 = vmul.f32 %v2024, %v2026
    %v2028 = vadd.f32 %v2024, %v2027
    %vm2029 = vweird.f32 %v2023
    %vm2030 = vweird.f32 %v2024
    %vm2031 = vmor %vm2029, %vm2030
    %v2032 = vsel %vm2031, %v2024, %v2028
    %v2033 = vand.u32 2147483647, %v2023
    %vm2034 = vcmp.eq.f32.partialorder %v2033, 8.507059e+37
    %v2035 = vand.u32 %v2023, 2147483648
    %v2036 = vor.u32 1.1754944e-38, %v2035
    %v2037 = vsel %vm2034, %v2036, %v2032
    %v2038 = vmul.f32 1.0, %v2037
    %v2039 = vxor.u32 %v2017, 2147483648
    %v2040 = vmul.f32 %v2039, 1.442695
    %v2041 = vpow.pop %v2040
    %v2042 = vadd.f32 %v2041, 1.0
    %v2043 = vrcp.pop %v2042
    %v2044 = vmul.f32 %v2042, %v2043
    %v2045 = vsub.f32 1.0, %v2044
    %v2046 = vmul.f32 %v2043, %v2045
    %v2047 = vadd.f32 %v2043, %v2046
    %vm2048 = vweird.f32 %v2042
    %vm2049 = vweird.f32 %v2043
    %vm2050 = vmor %vm2048, %vm2049
    %v2051 = vsel %vm2050, %v2043, %v2047
    %v2052 = vand.u32 2147483647, %v2042
    %vm2053 = vcmp.eq.f32.partialorder %v2052, 8.507059e+37
    %v2054 = vand.u32 %v2042, 2147483648
    %v2055 = vor.u32 1.1754944e-38, %v2054
    %v2056 = vsel %vm2053, %v2055, %v2051
    %v2057 = vmul.f32 1.0, %v2056
    %v2058 = vtanh.pop %v2018
    %v2059 = vxor.u32 %v2019, 2147483648
    %v2060 = vmul.f32 %v2059, 1.442695
    %v2061 = vpow.pop %v2060
    %v2062 = vadd.f32 %v2061, 1.0
    %v2063 = vrcp.pop %v2062
    %v2064 = vmul.f32 %v2062, %v2063
    %v2065 = vsub.f32 1.0, %v2064
    %v2066 = vmul.f32 %v2063, %v2065
    %v2067 = vadd.f32 %v2063, %v2066
    %vm2068 = vweird.f32 %v2062
    %vm2069 = vweird.f32 %v2063
    %vm2070 = vmor %vm2068, %vm2069
    %v2071 = vsel %vm2070, %v2063, %v2067
    %v2072 = vand.u32 2147483647, %v2062
    %vm2073 = vcmp.eq.f32.partialorder %v2072, 8.507059e+37
    %v2074 = vand.u32 %v2062, 2147483648
    %v2075 = vor.u32 1.1754944e-38, %v2074
    %v2076 = vsel %vm2073, %v2075, %v2071
    %v2077 = vmul.f32 1.0, %v2076
    %v2078 = vmul.f32 %v2057, 0.0
    %v2079 = vmul.f32 %v2038, %v2058
    %v2080 = vadd.f32 %v2078, %v2079
    %v2081 = vtanh.pop %v2080
    %v2082 = vmul.f32 %v2077, %v2081
    %v2083 = vxor.u32 %v2082, 2147483648
    %v2084 = vmul.f32 %v2083, 1.442695
    %v2085 = vpow.pop %v2084
    %v2086 = vadd.f32 %v2085, 1.0
    %v2087 = vrcp.pop %v2086
    %v2088 = vmul.f32 %v2086, %v2087
    %v2089 = vsub.f32 1.0, %v2088
    %v2090 = vmul.f32 %v2087, %v2089
    %v2091 = vadd.f32 %v2087, %v2090
    %vm2092 = vweird.f32 %v2086
    %vm2093 = vweird.f32 %v2087
    %vm2094 = vmor %vm2092, %vm2093
    %v2095 = vsel %vm2094, %v2087, %v2091
    %v2096 = vand.u32 2147483647, %v2086
    %vm2097 = vcmp.eq.f32.partialorder %v2096, 8.507059e+37
    %v2098 = vand.u32 %v2086, 2147483648
    %v2099 = vor.u32 1.1754944e-38, %v2098
    %v2100 = vsel %vm2097, %v2099, %v2095
    %v2101 = vmul.f32 1.0, %v2100
    %2102 = vst [vmem:[#allocation2] sm:$0x1] %v2101
    %2103 = vmatpush.msra.mxu0 %v1841
    %2104 = vmatpush.msra.mxu0 %v1837
    %2105 = vmatpush.msra.mxu0 %v1833
    %2106 = vmatpush.msra.mxu0 %v1829
    %2107 = vmatpush.msra.mxu0 %v1825
    %2108 = vmatpush.msra.mxu0 %v1821
    %2109 = vmatpush.msra.mxu0 %v1817
    %2110 = vmatpush.msra.mxu0 %v1813
    %2111 = vmatpush.msra.mxu0 %v1809
    %2112 = vmatpush.msra.mxu0 %v1805
    %2113 = vmatpush.msra.mxu0 %v1801
    %2114 = vmatpush.msra.mxu0 %v1797
    %2115 = vmatpush.msra.mxu0 %v1793
    %2116 = vmatpush.msra.mxu0 %v1789
    %2117 = vmatpush.msra.mxu0 %v1785
    %2118 = vmatpush.msra.mxu0 %v1781
    %2119 = vmatmul.f32.gmra.mxu0 %v2082
    %v2120 = vpop.f32.mrf.mxu0
    %v2121 = vadd.f32 0.0, %v2120
    %2122 = vdwg.mxu0
    %2123 = vmatpush.msra.mxu0 %v1842
    %2124 = vmatpush.msra.mxu0 %v1838
    %2125 = vmatpush.msra.mxu0 %v1834
    %2126 = vmatpush.msra.mxu0 %v1830
    %2127 = vmatpush.msra.mxu0 %v1826
    %2128 = vmatpush.msra.mxu0 %v1822
    %2129 = vmatpush.msra.mxu0 %v1818
    %2130 = vmatpush.msra.mxu0 %v1814
    %2131 = vmatpush.msra.mxu0 %v1810
    %2132 = vmatpush.msra.mxu0 %v1806
    %2133 = vmatpush.msra.mxu0 %v1802
    %2134 = vmatpush.msra.mxu0 %v1798
    %2135 = vmatpush.msra.mxu0 %v1794
    %2136 = vmatpush.msra.mxu0 %v1790
    %2137 = vmatpush.msra.mxu0 %v1786
    %2138 = vmatpush.msra.mxu0 %v1782
    %2139 = vmatmul.f32.gmra.mxu0 %v2082
    %v2140 = vpop.f32.mrf.mxu0
    %v2141 = vadd.f32 0.0, %v2140
    %2142 = vdwg.mxu0
    %2143 = vmatpush.msra.mxu0 %v1843
    %2144 = vmatpush.msra.mxu0 %v1839
    %2145 = vmatpush.msra.mxu0 %v1835
    %2146 = vmatpush.msra.mxu0 %v1831
    %2147 = vmatpush.msra.mxu0 %v1827
    %2148 = vmatpush.msra.mxu0 %v1823
    %2149 = vmatpush.msra.mxu0 %v1819
    %2150 = vmatpush.msra.mxu0 %v1815
    %2151 = vmatpush.msra.mxu0 %v1811
    %2152 = vmatpush.msra.mxu0 %v1807
    %2153 = vmatpush.msra.mxu0 %v1803
    %2154 = vmatpush.msra.mxu0 %v1799
    %2155 = vmatpush.msra.mxu0 %v1795
    %2156 = vmatpush.msra.mxu0 %v1791
    %2157 = vmatpush.msra.mxu0 %v1787
    %2158 = vmatpush.msra.mxu0 %v1783
    %2159 = vmatmul.f32.gmra.mxu0 %v2082
    %v2160 = vpop.f32.mrf.mxu0
    %v2161 = vadd.f32 0.0, %v2160
    %2162 = vdwg.mxu0
    %2163 = vmatpush.msra.mxu0 %v1844
    %2164 = vmatpush.msra.mxu0 %v1840
    %2165 = vmatpush.msra.mxu0 %v1836
    %2166 = vmatpush.msra.mxu0 %v1832
    %2167 = vmatpush.msra.mxu0 %v1828
    %2168 = vmatpush.msra.mxu0 %v1824
    %2169 = vmatpush.msra.mxu0 %v1820
    %2170 = vmatpush.msra.mxu0 %v1816
    %2171 = vmatpush.msra.mxu0 %v1812
    %2172 = vmatpush.msra.mxu0 %v1808
    %2173 = vmatpush.msra.mxu0 %v1804
    %2174 = vmatpush.msra.mxu0 %v1800
    %2175 = vmatpush.msra.mxu0 %v1796
    %2176 = vmatpush.msra.mxu0 %v1792
    %2177 = vmatpush.msra.mxu0 %v1788
    %2178 = vmatpush.msra.mxu0 %v1784
    %2179 = vmatmul.f32.gmra.mxu0 %v2082
    %v2180 = vpop.f32.mrf.mxu0
    %v2181 = vadd.f32 0.0, %v2180
    %2182 = vdwg.mxu0
    %v2187 = vrot.slane %v2121, 7
    %v2188 = vrot.slane %v2141, 7
    %v2189 = vrot.slane %v2161, 7
    %v2190 = vrot.slane %v2181, 7
    %v2195 = vadd.f32 %v1874, %v2187
    %v2196 = vadd.f32 %v1894, %v2188
    %v2197 = vadd.f32 %v1914, %v2189
    %v2198 = vadd.f32 %v1934, %v2190
    %v2199 = vxor.u32 %v2195, 2147483648
    %v2200 = vmul.f32 %v2199, 1.442695
    %v2201 = vpow.pop %v2200
    %v2202 = vadd.f32 %v2201, 1.0
    %v2203 = vrcp.pop %v2202
    %v2204 = vmul.f32 %v2202, %v2203
    %v2205 = vsub.f32 1.0, %v2204
    %v2206 = vmul.f32 %v2203, %v2205
    %v2207 = vadd.f32 %v2203, %v2206
    %vm2208 = vweird.f32 %v2202
    %vm2209 = vweird.f32 %v2203
    %vm2210 = vmor %vm2208, %vm2209
    %v2211 = vsel %vm2210, %v2203, %v2207
    %v2212 = vand.u32 2147483647, %v2202
    %vm2213 = vcmp.eq.f32.partialorder %v2212, 8.507059e+37
    %v2214 = vand.u32 %v2202, 2147483648
    %v2215 = vor.u32 1.1754944e-38, %v2214
    %v2216 = vsel %vm2213, %v2215, %v2211
    %v2217 = vmul.f32 1.0, %v2216
    %v2218 = vxor.u32 %v2196, 2147483648
    %v2219 = vmul.f32 %v2218, 1.442695
    %v2220 = vpow.pop %v2219
    %v2221 = vadd.f32 %v2220, 1.0
    %v2222 = vrcp.pop %v2221
    %v2223 = vmul.f32 %v2221, %v2222
    %v2224 = vsub.f32 1.0, %v2223
    %v2225 = vmul.f32 %v2222, %v2224
    %v2226 = vadd.f32 %v2222, %v2225
    %vm2227 = vweird.f32 %v2221
    %vm2228 = vweird.f32 %v2222
    %vm2229 = vmor %vm2227, %vm2228
    %v2230 = vsel %vm2229, %v2222, %v2226
    %v2231 = vand.u32 2147483647, %v2221
    %vm2232 = vcmp.eq.f32.partialorder %v2231, 8.507059e+37
    %v2233 = vand.u32 %v2221, 2147483648
    %v2234 = vor.u32 1.1754944e-38, %v2233
    %v2235 = vsel %vm2232, %v2234, %v2230
    %v2236 = vmul.f32 1.0, %v2235
    %v2237 = vtanh.pop %v2197
    %v2238 = vxor.u32 %v2198, 2147483648
    %v2239 = vmul.f32 %v2238, 1.442695
    %v2240 = vpow.pop %v2239
    %v2241 = vadd.f32 %v2240, 1.0
    %v2242 = vrcp.pop %v2241
    %v2243 = vmul.f32 %v2241, %v2242
    %v2244 = vsub.f32 1.0, %v2243
    %v2245 = vmul.f32 %v2242, %v2244
    %v2246 = vadd.f32 %v2242, %v2245
    %vm2247 = vweird.f32 %v2241
    %vm2248 = vweird.f32 %v2242
    %vm2249 = vmor %vm2247, %vm2248
    %v2250 = vsel %vm2249, %v2242, %v2246
    %v2251 = vand.u32 2147483647, %v2241
    %vm2252 = vcmp.eq.f32.partialorder %v2251, 8.507059e+37
    %v2253 = vand.u32 %v2241, 2147483648
    %v2254 = vor.u32 1.1754944e-38, %v2253
    %v2255 = vsel %vm2252, %v2254, %v2250
    %v2256 = vmul.f32 1.0, %v2255
    %v2258 = vrot.slane %v2080, 7
    %v2260 = vmul.f32 %v2236, %v2258
    %v2261 = vmul.f32 %v2217, %v2237
    %v2262 = vadd.f32 %v2260, %v2261
    %v2263 = vtanh.pop %v2262
    %v2264 = vmul.f32 %v2256, %v2263
    %v2265 = vxor.u32 %v2264, 2147483648
    %v2266 = vmul.f32 %v2265, 1.442695
    %v2267 = vpow.pop %v2266
    %v2268 = vadd.f32 %v2267, 1.0
    %v2269 = vrcp.pop %v2268
    %v2270 = vmul.f32 %v2268, %v2269
    %v2271 = vsub.f32 1.0, %v2270
    %v2272 = vmul.f32 %v2269, %v2271
    %v2273 = vadd.f32 %v2269, %v2272
    %vm2274 = vweird.f32 %v2268
    %vm2275 = vweird.f32 %v2269
    %vm2276 = vmor %vm2274, %vm2275
    %v2277 = vsel %vm2276, %v2269, %v2273
    %v2278 = vand.u32 2147483647, %v2268
    %vm2279 = vcmp.eq.f32.partialorder %v2278, 8.507059e+37
    %v2280 = vand.u32 %v2268, 2147483648
    %v2281 = vor.u32 1.1754944e-38, %v2280
    %v2282 = vsel %vm2279, %v2281, %v2277
    %v2283 = vmul.f32 1.0, %v2282
    %2284 = vst [vmem:[#allocation2] sm:$0x2] %v2283
    %v2286 = vrot.slane %v2264, 1
    %2288 = vmatpush.msra.mxu0 %v1841
    %2289 = vmatpush.msra.mxu0 %v1837
    %2290 = vmatpush.msra.mxu0 %v1833
    %2291 = vmatpush.msra.mxu0 %v1829
    %2292 = vmatpush.msra.mxu0 %v1825
    %2293 = vmatpush.msra.mxu0 %v1821
    %2294 = vmatpush.msra.mxu0 %v1817
    %2295 = vmatpush.msra.mxu0 %v1813
    %2296 = vmatpush.msra.mxu0 %v1809
    %2297 = vmatpush.msra.mxu0 %v1805
    %2298 = vmatpush.msra.mxu0 %v1801
    %2299 = vmatpush.msra.mxu0 %v1797
    %2300 = vmatpush.msra.mxu0 %v1793
    %2301 = vmatpush.msra.mxu0 %v1789
    %2302 = vmatpush.msra.mxu0 %v1785
    %2303 = vmatpush.msra.mxu0 %v1781
    %2304 = vmatmul.f32.gmra.mxu0 %v2286
    %v2305 = vpop.f32.mrf.mxu0
    %v2306 = vadd.f32 0.0, %v2305
    %2307 = vdwg.mxu0
    %2308 = vmatpush.msra.mxu0 %v1842
    %2309 = vmatpush.msra.mxu0 %v1838
    %2310 = vmatpush.msra.mxu0 %v1834
    %2311 = vmatpush.msra.mxu0 %v1830
    %2312 = vmatpush.msra.mxu0 %v1826
    %2313 = vmatpush.msra.mxu0 %v1822
    %2314 = vmatpush.msra.mxu0 %v1818
    %2315 = vmatpush.msra.mxu0 %v1814
    %2316 = vmatpush.msra.mxu0 %v1810
    %2317 = vmatpush.msra.mxu0 %v1806
    %2318 = vmatpush.msra.mxu0 %v1802
    %2319 = vmatpush.msra.mxu0 %v1798
    %2320 = vmatpush.msra.mxu0 %v1794
    %2321 = vmatpush.msra.mxu0 %v1790
    %2322 = vmatpush.msra.mxu0 %v1786
    %2323 = vmatpush.msra.mxu0 %v1782
    %2324 = vmatmul.f32.gmra.mxu0 %v2286
    %v2325 = vpop.f32.mrf.mxu0
    %v2326 = vadd.f32 0.0, %v2325
    %2327 = vdwg.mxu0
    %2328 = vmatpush.msra.mxu0 %v1843
    %2329 = vmatpush.msra.mxu0 %v1839
    %2330 = vmatpush.msra.mxu0 %v1835
    %2331 = vmatpush.msra.mxu0 %v1831
    %2332 = vmatpush.msra.mxu0 %v1827
    %2333 = vmatpush.msra.mxu0 %v1823
    %2334 = vmatpush.msra.mxu0 %v1819
    %2335 = vmatpush.msra.mxu0 %v1815
    %2336 = vmatpush.msra.mxu0 %v1811
    %2337 = vmatpush.msra.mxu0 %v1807
    %2338 = vmatpush.msra.mxu0 %v1803
    %2339 = vmatpush.msra.mxu0 %v1799
    %2340 = vmatpush.msra.mxu0 %v1795
    %2341 = vmatpush.msra.mxu0 %v1791
    %2342 = vmatpush.msra.mxu0 %v1787
    %2343 = vmatpush.msra.mxu0 %v1783
    %2344 = vmatmul.f32.gmra.mxu0 %v2286
    %v2345 = vpop.f32.mrf.mxu0
    %v2346 = vadd.f32 0.0, %v2345
    %2347 = vdwg.mxu0
    %2348 = vmatpush.msra.mxu0 %v1844
    %2349 = vmatpush.msra.mxu0 %v1840
    %2350 = vmatpush.msra.mxu0 %v1836
    %2351 = vmatpush.msra.mxu0 %v1832
    %2352 = vmatpush.msra.mxu0 %v1828
    %2353 = vmatpush.msra.mxu0 %v1824
    %2354 = vmatpush.msra.mxu0 %v1820
    %2355 = vmatpush.msra.mxu0 %v1816
    %2356 = vmatpush.msra.mxu0 %v1812
    %2357 = vmatpush.msra.mxu0 %v1808
    %2358 = vmatpush.msra.mxu0 %v1804
    %2359 = vmatpush.msra.mxu0 %v1800
    %2360 = vmatpush.msra.mxu0 %v1796
    %2361 = vmatpush.msra.mxu0 %v1792
    %2362 = vmatpush.msra.mxu0 %v1788
    %2363 = vmatpush.msra.mxu0 %v1784
    %2364 = vmatmul.f32.gmra.mxu0 %v2286
    %v2365 = vpop.f32.mrf.mxu0
    %v2366 = vadd.f32 0.0, %v2365
    %2367 = vdwg.mxu0
    %v2372 = vrot.slane %v2306, 6
    %v2373 = vrot.slane %v2326, 6
    %v2374 = vrot.slane %v2346, 6
    %v2375 = vrot.slane %v2366, 6
    %v2380 = vadd.f32 %v1874, %v2372
    %v2381 = vadd.f32 %v1894, %v2373
    %v2382 = vadd.f32 %v1914, %v2374
    %v2383 = vadd.f32 %v1934, %v2375
    %v2384 = vxor.u32 %v2380, 2147483648
    %v2385 = vmul.f32 %v2384, 1.442695
    %v2386 = vpow.pop %v2385
    %v2387 = vadd.f32 %v2386, 1.0
    %v2388 = vrcp.pop %v2387
    %v2389 = vmul.f32 %v2387, %v2388
    %v2390 = vsub.f32 1.0, %v2389
    %v2391 = vmul.f32 %v2388, %v2390
    %v2392 = vadd.f32 %v2388, %v2391
    %vm2393 = vweird.f32 %v2387
    %vm2394 = vweird.f32 %v2388
    %vm2395 = vmor %vm2393, %vm2394
    %v2396 = vsel %vm2395, %v2388, %v2392
    %v2397 = vand.u32 2147483647, %v2387
    %vm2398 = vcmp.eq.f32.partialorder %v2397, 8.507059e+37
    %v2399 = vand.u32 %v2387, 2147483648
    %v2400 = vor.u32 1.1754944e-38, %v2399
    %v2401 = vsel %vm2398, %v2400, %v2396
    %v2402 = vmul.f32 1.0, %v2401
    %v2403 = vxor.u32 %v2381, 2147483648
    %v2404 = vmul.f32 %v2403, 1.442695
    %v2405 = vpow.pop %v2404
    %v2406 = vadd.f32 %v2405, 1.0
    %v2407 = vrcp.pop %v2406
    %v2408 = vmul.f32 %v2406, %v2407
    %v2409 = vsub.f32 1.0, %v2408
    %v2410 = vmul.f32 %v2407, %v2409
    %v2411 = vadd.f32 %v2407, %v2410
    %vm2412 = vweird.f32 %v2406
    %vm2413 = vweird.f32 %v2407
    %vm2414 = vmor %vm2412, %vm2413
    %v2415 = vsel %vm2414, %v2407, %v2411
    %v2416 = vand.u32 2147483647, %v2406
    %vm2417 = vcmp.eq.f32.partialorder %v2416, 8.507059e+37
    %v2418 = vand.u32 %v2406, 2147483648
    %v2419 = vor.u32 1.1754944e-38, %v2418
    %v2420 = vsel %vm2417, %v2419, %v2415
    %v2421 = vmul.f32 1.0, %v2420
    %v2422 = vtanh.pop %v2382
    %v2423 = vxor.u32 %v2383, 2147483648
    %v2424 = vmul.f32 %v2423, 1.442695
    %v2425 = vpow.pop %v2424
    %v2426 = vadd.f32 %v2425, 1.0
    %v2427 = vrcp.pop %v2426
    %v2428 = vmul.f32 %v2426, %v2427
    %v2429 = vsub.f32 1.0, %v2428
    %v2430 = vmul.f32 %v2427, %v2429
    %v2431 = vadd.f32 %v2427, %v2430
    %vm2432 = vweird.f32 %v2426
    %vm2433 = vweird.f32 %v2427
    %vm2434 = vmor %vm2432, %vm2433
    %v2435 = vsel %vm2434, %v2427, %v2431
    %v2436 = vand.u32 2147483647, %v2426
    %vm2437 = vcmp.eq.f32.partialorder %v2436, 8.507059e+37
    %v2438 = vand.u32 %v2426, 2147483648
    %v2439 = vor.u32 1.1754944e-38, %v2438
    %v2440 = vsel %vm2437, %v2439, %v2435
    %v2441 = vmul.f32 1.0, %v2440
    %v2443 = vrot.slane %v2262, 7
    %v2445 = vmul.f32 %v2421, %v2443
    %v2446 = vmul.f32 %v2402, %v2422
    %v2447 = vadd.f32 %v2445, %v2446
    %v2448 = vtanh.pop %v2447
    %v2449 = vmul.f32 %v2441, %v2448
    %v2450 = vxor.u32 %v2449, 2147483648
    %v2451 = vmul.f32 %v2450, 1.442695
    %v2452 = vpow.pop %v2451
    %v2453 = vadd.f32 %v2452, 1.0
    %v2454 = vrcp.pop %v2453
    %v2455 = vmul.f32 %v2453, %v2454
    %v2456 = vsub.f32 1.0, %v2455
    %v2457 = vmul.f32 %v2454, %v2456
    %v2458 = vadd.f32 %v2454, %v2457
    %vm2459 = vweird.f32 %v2453
    %vm2460 = vweird.f32 %v2454
    %vm2461 = vmor %vm2459, %vm2460
    %v2462 = vsel %vm2461, %v2454, %v2458
    %v2463 = vand.u32 2147483647, %v2453
    %vm2464 = vcmp.eq.f32.partialorder %v2463, 8.507059e+37
    %v2465 = vand.u32 %v2453, 2147483648
    %v2466 = vor.u32 1.1754944e-38, %v2465
    %v2467 = vsel %vm2464, %v2466, %v2462
    %v2468 = vmul.f32 1.0, %v2467
    %2469 = vst [vmem:[#allocation2] sm:$0x4] %v2468
    %v2471 = vrot.slane %v2449, 2
    %2473 = vmatpush.msra.mxu0 %v1841
    %2474 = vmatpush.msra.mxu0 %v1837
    %2475 = vmatpush.msra.mxu0 %v1833
    %2476 = vmatpush.msra.mxu0 %v1829
    %2477 = vmatpush.msra.mxu0 %v1825
    %2478 = vmatpush.msra.mxu0 %v1821
    %2479 = vmatpush.msra.mxu0 %v1817
    %2480 = vmatpush.msra.mxu0 %v1813
    %2481 = vmatpush.msra.mxu0 %v1809
    %2482 = vmatpush.msra.mxu0 %v1805
    %2483 = vmatpush.msra.mxu0 %v1801
    %2484 = vmatpush.msra.mxu0 %v1797
    %2485 = vmatpush.msra.mxu0 %v1793
    %2486 = vmatpush.msra.mxu0 %v1789
    %2487 = vmatpush.msra.mxu0 %v1785
    %2488 = vmatpush.msra.mxu0 %v1781
    %2489 = vmatmul.f32.gmra.mxu0 %v2471
    %v2490 = vpop.f32.mrf.mxu0
    %v2491 = vadd.f32 0.0, %v2490
    %2492 = vdwg.mxu0
    %2493 = vmatpush.msra.mxu0 %v1842
    %2494 = vmatpush.msra.mxu0 %v1838
    %2495 = vmatpush.msra.mxu0 %v1834
    %2496 = vmatpush.msra.mxu0 %v1830
    %2497 = vmatpush.msra.mxu0 %v1826
    %2498 = vmatpush.msra.mxu0 %v1822
    %2499 = vmatpush.msra.mxu0 %v1818
    %2500 = vmatpush.msra.mxu0 %v1814
    %2501 = vmatpush.msra.mxu0 %v1810
    %2502 = vmatpush.msra.mxu0 %v1806
    %2503 = vmatpush.msra.mxu0 %v1802
    %2504 = vmatpush.msra.mxu0 %v1798
    %2505 = vmatpush.msra.mxu0 %v1794
    %2506 = vmatpush.msra.mxu0 %v1790
    %2507 = vmatpush.msra.mxu0 %v1786
    %2508 = vmatpush.msra.mxu0 %v1782
    %2509 = vmatmul.f32.gmra.mxu0 %v2471
    %v2510 = vpop.f32.mrf.mxu0
    %v2511 = vadd.f32 0.0, %v2510
    %2512 = vdwg.mxu0
    %2513 = vmatpush.msra.mxu0 %v1843
    %2514 = vmatpush.msra.mxu0 %v1839
    %2515 = vmatpush.msra.mxu0 %v1835
    %2516 = vmatpush.msra.mxu0 %v1831
    %2517 = vmatpush.msra.mxu0 %v1827
    %2518 = vmatpush.msra.mxu0 %v1823
    %2519 = vmatpush.msra.mxu0 %v1819
    %2520 = vmatpush.msra.mxu0 %v1815
    %2521 = vmatpush.msra.mxu0 %v1811
    %2522 = vmatpush.msra.mxu0 %v1807
    %2523 = vmatpush.msra.mxu0 %v1803
    %2524 = vmatpush.msra.mxu0 %v1799
    %2525 = vmatpush.msra.mxu0 %v1795
    %2526 = vmatpush.msra.mxu0 %v1791
    %2527 = vmatpush.msra.mxu0 %v1787
    %2528 = vmatpush.msra.mxu0 %v1783
    %2529 = vmatmul.f32.gmra.mxu0 %v2471
    %v2530 = vpop.f32.mrf.mxu0
    %v2531 = vadd.f32 0.0, %v2530
    %2532 = vdwg.mxu0
    %2533 = vmatpush.msra.mxu0 %v1844
    %2534 = vmatpush.msra.mxu0 %v1840
    %2535 = vmatpush.msra.mxu0 %v1836
    %2536 = vmatpush.msra.mxu0 %v1832
    %2537 = vmatpush.msra.mxu0 %v1828
    %2538 = vmatpush.msra.mxu0 %v1824
    %2539 = vmatpush.msra.mxu0 %v1820
    %2540 = vmatpush.msra.mxu0 %v1816
    %2541 = vmatpush.msra.mxu0 %v1812
    %2542 = vmatpush.msra.mxu0 %v1808
    %2543 = vmatpush.msra.mxu0 %v1804
    %2544 = vmatpush.msra.mxu0 %v1800
    %2545 = vmatpush.msra.mxu0 %v1796
    %2546 = vmatpush.msra.mxu0 %v1792
    %2547 = vmatpush.msra.mxu0 %v1788
    %2548 = vmatpush.msra.mxu0 %v1784
    %2549 = vmatmul.f32.gmra.mxu0 %v2471
    %v2550 = vpop.f32.mrf.mxu0
    %v2551 = vadd.f32 0.0, %v2550
    %2552 = vdwg.mxu0
    %v2557 = vrot.slane %v2491, 5
    %v2558 = vrot.slane %v2511, 5
    %v2559 = vrot.slane %v2531, 5
    %v2560 = vrot.slane %v2551, 5
    %v2565 = vadd.f32 %v1874, %v2557
    %v2566 = vadd.f32 %v1894, %v2558
    %v2567 = vadd.f32 %v1914, %v2559
    %v2568 = vadd.f32 %v1934, %v2560
    %v2569 = vxor.u32 %v2565, 2147483648
    %v2570 = vmul.f32 %v2569, 1.442695
    %v2571 = vpow.pop %v2570
    %v2572 = vadd.f32 %v2571, 1.0
    %v2573 = vrcp.pop %v2572
    %v2574 = vmul.f32 %v2572, %v2573
    %v2575 = vsub.f32 1.0, %v2574
    %v2576 = vmul.f32 %v2573, %v2575
    %v2577 = vadd.f32 %v2573, %v2576
    %vm2578 = vweird.f32 %v2572
    %vm2579 = vweird.f32 %v2573
    %vm2580 = vmor %vm2578, %vm2579
    %v2581 = vsel %vm2580, %v2573, %v2577
    %v2582 = vand.u32 2147483647, %v2572
    %vm2583 = vcmp.eq.f32.partialorder %v2582, 8.507059e+37
    %v2584 = vand.u32 %v2572, 2147483648
    %v2585 = vor.u32 1.1754944e-38, %v2584
    %v2586 = vsel %vm2583, %v2585, %v2581
    %v2587 = vmul.f32 1.0, %v2586
    %v2588 = vxor.u32 %v2566, 2147483648
    %v2589 = vmul.f32 %v2588, 1.442695
    %v2590 = vpow.pop %v2589
    %v2591 = vadd.f32 %v2590, 1.0
    %v2592 = vrcp.pop %v2591
    %v2593 = vmul.f32 %v2591, %v2592
    %v2594 = vsub.f32 1.0, %v2593
    %v2595 = vmul.f32 %v2592, %v2594
    %v2596 = vadd.f32 %v2592, %v2595
    %vm2597 = vweird.f32 %v2591
    %vm2598 = vweird.f32 %v2592
    %vm2599 = vmor %vm2597, %vm2598
    %v2600 = vsel %vm2599, %v2592, %v2596
    %v2601 = vand.u32 2147483647, %v2591
    %vm2602 = vcmp.eq.f32.partialorder %v2601, 8.507059e+37
    %v2603 = vand.u32 %v2591, 2147483648
    %v2604 = vor.u32 1.1754944e-38, %v2603
    %v2605 = vsel %vm2602, %v2604, %v2600
    %v2606 = vmul.f32 1.0, %v2605
    %v2607 = vtanh.pop %v2567
    %v2608 = vxor.u32 %v2568, 2147483648
    %v2609 = vmul.f32 %v2608, 1.442695
    %v2610 = vpow.pop %v2609
    %v2611 = vadd.f32 %v2610, 1.0
    %v2612 = vrcp.pop %v2611
    %v2613 = vmul.f32 %v2611, %v2612
    %v2614 = vsub.f32 1.0, %v2613
    %v2615 = vmul.f32 %v2612, %v2614
    %v2616 = vadd.f32 %v2612, %v2615
    %vm2617 = vweird.f32 %v2611
    %vm2618 = vweird.f32 %v2612
    %vm2619 = vmor %vm2617, %vm2618
    %v2620 = vsel %vm2619, %v2612, %v2616
    %v2621 = vand.u32 2147483647, %v2611
    %vm2622 = vcmp.eq.f32.partialorder %v2621, 8.507059e+37
    %v2623 = vand.u32 %v2611, 2147483648
    %v2624 = vor.u32 1.1754944e-38, %v2623
    %v2625 = vsel %vm2622, %v2624, %v2620
    %v2626 = vmul.f32 1.0, %v2625
    %v2628 = vrot.slane %v2447, 7
    %v2630 = vmul.f32 %v2606, %v2628
    %v2631 = vmul.f32 %v2587, %v2607
    %v2632 = vadd.f32 %v2630, %v2631
    %v2633 = vtanh.pop %v2632
    %v2634 = vmul.f32 %v2626, %v2633
    %v2635 = vxor.u32 %v2634, 2147483648
    %v2636 = vmul.f32 %v2635, 1.442695
    %v2637 = vpow.pop %v2636
    %v2638 = vadd.f32 %v2637, 1.0
    %v2639 = vrcp.pop %v2638
    %v2640 = vmul.f32 %v2638, %v2639
    %v2641 = vsub.f32 1.0, %v2640
    %v2642 = vmul.f32 %v2639, %v2641
    %v2643 = vadd.f32 %v2639, %v2642
    %vm2644 = vweird.f32 %v2638
    %vm2645 = vweird.f32 %v2639
    %vm2646 = vmor %vm2644, %vm2645
    %v2647 = vsel %vm2646, %v2639, %v2643
    %v2648 = vand.u32 2147483647, %v2638
    %vm2649 = vcmp.eq.f32.partialorder %v2648, 8.507059e+37
    %v2650 = vand.u32 %v2638, 2147483648
    %v2651 = vor.u32 1.1754944e-38, %v2650
    %v2652 = vsel %vm2649, %v2651, %v2647
    %v2653 = vmul.f32 1.0, %v2652
    %2654 = vst [vmem:[#allocation2] sm:$0x8] %v2653
    %v2656 = vrot.slane %v2634, 3
    %2658 = vmatpush.msra.mxu0 %v1841
    %2659 = vmatpush.msra.mxu0 %v1837
    %2660 = vmatpush.msra.mxu0 %v1833
    %2661 = vmatpush.msra.mxu0 %v1829
    %2662 = vmatpush.msra.mxu0 %v1825
    %2663 = vmatpush.msra.mxu0 %v1821
    %2664 = vmatpush.msra.mxu0 %v1817
    %2665 = vmatpush.msra.mxu0 %v1813
    %2666 = vmatpush.msra.mxu0 %v1809
    %2667 = vmatpush.msra.mxu0 %v1805
    %2668 = vmatpush.msra.mxu0 %v1801
    %2669 = vmatpush.msra.mxu0 %v1797
    %2670 = vmatpush.msra.mxu0 %v1793
    %2671 = vmatpush.msra.mxu0 %v1789
    %2672 = vmatpush.msra.mxu0 %v1785
    %2673 = vmatpush.msra.mxu0 %v1781
    %2674 = vmatmul.f32.gmra.mxu0 %v2656
    %v2675 = vpop.f32.mrf.mxu0
    %v2676 = vadd.f32 0.0, %v2675
    %2677 = vdwg.mxu0
    %2678 = vmatpush.msra.mxu0 %v1842
    %2679 = vmatpush.msra.mxu0 %v1838
    %2680 = vmatpush.msra.mxu0 %v1834
    %2681 = vmatpush.msra.mxu0 %v1830
    %2682 = vmatpush.msra.mxu0 %v1826
    %2683 = vmatpush.msra.mxu0 %v1822
    %2684 = vmatpush.msra.mxu0 %v1818
    %2685 = vmatpush.msra.mxu0 %v1814
    %2686 = vmatpush.msra.mxu0 %v1810
    %2687 = vmatpush.msra.mxu0 %v1806
    %2688 = vmatpush.msra.mxu0 %v1802
    %2689 = vmatpush.msra.mxu0 %v1798
    %2690 = vmatpush.msra.mxu0 %v1794
    %2691 = vmatpush.msra.mxu0 %v1790
    %2692 = vmatpush.msra.mxu0 %v1786
    %2693 = vmatpush.msra.mxu0 %v1782
    %2694 = vmatmul.f32.gmra.mxu0 %v2656
    %v2695 = vpop.f32.mrf.mxu0
    %v2696 = vadd.f32 0.0, %v2695
    %2697 = vdwg.mxu0
    %2698 = vmatpush.msra.mxu0 %v1843
    %2699 = vmatpush.msra.mxu0 %v1839
    %2700 = vmatpush.msra.mxu0 %v1835
    %2701 = vmatpush.msra.mxu0 %v1831
    %2702 = vmatpush.msra.mxu0 %v1827
    %2703 = vmatpush.msra.mxu0 %v1823
    %2704 = vmatpush.msra.mxu0 %v1819
    %2705 = vmatpush.msra.mxu0 %v1815
    %2706 = vmatpush.msra.mxu0 %v1811
    %2707 = vmatpush.msra.mxu0 %v1807
    %2708 = vmatpush.msra.mxu0 %v1803
    %2709 = vmatpush.msra.mxu0 %v1799
    %2710 = vmatpush.msra.mxu0 %v1795
    %2711 = vmatpush.msra.mxu0 %v1791
    %2712 = vmatpush.msra.mxu0 %v1787
    %2713 = vmatpush.msra.mxu0 %v1783
    %2714 = vmatmul.f32.gmra.mxu0 %v2656
    %v2715 = vpop.f32.mrf.mxu0
    %v2716 = vadd.f32 0.0, %v2715
    %2717 = vdwg.mxu0
    %2718 = vmatpush.msra.mxu0 %v1844
    %2719 = vmatpush.msra.mxu0 %v1840
    %2720 = vmatpush.msra.mxu0 %v1836
    %2721 = vmatpush.msra.mxu0 %v1832
    %2722 = vmatpush.msra.mxu0 %v1828
    %2723 = vmatpush.msra.mxu0 %v1824
    %2724 = vmatpush.msra.mxu0 %v1820
    %2725 = vmatpush.msra.mxu0 %v1816
    %2726 = vmatpush.msra.mxu0 %v1812
    %2727 = vmatpush.msra.mxu0 %v1808
    %2728 = vmatpush.msra.mxu0 %v1804
    %2729 = vmatpush.msra.mxu0 %v1800
    %2730 = vmatpush.msra.mxu0 %v1796
    %2731 = vmatpush.msra.mxu0 %v1792
    %2732 = vmatpush.msra.mxu0 %v1788
    %2733 = vmatpush.msra.mxu0 %v1784
    %2734 = vmatmul.f32.gmra.mxu0 %v2656
    %v2735 = vpop.f32.mrf.mxu0
    %v2736 = vadd.f32 0.0, %v2735
    %2737 = vdwg.mxu0
    %v2742 = vrot.slane %v2676, 4
    %v2743 = vrot.slane %v2696, 4
    %v2744 = vrot.slane %v2716, 4
    %v2745 = vrot.slane %v2736, 4
    %v2750 = vadd.f32 %v1874, %v2742
    %v2751 = vadd.f32 %v1894, %v2743
    %v2752 = vadd.f32 %v1914, %v2744
    %v2753 = vadd.f32 %v1934, %v2745
    %v2754 = vxor.u32 %v2750, 2147483648
    %v2755 = vmul.f32 %v2754, 1.442695
    %v2756 = vpow.pop %v2755
    %v2757 = vadd.f32 %v2756, 1.0
    %v2758 = vrcp.pop %v2757
    %v2759 = vmul.f32 %v2757, %v2758
    %v2760 = vsub.f32 1.0, %v2759
    %v2761 = vmul.f32 %v2758, %v2760
    %v2762 = vadd.f32 %v2758, %v2761
    %vm2763 = vweird.f32 %v2757
    %vm2764 = vweird.f32 %v2758
    %vm2765 = vmor %vm2763, %vm2764
    %v2766 = vsel %vm2765, %v2758, %v2762
    %v2767 = vand.u32 2147483647, %v2757
    %vm2768 = vcmp.eq.f32.partialorder %v2767, 8.507059e+37
    %v2769 = vand.u32 %v2757, 2147483648
    %v2770 = vor.u32 1.1754944e-38, %v2769
    %v2771 = vsel %vm2768, %v2770, %v2766
    %v2772 = vmul.f32 1.0, %v2771
    %v2773 = vxor.u32 %v2751, 2147483648
    %v2774 = vmul.f32 %v2773, 1.442695
    %v2775 = vpow.pop %v2774
    %v2776 = vadd.f32 %v2775, 1.0
    %v2777 = vrcp.pop %v2776
    %v2778 = vmul.f32 %v2776, %v2777
    %v2779 = vsub.f32 1.0, %v2778
    %v2780 = vmul.f32 %v2777, %v2779
    %v2781 = vadd.f32 %v2777, %v2780
    %vm2782 = vweird.f32 %v2776
    %vm2783 = vweird.f32 %v2777
    %vm2784 = vmor %vm2782, %vm2783
    %v2785 = vsel %vm2784, %v2777, %v2781
    %v2786 = vand.u32 2147483647, %v2776
    %vm2787 = vcmp.eq.f32.partialorder %v2786, 8.507059e+37
    %v2788 = vand.u32 %v2776, 2147483648
    %v2789 = vor.u32 1.1754944e-38, %v2788
    %v2790 = vsel %vm2787, %v2789, %v2785
    %v2791 = vmul.f32 1.0, %v2790
    %v2792 = vtanh.pop %v2752
    %v2793 = vxor.u32 %v2753, 2147483648
    %v2794 = vmul.f32 %v2793, 1.442695
    %v2795 = vpow.pop %v2794
    %v2796 = vadd.f32 %v2795, 1.0
    %v2797 = vrcp.pop %v2796
    %v2798 = vmul.f32 %v2796, %v2797
    %v2799 = vsub.f32 1.0, %v2798
    %v2800 = vmul.f32 %v2797, %v2799
    %v2801 = vadd.f32 %v2797, %v2800
    %vm2802 = vweird.f32 %v2796
    %vm2803 = vweird.f32 %v2797
    %vm2804 = vmor %vm2802, %vm2803
    %v2805 = vsel %vm2804, %v2797, %v2801
    %v2806 = vand.u32 2147483647, %v2796
    %vm2807 = vcmp.eq.f32.partialorder %v2806, 8.507059e+37
    %v2808 = vand.u32 %v2796, 2147483648
    %v2809 = vor.u32 1.1754944e-38, %v2808
    %v2810 = vsel %vm2807, %v2809, %v2805
    %v2811 = vmul.f32 1.0, %v2810
    %v2813 = vrot.slane %v2632, 7
    %v2815 = vmul.f32 %v2791, %v2813
    %v2816 = vmul.f32 %v2772, %v2792
    %v2817 = vadd.f32 %v2815, %v2816
    %v2818 = vtanh.pop %v2817
    %v2819 = vmul.f32 %v2811, %v2818
    %v2820 = vxor.u32 %v2819, 2147483648
    %v2821 = vmul.f32 %v2820, 1.442695
    %v2822 = vpow.pop %v2821
    %v2823 = vadd.f32 %v2822, 1.0
    %v2824 = vrcp.pop %v2823
    %v2825 = vmul.f32 %v2823, %v2824
    %v2826 = vsub.f32 1.0, %v2825
    %v2827 = vmul.f32 %v2824, %v2826
    %v2828 = vadd.f32 %v2824, %v2827
    %vm2829 = vweird.f32 %v2823
    %vm2830 = vweird.f32 %v2824
    %vm2831 = vmor %vm2829, %vm2830
    %v2832 = vsel %vm2831, %v2824, %v2828
    %v2833 = vand.u32 2147483647, %v2823
    %vm2834 = vcmp.eq.f32.partialorder %v2833, 8.507059e+37
    %v2835 = vand.u32 %v2823, 2147483648
    %v2836 = vor.u32 1.1754944e-38, %v2835
    %v2837 = vsel %vm2834, %v2836, %v2832
    %v2838 = vmul.f32 1.0, %v2837
    %2839 = vst [vmem:[#allocation2] sm:$0x10] %v2838
    %v2841 = vrot.slane %v2819, 4
    %2843 = vmatpush.msra.mxu0 %v1841
    %2844 = vmatpush.msra.mxu0 %v1837
    %2845 = vmatpush.msra.mxu0 %v1833
    %2846 = vmatpush.msra.mxu0 %v1829
    %2847 = vmatpush.msra.mxu0 %v1825
    %2848 = vmatpush.msra.mxu0 %v1821
    %2849 = vmatpush.msra.mxu0 %v1817
    %2850 = vmatpush.msra.mxu0 %v1813
    %2851 = vmatpush.msra.mxu0 %v1809
    %2852 = vmatpush.msra.mxu0 %v1805
    %2853 = vmatpush.msra.mxu0 %v1801
    %2854 = vmatpush.msra.mxu0 %v1797
    %2855 = vmatpush.msra.mxu0 %v1793
    %2856 = vmatpush.msra.mxu0 %v1789
    %2857 = vmatpush.msra.mxu0 %v1785
    %2858 = vmatpush.msra.mxu0 %v1781
    %2859 = vmatmul.f32.gmra.mxu0 %v2841
    %v2860 = vpop.f32.mrf.mxu0
    %v2861 = vadd.f32 0.0, %v2860
    %2862 = vdwg.mxu0
    %2863 = vmatpush.msra.mxu0 %v1842
    %2864 = vmatpush.msra.mxu0 %v1838
    %2865 = vmatpush.msra.mxu0 %v1834
    %2866 = vmatpush.msra.mxu0 %v1830
    %2867 = vmatpush.msra.mxu0 %v1826
    %2868 = vmatpush.msra.mxu0 %v1822
    %2869 = vmatpush.msra.mxu0 %v1818
    %2870 = vmatpush.msra.mxu0 %v1814
    %2871 = vmatpush.msra.mxu0 %v1810
    %2872 = vmatpush.msra.mxu0 %v1806
    %2873 = vmatpush.msra.mxu0 %v1802
    %2874 = vmatpush.msra.mxu0 %v1798
    %2875 = vmatpush.msra.mxu0 %v1794
    %2876 = vmatpush.msra.mxu0 %v1790
    %2877 = vmatpush.msra.mxu0 %v1786
    %2878 = vmatpush.msra.mxu0 %v1782
    %2879 = vmatmul.f32.gmra.mxu0 %v2841
    %v2880 = vpop.f32.mrf.mxu0
    %v2881 = vadd.f32 0.0, %v2880
    %2882 = vdwg.mxu0
    %2883 = vmatpush.msra.mxu0 %v1843
    %2884 = vmatpush.msra.mxu0 %v1839
    %2885 = vmatpush.msra.mxu0 %v1835
    %2886 = vmatpush.msra.mxu0 %v1831
    %2887 = vmatpush.msra.mxu0 %v1827
    %2888 = vmatpush.msra.mxu0 %v1823
    %2889 = vmatpush.msra.mxu0 %v1819
    %2890 = vmatpush.msra.mxu0 %v1815
    %2891 = vmatpush.msra.mxu0 %v1811
    %2892 = vmatpush.msra.mxu0 %v1807
    %2893 = vmatpush.msra.mxu0 %v1803
    %2894 = vmatpush.msra.mxu0 %v1799
    %2895 = vmatpush.msra.mxu0 %v1795
    %2896 = vmatpush.msra.mxu0 %v1791
    %2897 = vmatpush.msra.mxu0 %v1787
    %2898 = vmatpush.msra.mxu0 %v1783
    %2899 = vmatmul.f32.gmra.mxu0 %v2841
    %v2900 = vpop.f32.mrf.mxu0
    %v2901 = vadd.f32 0.0, %v2900
    %2902 = vdwg.mxu0
    %2903 = vmatpush.msra.mxu0 %v1844
    %2904 = vmatpush.msra.mxu0 %v1840
    %2905 = vmatpush.msra.mxu0 %v1836
    %2906 = vmatpush.msra.mxu0 %v1832
    %2907 = vmatpush.msra.mxu0 %v1828
    %2908 = vmatpush.msra.mxu0 %v1824
    %2909 = vmatpush.msra.mxu0 %v1820
    %2910 = vmatpush.msra.mxu0 %v1816
    %2911 = vmatpush.msra.mxu0 %v1812
    %2912 = vmatpush.msra.mxu0 %v1808
    %2913 = vmatpush.msra.mxu0 %v1804
    %2914 = vmatpush.msra.mxu0 %v1800
    %2915 = vmatpush.msra.mxu0 %v1796
    %2916 = vmatpush.msra.mxu0 %v1792
    %2917 = vmatpush.msra.mxu0 %v1788
    %2918 = vmatpush.msra.mxu0 %v1784
    %2919 = vmatmul.f32.gmra.mxu0 %v2841
    %v2920 = vpop.f32.mrf.mxu0
    %v2921 = vadd.f32 0.0, %v2920
    %2922 = vdwg.mxu0
    %v2927 = vrot.slane %v2861, 3
    %v2928 = vrot.slane %v2881, 3
    %v2929 = vrot.slane %v2901, 3
    %v2930 = vrot.slane %v2921, 3
    %v2935 = vadd.f32 %v1874, %v2927
    %v2936 = vadd.f32 %v1894, %v2928
    %v2937 = vadd.f32 %v1914, %v2929
    %v2938 = vadd.f32 %v1934, %v2930
    %v2939 = vxor.u32 %v2935, 2147483648
    %v2940 = vmul.f32 %v2939, 1.442695
    %v2941 = vpow.pop %v2940
    %v2942 = vadd.f32 %v2941, 1.0
    %v2943 = vrcp.pop %v2942
    %v2944 = vmul.f32 %v2942, %v2943
    %v2945 = vsub.f32 1.0, %v2944
    %v2946 = vmul.f32 %v2943, %v2945
    %v2947 = vadd.f32 %v2943, %v2946
    %vm2948 = vweird.f32 %v2942
    %vm2949 = vweird.f32 %v2943
    %vm2950 = vmor %vm2948, %vm2949
    %v2951 = vsel %vm2950, %v2943, %v2947
    %v2952 = vand.u32 2147483647, %v2942
    %vm2953 = vcmp.eq.f32.partialorder %v2952, 8.507059e+37
    %v2954 = vand.u32 %v2942, 2147483648
    %v2955 = vor.u32 1.1754944e-38, %v2954
    %v2956 = vsel %vm2953, %v2955, %v2951
    %v2957 = vmul.f32 1.0, %v2956
    %v2958 = vxor.u32 %v2936, 2147483648
    %v2959 = vmul.f32 %v2958, 1.442695
    %v2960 = vpow.pop %v2959
    %v2961 = vadd.f32 %v2960, 1.0
    %v2962 = vrcp.pop %v2961
    %v2963 = vmul.f32 %v2961, %v2962
    %v2964 = vsub.f32 1.0, %v2963
    %v2965 = vmul.f32 %v2962, %v2964
    %v2966 = vadd.f32 %v2962, %v2965
    %vm2967 = vweird.f32 %v2961
    %vm2968 = vweird.f32 %v2962
    %vm2969 = vmor %vm2967, %vm2968
    %v2970 = vsel %vm2969, %v2962, %v2966
    %v2971 = vand.u32 2147483647, %v2961
    %vm2972 = vcmp.eq.f32.partialorder %v2971, 8.507059e+37
    %v2973 = vand.u32 %v2961, 2147483648
    %v2974 = vor.u32 1.1754944e-38, %v2973
    %v2975 = vsel %vm2972, %v2974, %v2970
    %v2976 = vmul.f32 1.0, %v2975
    %v2977 = vtanh.pop %v2937
    %v2978 = vxor.u32 %v2938, 2147483648
    %v2979 = vmul.f32 %v2978, 1.442695
    %v2980 = vpow.pop %v2979
    %v2981 = vadd.f32 %v2980, 1.0
    %v2982 = vrcp.pop %v2981
    %v2983 = vmul.f32 %v2981, %v2982
    %v2984 = vsub.f32 1.0, %v2983
    %v2985 = vmul.f32 %v2982, %v2984
    %v2986 = vadd.f32 %v2982, %v2985
    %vm2987 = vweird.f32 %v2981
    %vm2988 = vweird.f32 %v2982
    %vm2989 = vmor %vm2987, %vm2988
    %v2990 = vsel %vm2989, %v2982, %v2986
    %v2991 = vand.u32 2147483647, %v2981
    %vm2992 = vcmp.eq.f32.partialorder %v2991, 8.507059e+37
    %v2993 = vand.u32 %v2981, 2147483648
    %v2994 = vor.u32 1.1754944e-38, %v2993
    %v2995 = vsel %vm2992, %v2994, %v2990
    %v2996 = vmul.f32 1.0, %v2995
    %v2998 = vrot.slane %v2817, 7
    %v3000 = vmul.f32 %v2976, %v2998
    %v3001 = vmul.f32 %v2957, %v2977
    %v3002 = vadd.f32 %v3000, %v3001
    %v3003 = vtanh.pop %v3002
    %v3004 = vmul.f32 %v2996, %v3003
    %v3005 = vxor.u32 %v3004, 2147483648
    %v3006 = vmul.f32 %v3005, 1.442695
    %v3007 = vpow.pop %v3006
    %v3008 = vadd.f32 %v3007, 1.0
    %v3009 = vrcp.pop %v3008
    %v3010 = vmul.f32 %v3008, %v3009
    %v3011 = vsub.f32 1.0, %v3010
    %v3012 = vmul.f32 %v3009, %v3011
    %v3013 = vadd.f32 %v3009, %v3012
    %vm3014 = vweird.f32 %v3008
    %vm3015 = vweird.f32 %v3009
    %vm3016 = vmor %vm3014, %vm3015
    %v3017 = vsel %vm3016, %v3009, %v3013
    %v3018 = vand.u32 2147483647, %v3008
    %vm3019 = vcmp.eq.f32.partialorder %v3018, 8.507059e+37
    %v3020 = vand.u32 %v3008, 2147483648
    %v3021 = vor.u32 1.1754944e-38, %v3020
    %v3022 = vsel %vm3019, %v3021, %v3017
    %v3023 = vmul.f32 1.0, %v3022
    %3024 = vst [vmem:[#allocation2] sm:$0x20] %v3023
    %v3026 = vrot.slane %v3004, 5
    %3028 = vmatpush.msra.mxu0 %v1841
    %3029 = vmatpush.msra.mxu0 %v1837
    %3030 = vmatpush.msra.mxu0 %v1833
    %3031 = vmatpush.msra.mxu0 %v1829
    %3032 = vmatpush.msra.mxu0 %v1825
    %3033 = vmatpush.msra.mxu0 %v1821
    %3034 = vmatpush.msra.mxu0 %v1817
    %3035 = vmatpush.msra.mxu0 %v1813
    %3036 = vmatpush.msra.mxu0 %v1809
    %3037 = vmatpush.msra.mxu0 %v1805
    %3038 = vmatpush.msra.mxu0 %v1801
    %3039 = vmatpush.msra.mxu0 %v1797
    %3040 = vmatpush.msra.mxu0 %v1793
    %3041 = vmatpush.msra.mxu0 %v1789
    %3042 = vmatpush.msra.mxu0 %v1785
    %3043 = vmatpush.msra.mxu0 %v1781
    %3044 = vmatmul.f32.gmra.mxu0 %v3026
    %v3045 = vpop.f32.mrf.mxu0
    %v3046 = vadd.f32 0.0, %v3045
    %3047 = vdwg.mxu0
    %3048 = vmatpush.msra.mxu0 %v1842
    %3049 = vmatpush.msra.mxu0 %v1838
    %3050 = vmatpush.msra.mxu0 %v1834
    %3051 = vmatpush.msra.mxu0 %v1830
    %3052 = vmatpush.msra.mxu0 %v1826
    %3053 = vmatpush.msra.mxu0 %v1822
    %3054 = vmatpush.msra.mxu0 %v1818
    %3055 = vmatpush.msra.mxu0 %v1814
    %3056 = vmatpush.msra.mxu0 %v1810
    %3057 = vmatpush.msra.mxu0 %v1806
    %3058 = vmatpush.msra.mxu0 %v1802
    %3059 = vmatpush.msra.mxu0 %v1798
    %3060 = vmatpush.msra.mxu0 %v1794
    %3061 = vmatpush.msra.mxu0 %v1790
    %3062 = vmatpush.msra.mxu0 %v1786
    %3063 = vmatpush.msra.mxu0 %v1782
    %3064 = vmatmul.f32.gmra.mxu0 %v3026
    %v3065 = vpop.f32.mrf.mxu0
    %v3066 = vadd.f32 0.0, %v3065
    %3067 = vdwg.mxu0
    %3068 = vmatpush.msra.mxu0 %v1843
    %3069 = vmatpush.msra.mxu0 %v1839
    %3070 = vmatpush.msra.mxu0 %v1835
    %3071 = vmatpush.msra.mxu0 %v1831
    %3072 = vmatpush.msra.mxu0 %v1827
    %3073 = vmatpush.msra.mxu0 %v1823
    %3074 = vmatpush.msra.mxu0 %v1819
    %3075 = vmatpush.msra.mxu0 %v1815
    %3076 = vmatpush.msra.mxu0 %v1811
    %3077 = vmatpush.msra.mxu0 %v1807
    %3078 = vmatpush.msra.mxu0 %v1803
    %3079 = vmatpush.msra.mxu0 %v1799
    %3080 = vmatpush.msra.mxu0 %v1795
    %3081 = vmatpush.msra.mxu0 %v1791
    %3082 = vmatpush.msra.mxu0 %v1787
    %3083 = vmatpush.msra.mxu0 %v1783
    %3084 = vmatmul.f32.gmra.mxu0 %v3026
    %v3085 = vpop.f32.mrf.mxu0
    %v3086 = vadd.f32 0.0, %v3085
    %3087 = vdwg.mxu0
    %3088 = vmatpush.msra.mxu0 %v1844
    %3089 = vmatpush.msra.mxu0 %v1840
    %3090 = vmatpush.msra.mxu0 %v1836
    %3091 = vmatpush.msra.mxu0 %v1832
    %3092 = vmatpush.msra.mxu0 %v1828
    %3093 = vmatpush.msra.mxu0 %v1824
    %3094 = vmatpush.msra.mxu0 %v1820
    %3095 = vmatpush.msra.mxu0 %v1816
    %3096 = vmatpush.msra.mxu0 %v1812
    %3097 = vmatpush.msra.mxu0 %v1808
    %3098 = vmatpush.msra.mxu0 %v1804
    %3099 = vmatpush.msra.mxu0 %v1800
    %3100 = vmatpush.msra.mxu0 %v1796
    %3101 = vmatpush.msra.mxu0 %v1792
    %3102 = vmatpush.msra.mxu0 %v1788
    %3103 = vmatpush.msra.mxu0 %v1784
    %3104 = vmatmul.f32.gmra.mxu0 %v3026
    %v3105 = vpop.f32.mrf.mxu0
    %v3106 = vadd.f32 0.0, %v3105
    %3107 = vdwg.mxu0
    %v3112 = vrot.slane %v3046, 2
    %v3113 = vrot.slane %v3066, 2
    %v3114 = vrot.slane %v3086, 2
    %v3115 = vrot.slane %v3106, 2
    %v3120 = vadd.f32 %v1874, %v3112
    %v3121 = vadd.f32 %v1894, %v3113
    %v3122 = vadd.f32 %v1914, %v3114
    %v3123 = vadd.f32 %v1934, %v3115
    %v3124 = vxor.u32 %v3120, 2147483648
    %v3125 = vmul.f32 %v3124, 1.442695
    %v3126 = vpow.pop %v3125
    %v3127 = vadd.f32 %v3126, 1.0
    %v3128 = vrcp.pop %v3127
    %v3129 = vmul.f32 %v3127, %v3128
    %v3130 = vsub.f32 1.0, %v3129
    %v3131 = vmul.f32 %v3128, %v3130
    %v3132 = vadd.f32 %v3128, %v3131
    %vm3133 = vweird.f32 %v3127
    %vm3134 = vweird.f32 %v3128
    %vm3135 = vmor %vm3133, %vm3134
    %v3136 = vsel %vm3135, %v3128, %v3132
    %v3137 = vand.u32 2147483647, %v3127
    %vm3138 = vcmp.eq.f32.partialorder %v3137, 8.507059e+37
    %v3139 = vand.u32 %v3127, 2147483648
    %v3140 = vor.u32 1.1754944e-38, %v3139
    %v3141 = vsel %vm3138, %v3140, %v3136
    %v3142 = vmul.f32 1.0, %v3141
    %v3143 = vxor.u32 %v3121, 2147483648
    %v3144 = vmul.f32 %v3143, 1.442695
    %v3145 = vpow.pop %v3144
    %v3146 = vadd.f32 %v3145, 1.0
    %v3147 = vrcp.pop %v3146
    %v3148 = vmul.f32 %v3146, %v3147
    %v3149 = vsub.f32 1.0, %v3148
    %v3150 = vmul.f32 %v3147, %v3149
    %v3151 = vadd.f32 %v3147, %v3150
    %vm3152 = vweird.f32 %v3146
    %vm3153 = vweird.f32 %v3147
    %vm3154 = vmor %vm3152, %vm3153
    %v3155 = vsel %vm3154, %v3147, %v3151
    %v3156 = vand.u32 2147483647, %v3146
    %vm3157 = vcmp.eq.f32.partialorder %v3156, 8.507059e+37
    %v3158 = vand.u32 %v3146, 2147483648
    %v3159 = vor.u32 1.1754944e-38, %v3158
    %v3160 = vsel %vm3157, %v3159, %v3155
    %v3161 = vmul.f32 1.0, %v3160
    %v3162 = vtanh.pop %v3122
    %v3163 = vxor.u32 %v3123, 2147483648
    %v3164 = vmul.f32 %v3163, 1.442695
    %v3165 = vpow.pop %v3164
    %v3166 = vadd.f32 %v3165, 1.0
    %v3167 = vrcp.pop %v3166
    %v3168 = vmul.f32 %v3166, %v3167
    %v3169 = vsub.f32 1.0, %v3168
    %v3170 = vmul.f32 %v3167, %v3169
    %v3171 = vadd.f32 %v3167, %v3170
    %vm3172 = vweird.f32 %v3166
    %vm3173 = vweird.f32 %v3167
    %vm3174 = vmor %vm3172, %vm3173
    %v3175 = vsel %vm3174, %v3167, %v3171
    %v3176 = vand.u32 2147483647, %v3166
    %vm3177 = vcmp.eq.f32.partialorder %v3176, 8.507059e+37
    %v3178 = vand.u32 %v3166, 2147483648
    %v3179 = vor.u32 1.1754944e-38, %v3178
    %v3180 = vsel %vm3177, %v3179, %v3175
    %v3181 = vmul.f32 1.0, %v3180
    %v3183 = vrot.slane %v3002, 7
    %v3185 = vmul.f32 %v3161, %v3183
    %v3186 = vmul.f32 %v3142, %v3162
    %v3187 = vadd.f32 %v3185, %v3186
    %v3188 = vtanh.pop %v3187
    %v3189 = vmul.f32 %v3181, %v3188
    %v3190 = vxor.u32 %v3189, 2147483648
    %v3191 = vmul.f32 %v3190, 1.442695
    %v3192 = vpow.pop %v3191
    %v3193 = vadd.f32 %v3192, 1.0
    %v3194 = vrcp.pop %v3193
    %v3195 = vmul.f32 %v3193, %v3194
    %v3196 = vsub.f32 1.0, %v3195
    %v3197 = vmul.f32 %v3194, %v3196
    %v3198 = vadd.f32 %v3194, %v3197
    %vm3199 = vweird.f32 %v3193
    %vm3200 = vweird.f32 %v3194
    %vm3201 = vmor %vm3199, %vm3200
    %v3202 = vsel %vm3201, %v3194, %v3198
    %v3203 = vand.u32 2147483647, %v3193
    %vm3204 = vcmp.eq.f32.partialorder %v3203, 8.507059e+37
    %v3205 = vand.u32 %v3193, 2147483648
    %v3206 = vor.u32 1.1754944e-38, %v3205
    %v3207 = vsel %vm3204, %v3206, %v3202
    %v3208 = vmul.f32 1.0, %v3207
    %3209 = vst [vmem:[#allocation2] sm:$0x40] %v3208
    %v3211 = vrot.slane %v3189, 6
    %3213 = vmatpush.msra.mxu0 %v1841
    %3214 = vmatpush.msra.mxu0 %v1837
    %3215 = vmatpush.msra.mxu0 %v1833
    %3216 = vmatpush.msra.mxu0 %v1829
    %3217 = vmatpush.msra.mxu0 %v1825
    %3218 = vmatpush.msra.mxu0 %v1821
    %3219 = vmatpush.msra.mxu0 %v1817
    %3220 = vmatpush.msra.mxu0 %v1813
    %3221 = vmatpush.msra.mxu0 %v1809
    %3222 = vmatpush.msra.mxu0 %v1805
    %3223 = vmatpush.msra.mxu0 %v1801
    %3224 = vmatpush.msra.mxu0 %v1797
    %3225 = vmatpush.msra.mxu0 %v1793
    %3226 = vmatpush.msra.mxu0 %v1789
    %3227 = vmatpush.msra.mxu0 %v1785
    %3228 = vmatpush.msra.mxu0 %v1781
    %3229 = vmatmul.f32.gmra.mxu0 %v3211
    %v3230 = vpop.f32.mrf.mxu0
    %v3231 = vadd.f32 0.0, %v3230
    %3232 = vdwg.mxu0
    %3233 = vmatpush.msra.mxu0 %v1842
    %3234 = vmatpush.msra.mxu0 %v1838
    %3235 = vmatpush.msra.mxu0 %v1834
    %3236 = vmatpush.msra.mxu0 %v1830
    %3237 = vmatpush.msra.mxu0 %v1826
    %3238 = vmatpush.msra.mxu0 %v1822
    %3239 = vmatpush.msra.mxu0 %v1818
    %3240 = vmatpush.msra.mxu0 %v1814
    %3241 = vmatpush.msra.mxu0 %v1810
    %3242 = vmatpush.msra.mxu0 %v1806
    %3243 = vmatpush.msra.mxu0 %v1802
    %3244 = vmatpush.msra.mxu0 %v1798
    %3245 = vmatpush.msra.mxu0 %v1794
    %3246 = vmatpush.msra.mxu0 %v1790
    %3247 = vmatpush.msra.mxu0 %v1786
    %3248 = vmatpush.msra.mxu0 %v1782
    %3249 = vmatmul.f32.gmra.mxu0 %v3211
    %v3250 = vpop.f32.mrf.mxu0
    %v3251 = vadd.f32 0.0, %v3250
    %3252 = vdwg.mxu0
    %3253 = vmatpush.msra.mxu0 %v1843
    %3254 = vmatpush.msra.mxu0 %v1839
    %3255 = vmatpush.msra.mxu0 %v1835
    %3256 = vmatpush.msra.mxu0 %v1831
    %3257 = vmatpush.msra.mxu0 %v1827
    %3258 = vmatpush.msra.mxu0 %v1823
    %3259 = vmatpush.msra.mxu0 %v1819
    %3260 = vmatpush.msra.mxu0 %v1815
    %3261 = vmatpush.msra.mxu0 %v1811
    %3262 = vmatpush.msra.mxu0 %v1807
    %3263 = vmatpush.msra.mxu0 %v1803
    %3264 = vmatpush.msra.mxu0 %v1799
    %3265 = vmatpush.msra.mxu0 %v1795
    %3266 = vmatpush.msra.mxu0 %v1791
    %3267 = vmatpush.msra.mxu0 %v1787
    %3268 = vmatpush.msra.mxu0 %v1783
    %3269 = vmatmul.f32.gmra.mxu0 %v3211
    %v3270 = vpop.f32.mrf.mxu0
    %v3271 = vadd.f32 0.0, %v3270
    %3272 = vdwg.mxu0
    %3273 = vmatpush.msra.mxu0 %v1844
    %3274 = vmatpush.msra.mxu0 %v1840
    %3275 = vmatpush.msra.mxu0 %v1836
    %3276 = vmatpush.msra.mxu0 %v1832
    %3277 = vmatpush.msra.mxu0 %v1828
    %3278 = vmatpush.msra.mxu0 %v1824
    %3279 = vmatpush.msra.mxu0 %v1820
    %3280 = vmatpush.msra.mxu0 %v1816
    %3281 = vmatpush.msra.mxu0 %v1812
    %3282 = vmatpush.msra.mxu0 %v1808
    %3283 = vmatpush.msra.mxu0 %v1804
    %3284 = vmatpush.msra.mxu0 %v1800
    %3285 = vmatpush.msra.mxu0 %v1796
    %3286 = vmatpush.msra.mxu0 %v1792
    %3287 = vmatpush.msra.mxu0 %v1788
    %3288 = vmatpush.msra.mxu0 %v1784
    %3289 = vmatmul.f32.gmra.mxu0 %v3211
    %v3290 = vpop.f32.mrf.mxu0
    %v3291 = vadd.f32 0.0, %v3290
    %3292 = vdwg.mxu0
    %v3297 = vrot.slane %v3231, 1
    %v3298 = vrot.slane %v3251, 1
    %v3299 = vrot.slane %v3271, 1
    %v3300 = vrot.slane %v3291, 1
    %v3305 = vadd.f32 %v1874, %v3297
    %v3306 = vadd.f32 %v1894, %v3298
    %v3307 = vadd.f32 %v1914, %v3299
    %v3308 = vadd.f32 %v1934, %v3300
    %v3309 = vxor.u32 %v3305, 2147483648
    %v3310 = vmul.f32 %v3309, 1.442695
    %v3311 = vpow.pop %v3310
    %v3312 = vadd.f32 %v3311, 1.0
    %v3313 = vrcp.pop %v3312
    %v3314 = vmul.f32 %v3312, %v3313
    %v3315 = vsub.f32 1.0, %v3314
    %v3316 = vmul.f32 %v3313, %v3315
    %v3317 = vadd.f32 %v3313, %v3316
    %vm3318 = vweird.f32 %v3312
    %vm3319 = vweird.f32 %v3313
    %vm3320 = vmor %vm3318, %vm3319
    %v3321 = vsel %vm3320, %v3313, %v3317
    %v3322 = vand.u32 2147483647, %v3312
    %vm3323 = vcmp.eq.f32.partialorder %v3322, 8.507059e+37
    %v3324 = vand.u32 %v3312, 2147483648
    %v3325 = vor.u32 1.1754944e-38, %v3324
    %v3326 = vsel %vm3323, %v3325, %v3321
    %v3327 = vmul.f32 1.0, %v3326
    %v3328 = vxor.u32 %v3306, 2147483648
    %v3329 = vmul.f32 %v3328, 1.442695
    %v3330 = vpow.pop %v3329
    %v3331 = vadd.f32 %v3330, 1.0
    %v3332 = vrcp.pop %v3331
    %v3333 = vmul.f32 %v3331, %v3332
    %v3334 = vsub.f32 1.0, %v3333
    %v3335 = vmul.f32 %v3332, %v3334
    %v3336 = vadd.f32 %v3332, %v3335
    %vm3337 = vweird.f32 %v3331
    %vm3338 = vweird.f32 %v3332
    %vm3339 = vmor %vm3337, %vm3338
    %v3340 = vsel %vm3339, %v3332, %v3336
    %v3341 = vand.u32 2147483647, %v3331
    %vm3342 = vcmp.eq.f32.partialorder %v3341, 8.507059e+37
    %v3343 = vand.u32 %v3331, 2147483648
    %v3344 = vor.u32 1.1754944e-38, %v3343
    %v3345 = vsel %vm3342, %v3344, %v3340
    %v3346 = vmul.f32 1.0, %v3345
    %v3347 = vtanh.pop %v3307
    %v3348 = vxor.u32 %v3308, 2147483648
    %v3349 = vmul.f32 %v3348, 1.442695
    %v3350 = vpow.pop %v3349
    %v3351 = vadd.f32 %v3350, 1.0
    %v3352 = vrcp.pop %v3351
    %v3353 = vmul.f32 %v3351, %v3352
    %v3354 = vsub.f32 1.0, %v3353
    %v3355 = vmul.f32 %v3352, %v3354
    %v3356 = vadd.f32 %v3352, %v3355
    %vm3357 = vweird.f32 %v3351
    %vm3358 = vweird.f32 %v3352
    %vm3359 = vmor %vm3357, %vm3358
    %v3360 = vsel %vm3359, %v3352, %v3356
    %v3361 = vand.u32 2147483647, %v3351
    %vm3362 = vcmp.eq.f32.partialorder %v3361, 8.507059e+37
    %v3363 = vand.u32 %v3351, 2147483648
    %v3364 = vor.u32 1.1754944e-38, %v3363
    %v3365 = vsel %vm3362, %v3364, %v3360
    %v3366 = vmul.f32 1.0, %v3365
    %v3368 = vrot.slane %v3187, 7
    %v3370 = vmul.f32 %v3346, %v3368
    %v3371 = vmul.f32 %v3327, %v3347
    %v3372 = vadd.f32 %v3370, %v3371
    %v3373 = vtanh.pop %v3372
    %v3374 = vmul.f32 %v3366, %v3373
    %v3375 = vxor.u32 %v3374, 2147483648
    %v3376 = vmul.f32 %v3375, 1.442695
    %v3377 = vpow.pop %v3376
    %v3378 = vadd.f32 %v3377, 1.0
    %v3379 = vrcp.pop %v3378
    %v3380 = vmul.f32 %v3378, %v3379
    %v3381 = vsub.f32 1.0, %v3380
    %v3382 = vmul.f32 %v3379, %v3381
    %v3383 = vadd.f32 %v3379, %v3382
    %vm3384 = vweird.f32 %v3378
    %vm3385 = vweird.f32 %v3379
    %vm3386 = vmor %vm3384, %vm3385
    %v3387 = vsel %vm3386, %v3379, %v3383
    %v3388 = vand.u32 2147483647, %v3378
    %vm3389 = vcmp.eq.f32.partialorder %v3388, 8.507059e+37
    %v3390 = vand.u32 %v3378, 2147483648
    %v3391 = vor.u32 1.1754944e-38, %v3390
    %v3392 = vsel %vm3389, %v3391, %v3387
    %v3393 = vmul.f32 1.0, %v3392
    %3394 = vst [vmem:[#allocation2] sm:$0x80] %v3393
    %v3395 = vld [vmem:[#allocation12] sm:$0xff]
    %v3396 = vld [vmem:[#allocation12 + $0x8] sm:$0xff]
    %v3397 = vld [vmem:[#allocation12 + $0x10] sm:$0xff]
    %v3398 = vld [vmem:[#allocation12 + $0x18] sm:$0xff]
    %v3399 = vld [vmem:[#allocation12 + $0x20] sm:$0xff]
    %v3400 = vld [vmem:[#allocation12 + $0x28] sm:$0xff]
    %v3401 = vld [vmem:[#allocation12 + $0x30] sm:$0xff]
    %v3402 = vld [vmem:[#allocation12 + $0x38] sm:$0xff]
    %v3403 = vld [vmem:[#allocation12 + $0x40] sm:$0xff]
    %v3404 = vld [vmem:[#allocation12 + $0x48] sm:$0xff]
    %v3405 = vld [vmem:[#allocation12 + $0x50] sm:$0xff]
    %v3406 = vld [vmem:[#allocation12 + $0x58] sm:$0xff]
    %v3407 = vld [vmem:[#allocation12 + $0x60] sm:$0xff]
    %v3408 = vld [vmem:[#allocation12 + $0x68] sm:$0xff]
    %v3409 = vld [vmem:[#allocation12 + $0x70] sm:$0xff]
    %v3410 = vld [vmem:[#allocation12 + $0x78] sm:$0xff]
    %v3411 = vld [vmem:[#allocation12 + $0x80] sm:$0xff]
    %v3412 = vld [vmem:[#allocation12 + $0x88] sm:$0xff]
    %v3413 = vld [vmem:[#allocation12 + $0x90] sm:$0xff]
    %v3414 = vld [vmem:[#allocation12 + $0x98] sm:$0xff]
    %v3415 = vld [vmem:[#allocation12 + $0xa0] sm:$0xff]
    %v3416 = vld [vmem:[#allocation12 + $0xa8] sm:$0xff]
    %v3417 = vld [vmem:[#allocation12 + $0xb0] sm:$0xff]
    %v3418 = vld [vmem:[#allocation12 + $0xb8] sm:$0xff]
    %v3419 = vld [vmem:[#allocation12 + $0xc0] sm:$0xff]
    %v3420 = vld [vmem:[#allocation12 + $0xc8] sm:$0xff]
    %v3421 = vld [vmem:[#allocation12 + $0xd0] sm:$0xff]
    %v3422 = vld [vmem:[#allocation12 + $0xd8] sm:$0xff]
    %v3423 = vld [vmem:[#allocation12 + $0xe0] sm:$0xff]
    %v3424 = vld [vmem:[#allocation12 + $0xe8] sm:$0xff]
    %v3425 = vld [vmem:[#allocation12 + $0xf0] sm:$0xff]
    %v3426 = vld [vmem:[#allocation12 + $0xf8] sm:$0xff]
    %v3427 = vld [vmem:[#allocation12 + $0x100] sm:$0xff]
    %v3428 = vld [vmem:[#allocation12 + $0x108] sm:$0xff]
    %v3429 = vld [vmem:[#allocation12 + $0x110] sm:$0xff]
    %v3430 = vld [vmem:[#allocation12 + $0x118] sm:$0xff]
    %v3431 = vld [vmem:[#allocation12 + $0x120] sm:$0xff]
    %v3432 = vld [vmem:[#allocation12 + $0x128] sm:$0xff]
    %v3433 = vld [vmem:[#allocation12 + $0x130] sm:$0xff]
    %v3434 = vld [vmem:[#allocation12 + $0x138] sm:$0xff]
    %v3435 = vld [vmem:[#allocation12 + $0x140] sm:$0xff]
    %v3436 = vld [vmem:[#allocation12 + $0x148] sm:$0xff]
    %v3437 = vld [vmem:[#allocation12 + $0x150] sm:$0xff]
    %v3438 = vld [vmem:[#allocation12 + $0x158] sm:$0xff]
    %v3439 = vld [vmem:[#allocation12 + $0x160] sm:$0xff]
    %v3440 = vld [vmem:[#allocation12 + $0x168] sm:$0xff]
    %v3441 = vld [vmem:[#allocation12 + $0x170] sm:$0xff]
    %v3442 = vld [vmem:[#allocation12 + $0x178] sm:$0xff]
    %v3443 = vld [vmem:[#allocation12 + $0x180] sm:$0xff]
    %v3444 = vld [vmem:[#allocation12 + $0x188] sm:$0xff]
    %v3445 = vld [vmem:[#allocation12 + $0x190] sm:$0xff]
    %v3446 = vld [vmem:[#allocation12 + $0x198] sm:$0xff]
    %v3447 = vld [vmem:[#allocation12 + $0x1a0] sm:$0xff]
    %v3448 = vld [vmem:[#allocation12 + $0x1a8] sm:$0xff]
    %v3449 = vld [vmem:[#allocation12 + $0x1b0] sm:$0xff]
    %v3450 = vld [vmem:[#allocation12 + $0x1b8] sm:$0xff]
    %v3451 = vld [vmem:[#allocation12 + $0x1c0] sm:$0xff]
    %v3452 = vld [vmem:[#allocation12 + $0x1c8] sm:$0xff]
    %v3453 = vld [vmem:[#allocation12 + $0x1d0] sm:$0xff]
    %v3454 = vld [vmem:[#allocation12 + $0x1d8] sm:$0xff]
    %v3455 = vld [vmem:[#allocation12 + $0x1e0] sm:$0xff]
    %v3456 = vld [vmem:[#allocation12 + $0x1e8] sm:$0xff]
    %v3457 = vld [vmem:[#allocation12 + $0x1f0] sm:$0xff]
    %v3458 = vld [vmem:[#allocation12 + $0x1f8] sm:$0xff]
    %v3459 = vld [vmem:[#allocation14] sm:$0xff]
    %v3460 = vld [vmem:[#allocation14 + $0x8] sm:$0xff]
    %v3461 = vld [vmem:[#allocation14 + $0x10] sm:$0xff]
    %v3462 = vld [vmem:[#allocation14 + $0x18] sm:$0xff]
    %v3463 = vld [vmem:[#allocation14 + $0x20] sm:$0xff]
    %v3464 = vld [vmem:[#allocation14 + $0x28] sm:$0xff]
    %v3465 = vld [vmem:[#allocation14 + $0x30] sm:$0xff]
    %v3466 = vld [vmem:[#allocation14 + $0x38] sm:$0xff]
    %v3467 = vld [vmem:[#allocation14 + $0x40] sm:$0xff]
    %v3468 = vld [vmem:[#allocation14 + $0x48] sm:$0xff]
    %v3469 = vld [vmem:[#allocation14 + $0x50] sm:$0xff]
    %v3470 = vld [vmem:[#allocation14 + $0x58] sm:$0xff]
    %v3471 = vld [vmem:[#allocation14 + $0x60] sm:$0xff]
    %v3472 = vld [vmem:[#allocation14 + $0x68] sm:$0xff]
    %v3473 = vld [vmem:[#allocation14 + $0x70] sm:$0xff]
    %v3474 = vld [vmem:[#allocation14 + $0x78] sm:$0xff]
    %v3475 = vld [vmem:[#allocation14 + $0x80] sm:$0xff]
    %v3476 = vld [vmem:[#allocation14 + $0x88] sm:$0xff]
    %v3477 = vld [vmem:[#allocation14 + $0x90] sm:$0xff]
    %v3478 = vld [vmem:[#allocation14 + $0x98] sm:$0xff]
    %v3479 = vld [vmem:[#allocation14 + $0xa0] sm:$0xff]
    %v3480 = vld [vmem:[#allocation14 + $0xa8] sm:$0xff]
    %v3481 = vld [vmem:[#allocation14 + $0xb0] sm:$0xff]
    %v3482 = vld [vmem:[#allocation14 + $0xb8] sm:$0xff]
    %v3483 = vld [vmem:[#allocation14 + $0xc0] sm:$0xff]
    %v3484 = vld [vmem:[#allocation14 + $0xc8] sm:$0xff]
    %v3485 = vld [vmem:[#allocation14 + $0xd0] sm:$0xff]
    %v3486 = vld [vmem:[#allocation14 + $0xd8] sm:$0xff]
    %v3487 = vld [vmem:[#allocation14 + $0xe0] sm:$0xff]
    %v3488 = vld [vmem:[#allocation14 + $0xe8] sm:$0xff]
    %v3489 = vld [vmem:[#allocation14 + $0xf0] sm:$0xff]
    %v3490 = vld [vmem:[#allocation14 + $0xf8] sm:$0xff]
    %v3491 = vld [vmem:[#allocation14 + $0x100] sm:$0xff]
    %v3492 = vld [vmem:[#allocation14 + $0x108] sm:$0xff]
    %v3493 = vld [vmem:[#allocation14 + $0x110] sm:$0xff]
    %v3494 = vld [vmem:[#allocation14 + $0x118] sm:$0xff]
    %v3495 = vld [vmem:[#allocation14 + $0x120] sm:$0xff]
    %v3496 = vld [vmem:[#allocation14 + $0x128] sm:$0xff]
    %v3497 = vld [vmem:[#allocation14 + $0x130] sm:$0xff]
    %v3498 = vld [vmem:[#allocation14 + $0x138] sm:$0xff]
    %v3499 = vld [vmem:[#allocation14 + $0x140] sm:$0xff]
    %v3500 = vld [vmem:[#allocation14 + $0x148] sm:$0xff]
    %v3501 = vld [vmem:[#allocation14 + $0x150] sm:$0xff]
    %v3502 = vld [vmem:[#allocation14 + $0x158] sm:$0xff]
    %v3503 = vld [vmem:[#allocation14 + $0x160] sm:$0xff]
    %v3504 = vld [vmem:[#allocation14 + $0x168] sm:$0xff]
    %v3505 = vld [vmem:[#allocation14 + $0x170] sm:$0xff]
    %v3506 = vld [vmem:[#allocation14 + $0x178] sm:$0xff]
    %v3507 = vld [vmem:[#allocation14 + $0x180] sm:$0xff]
    %v3508 = vld [vmem:[#allocation14 + $0x188] sm:$0xff]
    %v3509 = vld [vmem:[#allocation14 + $0x190] sm:$0xff]
    %v3510 = vld [vmem:[#allocation14 + $0x198] sm:$0xff]
    %v3511 = vld [vmem:[#allocation14 + $0x1a0] sm:$0xff]
    %v3512 = vld [vmem:[#allocation14 + $0x1a8] sm:$0xff]
    %v3513 = vld [vmem:[#allocation14 + $0x1b0] sm:$0xff]
    %v3514 = vld [vmem:[#allocation14 + $0x1b8] sm:$0xff]
    %v3515 = vld [vmem:[#allocation14 + $0x1c0] sm:$0xff]
    %v3516 = vld [vmem:[#allocation14 + $0x1c8] sm:$0xff]
    %v3517 = vld [vmem:[#allocation14 + $0x1d0] sm:$0xff]
    %v3518 = vld [vmem:[#allocation14 + $0x1d8] sm:$0xff]
    %v3519 = vld [vmem:[#allocation14 + $0x1e0] sm:$0xff]
    %v3520 = vld [vmem:[#allocation14 + $0x1e8] sm:$0xff]
    %v3521 = vld [vmem:[#allocation14 + $0x1f0] sm:$0xff]
    %v3522 = vld [vmem:[#allocation14 + $0x1f8] sm:$0xff]
    %v3523 = vld [vmem:[%s9] sm:$0xf]
    %v3524 = vld [vmem:[#allocation2] sm:$0xff]
    %v3526 = vperm.slane %v3523, 0
    %v3527 = vperm.slane %v3523, 1
    %v3528 = vperm.slane %v3523, 2
    %v3529 = vperm.slane %v3523, 3
    %3534 = vmatpush.msra.mxu0 %v3455
    %3535 = vmatpush.msra.mxu0 %v3451
    %3536 = vmatpush.msra.mxu0 %v3447
    %3537 = vmatpush.msra.mxu0 %v3443
    %3538 = vmatpush.msra.mxu0 %v3439
    %3539 = vmatpush.msra.mxu0 %v3435
    %3540 = vmatpush.msra.mxu0 %v3431
    %3541 = vmatpush.msra.mxu0 %v3427
    %3542 = vmatpush.msra.mxu0 %v3423
    %3543 = vmatpush.msra.mxu0 %v3419
    %3544 = vmatpush.msra.mxu0 %v3415
    %3545 = vmatpush.msra.mxu0 %v3411
    %3546 = vmatpush.msra.mxu0 %v3407
    %3547 = vmatpush.msra.mxu0 %v3403
    %3548 = vmatpush.msra.mxu0 %v3399
    %3549 = vmatpush.msra.mxu0 %v3395
    %3550 = vmatmul.f32.gmra.mxu0 %v3524
    %v3551 = vpop.f32.mrf.mxu0
    %v3552 = vadd.f32 %v3526, %v3551
    %3553 = vdwg.mxu0
    %3554 = vmatpush.msra.mxu0 %v3456
    %3555 = vmatpush.msra.mxu0 %v3452
    %3556 = vmatpush.msra.mxu0 %v3448
    %3557 = vmatpush.msra.mxu0 %v3444
    %3558 = vmatpush.msra.mxu0 %v3440
    %3559 = vmatpush.msra.mxu0 %v3436
    %3560 = vmatpush.msra.mxu0 %v3432
    %3561 = vmatpush.msra.mxu0 %v3428
    %3562 = vmatpush.msra.mxu0 %v3424
    %3563 = vmatpush.msra.mxu0 %v3420
    %3564 = vmatpush.msra.mxu0 %v3416
    %3565 = vmatpush.msra.mxu0 %v3412
    %3566 = vmatpush.msra.mxu0 %v3408
    %3567 = vmatpush.msra.mxu0 %v3404
    %3568 = vmatpush.msra.mxu0 %v3400
    %3569 = vmatpush.msra.mxu0 %v3396
    %3570 = vmatmul.f32.gmra.mxu0 %v3524
    %v3571 = vpop.f32.mrf.mxu0
    %v3572 = vadd.f32 %v3527, %v3571
    %3573 = vdwg.mxu0
    %3574 = vmatpush.msra.mxu0 %v3457
    %3575 = vmatpush.msra.mxu0 %v3453
    %3576 = vmatpush.msra.mxu0 %v3449
    %3577 = vmatpush.msra.mxu0 %v3445
    %3578 = vmatpush.msra.mxu0 %v3441
    %3579 = vmatpush.msra.mxu0 %v3437
    %3580 = vmatpush.msra.mxu0 %v3433
    %3581 = vmatpush.msra.mxu0 %v3429
    %3582 = vmatpush.msra.mxu0 %v3425
    %3583 = vmatpush.msra.mxu0 %v3421
    %3584 = vmatpush.msra.mxu0 %v3417
    %3585 = vmatpush.msra.mxu0 %v3413
    %3586 = vmatpush.msra.mxu0 %v3409
    %3587 = vmatpush.msra.mxu0 %v3405
    %3588 = vmatpush.msra.mxu0 %v3401
    %3589 = vmatpush.msra.mxu0 %v3397
    %3590 = vmatmul.f32.gmra.mxu0 %v3524
    %v3591 = vpop.f32.mrf.mxu0
    %v3592 = vadd.f32 %v3528, %v3591
    %3593 = vdwg.mxu0
    %3594 = vmatpush.msra.mxu0 %v3458
    %3595 = vmatpush.msra.mxu0 %v3454
    %3596 = vmatpush.msra.mxu0 %v3450
    %3597 = vmatpush.msra.mxu0 %v3446
    %3598 = vmatpush.msra.mxu0 %v3442
    %3599 = vmatpush.msra.mxu0 %v3438
    %3600 = vmatpush.msra.mxu0 %v3434
    %3601 = vmatpush.msra.mxu0 %v3430
    %3602 = vmatpush.msra.mxu0 %v3426
    %3603 = vmatpush.msra.mxu0 %v3422
    %3604 = vmatpush.msra.mxu0 %v3418
    %3605 = vmatpush.msra.mxu0 %v3414
    %3606 = vmatpush.msra.mxu0 %v3410
    %3607 = vmatpush.msra.mxu0 %v3406
    %3608 = vmatpush.msra.mxu0 %v3402
    %3609 = vmatpush.msra.mxu0 %v3398
    %3610 = vmatmul.f32.gmra.mxu0 %v3524
    %v3611 = vpop.f32.mrf.mxu0
    %v3612 = vadd.f32 %v3529, %v3611
    %3613 = vdwg.mxu0
    %3614 = vmatpush.msra.mxu0 %v3519
    %3615 = vmatpush.msra.mxu0 %v3515
    %3616 = vmatpush.msra.mxu0 %v3511
    %3617 = vmatpush.msra.mxu0 %v3507
    %3618 = vmatpush.msra.mxu0 %v3503
    %3619 = vmatpush.msra.mxu0 %v3499
    %3620 = vmatpush.msra.mxu0 %v3495
    %3621 = vmatpush.msra.mxu0 %v3491
    %3622 = vmatpush.msra.mxu0 %v3487
    %3623 = vmatpush.msra.mxu0 %v3483
    %3624 = vmatpush.msra.mxu0 %v3479
    %3625 = vmatpush.msra.mxu0 %v3475
    %3626 = vmatpush.msra.mxu0 %v3471
    %3627 = vmatpush.msra.mxu0 %v3467
    %3628 = vmatpush.msra.mxu0 %v3463
    %3629 = vmatpush.msra.mxu0 %v3459
    %3630 = vmatmul.f32.gmra.mxu0 0.0
    %v3631 = vpop.f32.mrf.mxu0
    %v3632 = vadd.f32 0.0, %v3631
    %3633 = vdwg.mxu0
    %3634 = vmatpush.msra.mxu0 %v3520
    %3635 = vmatpush.msra.mxu0 %v3516
    %3636 = vmatpush.msra.mxu0 %v3512
    %3637 = vmatpush.msra.mxu0 %v3508
    %3638 = vmatpush.msra.mxu0 %v3504
    %3639 = vmatpush.msra.mxu0 %v3500
    %3640 = vmatpush.msra.mxu0 %v3496
    %3641 = vmatpush.msra.mxu0 %v3492
    %3642 = vmatpush.msra.mxu0 %v3488
    %3643 = vmatpush.msra.mxu0 %v3484
    %3644 = vmatpush.msra.mxu0 %v3480
    %3645 = vmatpush.msra.mxu0 %v3476
    %3646 = vmatpush.msra.mxu0 %v3472
    %3647 = vmatpush.msra.mxu0 %v3468
    %3648 = vmatpush.msra.mxu0 %v3464
    %3649 = vmatpush.msra.mxu0 %v3460
    %3650 = vmatmul.f32.gmra.mxu0 0.0
    %v3651 = vpop.f32.mrf.mxu0
    %v3652 = vadd.f32 0.0, %v3651
    %3653 = vdwg.mxu0
    %3654 = vmatpush.msra.mxu0 %v3521
    %3655 = vmatpush.msra.mxu0 %v3517
    %3656 = vmatpush.msra.mxu0 %v3513
    %3657 = vmatpush.msra.mxu0 %v3509
    %3658 = vmatpush.msra.mxu0 %v3505
    %3659 = vmatpush.msra.mxu0 %v3501
    %3660 = vmatpush.msra.mxu0 %v3497
    %3661 = vmatpush.msra.mxu0 %v3493
    %3662 = vmatpush.msra.mxu0 %v3489
    %3663 = vmatpush.msra.mxu0 %v3485
    %3664 = vmatpush.msra.mxu0 %v3481
    %3665 = vmatpush.msra.mxu0 %v3477
    %3666 = vmatpush.msra.mxu0 %v3473
    %3667 = vmatpush.msra.mxu0 %v3469
    %3668 = vmatpush.msra.mxu0 %v3465
    %3669 = vmatpush.msra.mxu0 %v3461
    %3670 = vmatmul.f32.gmra.mxu0 0.0
    %v3671 = vpop.f32.mrf.mxu0
    %v3672 = vadd.f32 0.0, %v3671
    %3673 = vdwg.mxu0
    %3674 = vmatpush.msra.mxu0 %v3522
    %3675 = vmatpush.msra.mxu0 %v3518
    %3676 = vmatpush.msra.mxu0 %v3514
    %3677 = vmatpush.msra.mxu0 %v3510
    %3678 = vmatpush.msra.mxu0 %v3506
    %3679 = vmatpush.msra.mxu0 %v3502
    %3680 = vmatpush.msra.mxu0 %v3498
    %3681 = vmatpush.msra.mxu0 %v3494
    %3682 = vmatpush.msra.mxu0 %v3490
    %3683 = vmatpush.msra.mxu0 %v3486
    %3684 = vmatpush.msra.mxu0 %v3482
    %3685 = vmatpush.msra.mxu0 %v3478
    %3686 = vmatpush.msra.mxu0 %v3474
    %3687 = vmatpush.msra.mxu0 %v3470
    %3688 = vmatpush.msra.mxu0 %v3466
    %3689 = vmatpush.msra.mxu0 %v3462
    %3690 = vmatmul.f32.gmra.mxu0 0.0
    %v3691 = vpop.f32.mrf.mxu0
    %v3692 = vadd.f32 0.0, %v3691
    %3693 = vdwg.mxu0
    %v3694 = vadd.f32 %v3552, %v3632
    %v3695 = vadd.f32 %v3572, %v3652
    %v3696 = vadd.f32 %v3592, %v3672
    %v3697 = vadd.f32 %v3612, %v3692
    %v3698 = vxor.u32 %v3694, 2147483648
    %v3699 = vmul.f32 %v3698, 1.442695
    %v3700 = vpow.pop %v3699
    %v3701 = vadd.f32 %v3700, 1.0
    %v3702 = vrcp.pop %v3701
    %v3703 = vmul.f32 %v3701, %v3702
    %v3704 = vsub.f32 1.0, %v3703
    %v3705 = vmul.f32 %v3702, %v3704
    %v3706 = vadd.f32 %v3702, %v3705
    %vm3707 = vweird.f32 %v3701
    %vm3708 = vweird.f32 %v3702
    %vm3709 = vmor %vm3707, %vm3708
    %v3710 = vsel %vm3709, %v3702, %v3706
    %v3711 = vand.u32 2147483647, %v3701
    %vm3712 = vcmp.eq.f32.partialorder %v3711, 8.507059e+37
    %v3713 = vand.u32 %v3701, 2147483648
    %v3714 = vor.u32 1.1754944e-38, %v3713
    %v3715 = vsel %vm3712, %v3714, %v3710
    %v3716 = vmul.f32 1.0, %v3715
    %v3717 = vxor.u32 %v3695, 2147483648
    %v3718 = vmul.f32 %v3717, 1.442695
    %v3719 = vpow.pop %v3718
    %v3720 = vadd.f32 %v3719, 1.0
    %v3721 = vrcp.pop %v3720
    %v3722 = vmul.f32 %v3720, %v3721
    %v3723 = vsub.f32 1.0, %v3722
    %v3724 = vmul.f32 %v3721, %v3723
    %v3725 = vadd.f32 %v3721, %v3724
    %vm3726 = vweird.f32 %v3720
    %vm3727 = vweird.f32 %v3721
    %vm3728 = vmor %vm3726, %vm3727
    %v3729 = vsel %vm3728, %v3721, %v3725
    %v3730 = vand.u32 2147483647, %v3720
    %vm3731 = vcmp.eq.f32.partialorder %v3730, 8.507059e+37
    %v3732 = vand.u32 %v3720, 2147483648
    %v3733 = vor.u32 1.1754944e-38, %v3732
    %v3734 = vsel %vm3731, %v3733, %v3729
    %v3735 = vmul.f32 1.0, %v3734
    %v3736 = vtanh.pop %v3696
    %v3737 = vxor.u32 %v3697, 2147483648
    %v3738 = vmul.f32 %v3737, 1.442695
    %v3739 = vpow.pop %v3738
    %v3740 = vadd.f32 %v3739, 1.0
    %v3741 = vrcp.pop %v3740
    %v3742 = vmul.f32 %v3740, %v3741
    %v3743 = vsub.f32 1.0, %v3742
    %v3744 = vmul.f32 %v3741, %v3743
    %v3745 = vadd.f32 %v3741, %v3744
    %vm3746 = vweird.f32 %v3740
    %vm3747 = vweird.f32 %v3741
    %vm3748 = vmor %vm3746, %vm3747
    %v3749 = vsel %vm3748, %v3741, %v3745
    %v3750 = vand.u32 2147483647, %v3740
    %vm3751 = vcmp.eq.f32.partialorder %v3750, 8.507059e+37
    %v3752 = vand.u32 %v3740, 2147483648
    %v3753 = vor.u32 1.1754944e-38, %v3752
    %v3754 = vsel %vm3751, %v3753, %v3749
    %v3755 = vmul.f32 1.0, %v3754
    %v3756 = vmul.f32 %v3735, 0.0
    %v3757 = vmul.f32 %v3716, %v3736
    %v3758 = vadd.f32 %v3756, %v3757
    %v3759 = vtanh.pop %v3758
    %v3760 = vmul.f32 %v3755, %v3759
    %3761 = vst [vmem:[#allocation2] sm:$0x1] %v3760
    %3762 = vmatpush.msra.mxu0 %v3519
    %3763 = vmatpush.msra.mxu0 %v3515
    %3764 = vmatpush.msra.mxu0 %v3511
    %3765 = vmatpush.msra.mxu0 %v3507
    %3766 = vmatpush.msra.mxu0 %v3503
    %3767 = vmatpush.msra.mxu0 %v3499
    %3768 = vmatpush.msra.mxu0 %v3495
    %3769 = vmatpush.msra.mxu0 %v3491
    %3770 = vmatpush.msra.mxu0 %v3487
    %3771 = vmatpush.msra.mxu0 %v3483
    %3772 = vmatpush.msra.mxu0 %v3479
    %3773 = vmatpush.msra.mxu0 %v3475
    %3774 = vmatpush.msra.mxu0 %v3471
    %3775 = vmatpush.msra.mxu0 %v3467
    %3776 = vmatpush.msra.mxu0 %v3463
    %3777 = vmatpush.msra.mxu0 %v3459
    %3778 = vmatmul.f32.gmra.mxu0 %v3760
    %v3779 = vpop.f32.mrf.mxu0
    %v3780 = vadd.f32 0.0, %v3779
    %3781 = vdwg.mxu0
    %3782 = vmatpush.msra.mxu0 %v3520
    %3783 = vmatpush.msra.mxu0 %v3516
    %3784 = vmatpush.msra.mxu0 %v3512
    %3785 = vmatpush.msra.mxu0 %v3508
    %3786 = vmatpush.msra.mxu0 %v3504
    %3787 = vmatpush.msra.mxu0 %v3500
    %3788 = vmatpush.msra.mxu0 %v3496
    %3789 = vmatpush.msra.mxu0 %v3492
    %3790 = vmatpush.msra.mxu0 %v3488
    %3791 = vmatpush.msra.mxu0 %v3484
    %3792 = vmatpush.msra.mxu0 %v3480
    %3793 = vmatpush.msra.mxu0 %v3476
    %3794 = vmatpush.msra.mxu0 %v3472
    %3795 = vmatpush.msra.mxu0 %v3468
    %3796 = vmatpush.msra.mxu0 %v3464
    %3797 = vmatpush.msra.mxu0 %v3460
    %3798 = vmatmul.f32.gmra.mxu0 %v3760
    %v3799 = vpop.f32.mrf.mxu0
    %v3800 = vadd.f32 0.0, %v3799
    %3801 = vdwg.mxu0
    %3802 = vmatpush.msra.mxu0 %v3521
    %3803 = vmatpush.msra.mxu0 %v3517
    %3804 = vmatpush.msra.mxu0 %v3513
    %3805 = vmatpush.msra.mxu0 %v3509
    %3806 = vmatpush.msra.mxu0 %v3505
    %3807 = vmatpush.msra.mxu0 %v3501
    %3808 = vmatpush.msra.mxu0 %v3497
    %3809 = vmatpush.msra.mxu0 %v3493
    %3810 = vmatpush.msra.mxu0 %v3489
    %3811 = vmatpush.msra.mxu0 %v3485
    %3812 = vmatpush.msra.mxu0 %v3481
    %3813 = vmatpush.msra.mxu0 %v3477
    %3814 = vmatpush.msra.mxu0 %v3473
    %3815 = vmatpush.msra.mxu0 %v3469
    %3816 = vmatpush.msra.mxu0 %v3465
    %3817 = vmatpush.msra.mxu0 %v3461
    %3818 = vmatmul.f32.gmra.mxu0 %v3760
    %v3819 = vpop.f32.mrf.mxu0
    %v3820 = vadd.f32 0.0, %v3819
    %3821 = vdwg.mxu0
    %3822 = vmatpush.msra.mxu0 %v3522
    %3823 = vmatpush.msra.mxu0 %v3518
    %3824 = vmatpush.msra.mxu0 %v3514
    %3825 = vmatpush.msra.mxu0 %v3510
    %3826 = vmatpush.msra.mxu0 %v3506
    %3827 = vmatpush.msra.mxu0 %v3502
    %3828 = vmatpush.msra.mxu0 %v3498
    %3829 = vmatpush.msra.mxu0 %v3494
    %3830 = vmatpush.msra.mxu0 %v3490
    %3831 = vmatpush.msra.mxu0 %v3486
    %3832 = vmatpush.msra.mxu0 %v3482
    %3833 = vmatpush.msra.mxu0 %v3478
    %3834 = vmatpush.msra.mxu0 %v3474
    %3835 = vmatpush.msra.mxu0 %v3470
    %3836 = vmatpush.msra.mxu0 %v3466
    %3837 = vmatpush.msra.mxu0 %v3462
    %3838 = vmatmul.f32.gmra.mxu0 %v3760
    %v3839 = vpop.f32.mrf.mxu0
    %v3840 = vadd.f32 0.0, %v3839
    %3841 = vdwg.mxu0
    %v3846 = vrot.slane %v3780, 7
    %v3847 = vrot.slane %v3800, 7
    %v3848 = vrot.slane %v3820, 7
    %v3849 = vrot.slane %v3840, 7
    %v3854 = vadd.f32 %v3552, %v3846
    %v3855 = vadd.f32 %v3572, %v3847
    %v3856 = vadd.f32 %v3592, %v3848
    %v3857 = vadd.f32 %v3612, %v3849
    %v3858 = vxor.u32 %v3854, 2147483648
    %v3859 = vmul.f32 %v3858, 1.442695
    %v3860 = vpow.pop %v3859
    %v3861 = vadd.f32 %v3860, 1.0
    %v3862 = vrcp.pop %v3861
    %v3863 = vmul.f32 %v3861, %v3862
    %v3864 = vsub.f32 1.0, %v3863
    %v3865 = vmul.f32 %v3862, %v3864
    %v3866 = vadd.f32 %v3862, %v3865
    %vm3867 = vweird.f32 %v3861
    %vm3868 = vweird.f32 %v3862
    %vm3869 = vmor %vm3867, %vm3868
    %v3870 = vsel %vm3869, %v3862, %v3866
    %v3871 = vand.u32 2147483647, %v3861
    %vm3872 = vcmp.eq.f32.partialorder %v3871, 8.507059e+37
    %v3873 = vand.u32 %v3861, 2147483648
    %v3874 = vor.u32 1.1754944e-38, %v3873
    %v3875 = vsel %vm3872, %v3874, %v3870
    %v3876 = vmul.f32 1.0, %v3875
    %v3877 = vxor.u32 %v3855, 2147483648
    %v3878 = vmul.f32 %v3877, 1.442695
    %v3879 = vpow.pop %v3878
    %v3880 = vadd.f32 %v3879, 1.0
    %v3881 = vrcp.pop %v3880
    %v3882 = vmul.f32 %v3880, %v3881
    %v3883 = vsub.f32 1.0, %v3882
    %v3884 = vmul.f32 %v3881, %v3883
    %v3885 = vadd.f32 %v3881, %v3884
    %vm3886 = vweird.f32 %v3880
    %vm3887 = vweird.f32 %v3881
    %vm3888 = vmor %vm3886, %vm3887
    %v3889 = vsel %vm3888, %v3881, %v3885
    %v3890 = vand.u32 2147483647, %v3880
    %vm3891 = vcmp.eq.f32.partialorder %v3890, 8.507059e+37
    %v3892 = vand.u32 %v3880, 2147483648
    %v3893 = vor.u32 1.1754944e-38, %v3892
    %v3894 = vsel %vm3891, %v3893, %v3889
    %v3895 = vmul.f32 1.0, %v3894
    %v3896 = vtanh.pop %v3856
    %v3897 = vxor.u32 %v3857, 2147483648
    %v3898 = vmul.f32 %v3897, 1.442695
    %v3899 = vpow.pop %v3898
    %v3900 = vadd.f32 %v3899, 1.0
    %v3901 = vrcp.pop %v3900
    %v3902 = vmul.f32 %v3900, %v3901
    %v3903 = vsub.f32 1.0, %v3902
    %v3904 = vmul.f32 %v3901, %v3903
    %v3905 = vadd.f32 %v3901, %v3904
    %vm3906 = vweird.f32 %v3900
    %vm3907 = vweird.f32 %v3901
    %vm3908 = vmor %vm3906, %vm3907
    %v3909 = vsel %vm3908, %v3901, %v3905
    %v3910 = vand.u32 2147483647, %v3900
    %vm3911 = vcmp.eq.f32.partialorder %v3910, 8.507059e+37
    %v3912 = vand.u32 %v3900, 2147483648
    %v3913 = vor.u32 1.1754944e-38, %v3912
    %v3914 = vsel %vm3911, %v3913, %v3909
    %v3915 = vmul.f32 1.0, %v3914
    %v3917 = vrot.slane %v3758, 7
    %v3919 = vmul.f32 %v3895, %v3917
    %v3920 = vmul.f32 %v3876, %v3896
    %v3921 = vadd.f32 %v3919, %v3920
    %v3922 = vtanh.pop %v3921
    %v3923 = vmul.f32 %v3915, %v3922
    %3924 = vst [vmem:[#allocation2] sm:$0x2] %v3923
    %v3926 = vrot.slane %v3923, 1
    %3928 = vmatpush.msra.mxu0 %v3519
    %3929 = vmatpush.msra.mxu0 %v3515
    %3930 = vmatpush.msra.mxu0 %v3511
    %3931 = vmatpush.msra.mxu0 %v3507
    %3932 = vmatpush.msra.mxu0 %v3503
    %3933 = vmatpush.msra.mxu0 %v3499
    %3934 = vmatpush.msra.mxu0 %v3495
    %3935 = vmatpush.msra.mxu0 %v3491
    %3936 = vmatpush.msra.mxu0 %v3487
    %3937 = vmatpush.msra.mxu0 %v3483
    %3938 = vmatpush.msra.mxu0 %v3479
    %3939 = vmatpush.msra.mxu0 %v3475
    %3940 = vmatpush.msra.mxu0 %v3471
    %3941 = vmatpush.msra.mxu0 %v3467
    %3942 = vmatpush.msra.mxu0 %v3463
    %3943 = vmatpush.msra.mxu0 %v3459
    %3944 = vmatmul.f32.gmra.mxu0 %v3926
    %v3945 = vpop.f32.mrf.mxu0
    %v3946 = vadd.f32 0.0, %v3945
    %3947 = vdwg.mxu0
    %3948 = vmatpush.msra.mxu0 %v3520
    %3949 = vmatpush.msra.mxu0 %v3516
    %3950 = vmatpush.msra.mxu0 %v3512
    %3951 = vmatpush.msra.mxu0 %v3508
    %3952 = vmatpush.msra.mxu0 %v3504
    %3953 = vmatpush.msra.mxu0 %v3500
    %3954 = vmatpush.msra.mxu0 %v3496
    %3955 = vmatpush.msra.mxu0 %v3492
    %3956 = vmatpush.msra.mxu0 %v3488
    %3957 = vmatpush.msra.mxu0 %v3484
    %3958 = vmatpush.msra.mxu0 %v3480
    %3959 = vmatpush.msra.mxu0 %v3476
    %3960 = vmatpush.msra.mxu0 %v3472
    %3961 = vmatpush.msra.mxu0 %v3468
    %3962 = vmatpush.msra.mxu0 %v3464
    %3963 = vmatpush.msra.mxu0 %v3460
    %3964 = vmatmul.f32.gmra.mxu0 %v3926
    %v3965 = vpop.f32.mrf.mxu0
    %v3966 = vadd.f32 0.0, %v3965
    %3967 = vdwg.mxu0
    %3968 = vmatpush.msra.mxu0 %v3521
    %3969 = vmatpush.msra.mxu0 %v3517
    %3970 = vmatpush.msra.mxu0 %v3513
    %3971 = vmatpush.msra.mxu0 %v3509
    %3972 = vmatpush.msra.mxu0 %v3505
    %3973 = vmatpush.msra.mxu0 %v3501
    %3974 = vmatpush.msra.mxu0 %v3497
    %3975 = vmatpush.msra.mxu0 %v3493
    %3976 = vmatpush.msra.mxu0 %v3489
    %3977 = vmatpush.msra.mxu0 %v3485
    %3978 = vmatpush.msra.mxu0 %v3481
    %3979 = vmatpush.msra.mxu0 %v3477
    %3980 = vmatpush.msra.mxu0 %v3473
    %3981 = vmatpush.msra.mxu0 %v3469
    %3982 = vmatpush.msra.mxu0 %v3465
    %3983 = vmatpush.msra.mxu0 %v3461
    %3984 = vmatmul.f32.gmra.mxu0 %v3926
    %v3985 = vpop.f32.mrf.mxu0
    %v3986 = vadd.f32 0.0, %v3985
    %3987 = vdwg.mxu0
    %3988 = vmatpush.msra.mxu0 %v3522
    %3989 = vmatpush.msra.mxu0 %v3518
    %3990 = vmatpush.msra.mxu0 %v3514
    %3991 = vmatpush.msra.mxu0 %v3510
    %3992 = vmatpush.msra.mxu0 %v3506
    %3993 = vmatpush.msra.mxu0 %v3502
    %3994 = vmatpush.msra.mxu0 %v3498
    %3995 = vmatpush.msra.mxu0 %v3494
    %3996 = vmatpush.msra.mxu0 %v3490
    %3997 = vmatpush.msra.mxu0 %v3486
    %3998 = vmatpush.msra.mxu0 %v3482
    %3999 = vmatpush.msra.mxu0 %v3478
    %4000 = vmatpush.msra.mxu0 %v3474
    %4001 = vmatpush.msra.mxu0 %v3470
    %4002 = vmatpush.msra.mxu0 %v3466
    %4003 = vmatpush.msra.mxu0 %v3462
    %4004 = vmatmul.f32.gmra.mxu0 %v3926
    %v4005 = vpop.f32.mrf.mxu0
    %v4006 = vadd.f32 0.0, %v4005
    %4007 = vdwg.mxu0
    %v4012 = vrot.slane %v3946, 6
    %v4013 = vrot.slane %v3966, 6
    %v4014 = vrot.slane %v3986, 6
    %v4015 = vrot.slane %v4006, 6
    %v4020 = vadd.f32 %v3552, %v4012
    %v4021 = vadd.f32 %v3572, %v4013
    %v4022 = vadd.f32 %v3592, %v4014
    %v4023 = vadd.f32 %v3612, %v4015
    %v4024 = vxor.u32 %v4020, 2147483648
    %v4025 = vmul.f32 %v4024, 1.442695
    %v4026 = vpow.pop %v4025
    %v4027 = vadd.f32 %v4026, 1.0
    %v4028 = vrcp.pop %v4027
    %v4029 = vmul.f32 %v4027, %v4028
    %v4030 = vsub.f32 1.0, %v4029
    %v4031 = vmul.f32 %v4028, %v4030
    %v4032 = vadd.f32 %v4028, %v4031
    %vm4033 = vweird.f32 %v4027
    %vm4034 = vweird.f32 %v4028
    %vm4035 = vmor %vm4033, %vm4034
    %v4036 = vsel %vm4035, %v4028, %v4032
    %v4037 = vand.u32 2147483647, %v4027
    %vm4038 = vcmp.eq.f32.partialorder %v4037, 8.507059e+37
    %v4039 = vand.u32 %v4027, 2147483648
    %v4040 = vor.u32 1.1754944e-38, %v4039
    %v4041 = vsel %vm4038, %v4040, %v4036
    %v4042 = vmul.f32 1.0, %v4041
    %v4043 = vxor.u32 %v4021, 2147483648
    %v4044 = vmul.f32 %v4043, 1.442695
    %v4045 = vpow.pop %v4044
    %v4046 = vadd.f32 %v4045, 1.0
    %v4047 = vrcp.pop %v4046
    %v4048 = vmul.f32 %v4046, %v4047
    %v4049 = vsub.f32 1.0, %v4048
    %v4050 = vmul.f32 %v4047, %v4049
    %v4051 = vadd.f32 %v4047, %v4050
    %vm4052 = vweird.f32 %v4046
    %vm4053 = vweird.f32 %v4047
    %vm4054 = vmor %vm4052, %vm4053
    %v4055 = vsel %vm4054, %v4047, %v4051
    %v4056 = vand.u32 2147483647, %v4046
    %vm4057 = vcmp.eq.f32.partialorder %v4056, 8.507059e+37
    %v4058 = vand.u32 %v4046, 2147483648
    %v4059 = vor.u32 1.1754944e-38, %v4058
    %v4060 = vsel %vm4057, %v4059, %v4055
    %v4061 = vmul.f32 1.0, %v4060
    %v4062 = vtanh.pop %v4022
    %v4063 = vxor.u32 %v4023, 2147483648
    %v4064 = vmul.f32 %v4063, 1.442695
    %v4065 = vpow.pop %v4064
    %v4066 = vadd.f32 %v4065, 1.0
    %v4067 = vrcp.pop %v4066
    %v4068 = vmul.f32 %v4066, %v4067
    %v4069 = vsub.f32 1.0, %v4068
    %v4070 = vmul.f32 %v4067, %v4069
    %v4071 = vadd.f32 %v4067, %v4070
    %vm4072 = vweird.f32 %v4066
    %vm4073 = vweird.f32 %v4067
    %vm4074 = vmor %vm4072, %vm4073
    %v4075 = vsel %vm4074, %v4067, %v4071
    %v4076 = vand.u32 2147483647, %v4066
    %vm4077 = vcmp.eq.f32.partialorder %v4076, 8.507059e+37
    %v4078 = vand.u32 %v4066, 2147483648
    %v4079 = vor.u32 1.1754944e-38, %v4078
    %v4080 = vsel %vm4077, %v4079, %v4075
    %v4081 = vmul.f32 1.0, %v4080
    %v4083 = vrot.slane %v3921, 7
    %v4085 = vmul.f32 %v4061, %v4083
    %v4086 = vmul.f32 %v4042, %v4062
    %v4087 = vadd.f32 %v4085, %v4086
    %v4088 = vtanh.pop %v4087
    %v4089 = vmul.f32 %v4081, %v4088
    %4090 = vst [vmem:[#allocation2] sm:$0x4] %v4089
    %v4092 = vrot.slane %v4089, 2
    %4094 = vmatpush.msra.mxu0 %v3519
    %4095 = vmatpush.msra.mxu0 %v3515
    %4096 = vmatpush.msra.mxu0 %v3511
    %4097 = vmatpush.msra.mxu0 %v3507
    %4098 = vmatpush.msra.mxu0 %v3503
    %4099 = vmatpush.msra.mxu0 %v3499
    %4100 = vmatpush.msra.mxu0 %v3495
    %4101 = vmatpush.msra.mxu0 %v3491
    %4102 = vmatpush.msra.mxu0 %v3487
    %4103 = vmatpush.msra.mxu0 %v3483
    %4104 = vmatpush.msra.mxu0 %v3479
    %4105 = vmatpush.msra.mxu0 %v3475
    %4106 = vmatpush.msra.mxu0 %v3471
    %4107 = vmatpush.msra.mxu0 %v3467
    %4108 = vmatpush.msra.mxu0 %v3463
    %4109 = vmatpush.msra.mxu0 %v3459
    %4110 = vmatmul.f32.gmra.mxu0 %v4092
    %v4111 = vpop.f32.mrf.mxu0
    %v4112 = vadd.f32 0.0, %v4111
    %4113 = vdwg.mxu0
    %4114 = vmatpush.msra.mxu0 %v3520
    %4115 = vmatpush.msra.mxu0 %v3516
    %4116 = vmatpush.msra.mxu0 %v3512
    %4117 = vmatpush.msra.mxu0 %v3508
    %4118 = vmatpush.msra.mxu0 %v3504
    %4119 = vmatpush.msra.mxu0 %v3500
    %4120 = vmatpush.msra.mxu0 %v3496
    %4121 = vmatpush.msra.mxu0 %v3492
    %4122 = vmatpush.msra.mxu0 %v3488
    %4123 = vmatpush.msra.mxu0 %v3484
    %4124 = vmatpush.msra.mxu0 %v3480
    %4125 = vmatpush.msra.mxu0 %v3476
    %4126 = vmatpush.msra.mxu0 %v3472
    %4127 = vmatpush.msra.mxu0 %v3468
    %4128 = vmatpush.msra.mxu0 %v3464
    %4129 = vmatpush.msra.mxu0 %v3460
    %4130 = vmatmul.f32.gmra.mxu0 %v4092
    %v4131 = vpop.f32.mrf.mxu0
    %v4132 = vadd.f32 0.0, %v4131
    %4133 = vdwg.mxu0
    %4134 = vmatpush.msra.mxu0 %v3521
    %4135 = vmatpush.msra.mxu0 %v3517
    %4136 = vmatpush.msra.mxu0 %v3513
    %4137 = vmatpush.msra.mxu0 %v3509
    %4138 = vmatpush.msra.mxu0 %v3505
    %4139 = vmatpush.msra.mxu0 %v3501
    %4140 = vmatpush.msra.mxu0 %v3497
    %4141 = vmatpush.msra.mxu0 %v3493
    %4142 = vmatpush.msra.mxu0 %v3489
    %4143 = vmatpush.msra.mxu0 %v3485
    %4144 = vmatpush.msra.mxu0 %v3481
    %4145 = vmatpush.msra.mxu0 %v3477
    %4146 = vmatpush.msra.mxu0 %v3473
    %4147 = vmatpush.msra.mxu0 %v3469
    %4148 = vmatpush.msra.mxu0 %v3465
    %4149 = vmatpush.msra.mxu0 %v3461
    %4150 = vmatmul.f32.gmra.mxu0 %v4092
    %v4151 = vpop.f32.mrf.mxu0
    %v4152 = vadd.f32 0.0, %v4151
    %4153 = vdwg.mxu0
    %4154 = vmatpush.msra.mxu0 %v3522
    %4155 = vmatpush.msra.mxu0 %v3518
    %4156 = vmatpush.msra.mxu0 %v3514
    %4157 = vmatpush.msra.mxu0 %v3510
    %4158 = vmatpush.msra.mxu0 %v3506
    %4159 = vmatpush.msra.mxu0 %v3502
    %4160 = vmatpush.msra.mxu0 %v3498
    %4161 = vmatpush.msra.mxu0 %v3494
    %4162 = vmatpush.msra.mxu0 %v3490
    %4163 = vmatpush.msra.mxu0 %v3486
    %4164 = vmatpush.msra.mxu0 %v3482
    %4165 = vmatpush.msra.mxu0 %v3478
    %4166 = vmatpush.msra.mxu0 %v3474
    %4167 = vmatpush.msra.mxu0 %v3470
    %4168 = vmatpush.msra.mxu0 %v3466
    %4169 = vmatpush.msra.mxu0 %v3462
    %4170 = vmatmul.f32.gmra.mxu0 %v4092
    %v4171 = vpop.f32.mrf.mxu0
    %v4172 = vadd.f32 0.0, %v4171
    %4173 = vdwg.mxu0
    %v4178 = vrot.slane %v4112, 5
    %v4179 = vrot.slane %v4132, 5
    %v4180 = vrot.slane %v4152, 5
    %v4181 = vrot.slane %v4172, 5
    %v4186 = vadd.f32 %v3552, %v4178
    %v4187 = vadd.f32 %v3572, %v4179
    %v4188 = vadd.f32 %v3592, %v4180
    %v4189 = vadd.f32 %v3612, %v4181
    %v4190 = vxor.u32 %v4186, 2147483648
    %v4191 = vmul.f32 %v4190, 1.442695
    %v4192 = vpow.pop %v4191
    %v4193 = vadd.f32 %v4192, 1.0
    %v4194 = vrcp.pop %v4193
    %v4195 = vmul.f32 %v4193, %v4194
    %v4196 = vsub.f32 1.0, %v4195
    %v4197 = vmul.f32 %v4194, %v4196
    %v4198 = vadd.f32 %v4194, %v4197
    %vm4199 = vweird.f32 %v4193
    %vm4200 = vweird.f32 %v4194
    %vm4201 = vmor %vm4199, %vm4200
    %v4202 = vsel %vm4201, %v4194, %v4198
    %v4203 = vand.u32 2147483647, %v4193
    %vm4204 = vcmp.eq.f32.partialorder %v4203, 8.507059e+37
    %v4205 = vand.u32 %v4193, 2147483648
    %v4206 = vor.u32 1.1754944e-38, %v4205
    %v4207 = vsel %vm4204, %v4206, %v4202
    %v4208 = vmul.f32 1.0, %v4207
    %v4209 = vxor.u32 %v4187, 2147483648
    %v4210 = vmul.f32 %v4209, 1.442695
    %v4211 = vpow.pop %v4210
    %v4212 = vadd.f32 %v4211, 1.0
    %v4213 = vrcp.pop %v4212
    %v4214 = vmul.f32 %v4212, %v4213
    %v4215 = vsub.f32 1.0, %v4214
    %v4216 = vmul.f32 %v4213, %v4215
    %v4217 = vadd.f32 %v4213, %v4216
    %vm4218 = vweird.f32 %v4212
    %vm4219 = vweird.f32 %v4213
    %vm4220 = vmor %vm4218, %vm4219
    %v4221 = vsel %vm4220, %v4213, %v4217
    %v4222 = vand.u32 2147483647, %v4212
    %vm4223 = vcmp.eq.f32.partialorder %v4222, 8.507059e+37
    %v4224 = vand.u32 %v4212, 2147483648
    %v4225 = vor.u32 1.1754944e-38, %v4224
    %v4226 = vsel %vm4223, %v4225, %v4221
    %v4227 = vmul.f32 1.0, %v4226
    %v4228 = vtanh.pop %v4188
    %v4229 = vxor.u32 %v4189, 2147483648
    %v4230 = vmul.f32 %v4229, 1.442695
    %v4231 = vpow.pop %v4230
    %v4232 = vadd.f32 %v4231, 1.0
    %v4233 = vrcp.pop %v4232
    %v4234 = vmul.f32 %v4232, %v4233
    %v4235 = vsub.f32 1.0, %v4234
    %v4236 = vmul.f32 %v4233, %v4235
    %v4237 = vadd.f32 %v4233, %v4236
    %vm4238 = vweird.f32 %v4232
    %vm4239 = vweird.f32 %v4233
    %vm4240 = vmor %vm4238, %vm4239
    %v4241 = vsel %vm4240, %v4233, %v4237
    %v4242 = vand.u32 2147483647, %v4232
    %vm4243 = vcmp.eq.f32.partialorder %v4242, 8.507059e+37
    %v4244 = vand.u32 %v4232, 2147483648
    %v4245 = vor.u32 1.1754944e-38, %v4244
    %v4246 = vsel %vm4243, %v4245, %v4241
    %v4247 = vmul.f32 1.0, %v4246
    %v4249 = vrot.slane %v4087, 7
    %v4251 = vmul.f32 %v4227, %v4249
    %v4252 = vmul.f32 %v4208, %v4228
    %v4253 = vadd.f32 %v4251, %v4252
    %v4254 = vtanh.pop %v4253
    %v4255 = vmul.f32 %v4247, %v4254
    %4256 = vst [vmem:[#allocation2] sm:$0x8] %v4255
    %v4258 = vrot.slane %v4255, 3
    %4260 = vmatpush.msra.mxu0 %v3519
    %4261 = vmatpush.msra.mxu0 %v3515
    %4262 = vmatpush.msra.mxu0 %v3511
    %4263 = vmatpush.msra.mxu0 %v3507
    %4264 = vmatpush.msra.mxu0 %v3503
    %4265 = vmatpush.msra.mxu0 %v3499
    %4266 = vmatpush.msra.mxu0 %v3495
    %4267 = vmatpush.msra.mxu0 %v3491
    %4268 = vmatpush.msra.mxu0 %v3487
    %4269 = vmatpush.msra.mxu0 %v3483
    %4270 = vmatpush.msra.mxu0 %v3479
    %4271 = vmatpush.msra.mxu0 %v3475
    %4272 = vmatpush.msra.mxu0 %v3471
    %4273 = vmatpush.msra.mxu0 %v3467
    %4274 = vmatpush.msra.mxu0 %v3463
    %4275 = vmatpush.msra.mxu0 %v3459
    %4276 = vmatmul.f32.gmra.mxu0 %v4258
    %v4277 = vpop.f32.mrf.mxu0
    %v4278 = vadd.f32 0.0, %v4277
    %4279 = vdwg.mxu0
    %4280 = vmatpush.msra.mxu0 %v3520
    %4281 = vmatpush.msra.mxu0 %v3516
    %4282 = vmatpush.msra.mxu0 %v3512
    %4283 = vmatpush.msra.mxu0 %v3508
    %4284 = vmatpush.msra.mxu0 %v3504
    %4285 = vmatpush.msra.mxu0 %v3500
    %4286 = vmatpush.msra.mxu0 %v3496
    %4287 = vmatpush.msra.mxu0 %v3492
    %4288 = vmatpush.msra.mxu0 %v3488
    %4289 = vmatpush.msra.mxu0 %v3484
    %4290 = vmatpush.msra.mxu0 %v3480
    %4291 = vmatpush.msra.mxu0 %v3476
    %4292 = vmatpush.msra.mxu0 %v3472
    %4293 = vmatpush.msra.mxu0 %v3468
    %4294 = vmatpush.msra.mxu0 %v3464
    %4295 = vmatpush.msra.mxu0 %v3460
    %4296 = vmatmul.f32.gmra.mxu0 %v4258
    %v4297 = vpop.f32.mrf.mxu0
    %v4298 = vadd.f32 0.0, %v4297
    %4299 = vdwg.mxu0
    %4300 = vmatpush.msra.mxu0 %v3521
    %4301 = vmatpush.msra.mxu0 %v3517
    %4302 = vmatpush.msra.mxu0 %v3513
    %4303 = vmatpush.msra.mxu0 %v3509
    %4304 = vmatpush.msra.mxu0 %v3505
    %4305 = vmatpush.msra.mxu0 %v3501
    %4306 = vmatpush.msra.mxu0 %v3497
    %4307 = vmatpush.msra.mxu0 %v3493
    %4308 = vmatpush.msra.mxu0 %v3489
    %4309 = vmatpush.msra.mxu0 %v3485
    %4310 = vmatpush.msra.mxu0 %v3481
    %4311 = vmatpush.msra.mxu0 %v3477
    %4312 = vmatpush.msra.mxu0 %v3473
    %4313 = vmatpush.msra.mxu0 %v3469
    %4314 = vmatpush.msra.mxu0 %v3465
    %4315 = vmatpush.msra.mxu0 %v3461
    %4316 = vmatmul.f32.gmra.mxu0 %v4258
    %v4317 = vpop.f32.mrf.mxu0
    %v4318 = vadd.f32 0.0, %v4317
    %4319 = vdwg.mxu0
    %4320 = vmatpush.msra.mxu0 %v3522
    %4321 = vmatpush.msra.mxu0 %v3518
    %4322 = vmatpush.msra.mxu0 %v3514
    %4323 = vmatpush.msra.mxu0 %v3510
    %4324 = vmatpush.msra.mxu0 %v3506
    %4325 = vmatpush.msra.mxu0 %v3502
    %4326 = vmatpush.msra.mxu0 %v3498
    %4327 = vmatpush.msra.mxu0 %v3494
    %4328 = vmatpush.msra.mxu0 %v3490
    %4329 = vmatpush.msra.mxu0 %v3486
    %4330 = vmatpush.msra.mxu0 %v3482
    %4331 = vmatpush.msra.mxu0 %v3478
    %4332 = vmatpush.msra.mxu0 %v3474
    %4333 = vmatpush.msra.mxu0 %v3470
    %4334 = vmatpush.msra.mxu0 %v3466
    %4335 = vmatpush.msra.mxu0 %v3462
    %4336 = vmatmul.f32.gmra.mxu0 %v4258
    %v4337 = vpop.f32.mrf.mxu0
    %v4338 = vadd.f32 0.0, %v4337
    %4339 = vdwg.mxu0
    %v4344 = vrot.slane %v4278, 4
    %v4345 = vrot.slane %v4298, 4
    %v4346 = vrot.slane %v4318, 4
    %v4347 = vrot.slane %v4338, 4
    %v4352 = vadd.f32 %v3552, %v4344
    %v4353 = vadd.f32 %v3572, %v4345
    %v4354 = vadd.f32 %v3592, %v4346
    %v4355 = vadd.f32 %v3612, %v4347
    %v4356 = vxor.u32 %v4352, 2147483648
    %v4357 = vmul.f32 %v4356, 1.442695
    %v4358 = vpow.pop %v4357
    %v4359 = vadd.f32 %v4358, 1.0
    %v4360 = vrcp.pop %v4359
    %v4361 = vmul.f32 %v4359, %v4360
    %v4362 = vsub.f32 1.0, %v4361
    %v4363 = vmul.f32 %v4360, %v4362
    %v4364 = vadd.f32 %v4360, %v4363
    %vm4365 = vweird.f32 %v4359
    %vm4366 = vweird.f32 %v4360
    %vm4367 = vmor %vm4365, %vm4366
    %v4368 = vsel %vm4367, %v4360, %v4364
    %v4369 = vand.u32 2147483647, %v4359
    %vm4370 = vcmp.eq.f32.partialorder %v4369, 8.507059e+37
    %v4371 = vand.u32 %v4359, 2147483648
    %v4372 = vor.u32 1.1754944e-38, %v4371
    %v4373 = vsel %vm4370, %v4372, %v4368
    %v4374 = vmul.f32 1.0, %v4373
    %v4375 = vxor.u32 %v4353, 2147483648
    %v4376 = vmul.f32 %v4375, 1.442695
    %v4377 = vpow.pop %v4376
    %v4378 = vadd.f32 %v4377, 1.0
    %v4379 = vrcp.pop %v4378
    %v4380 = vmul.f32 %v4378, %v4379
    %v4381 = vsub.f32 1.0, %v4380
    %v4382 = vmul.f32 %v4379, %v4381
    %v4383 = vadd.f32 %v4379, %v4382
    %vm4384 = vweird.f32 %v4378
    %vm4385 = vweird.f32 %v4379
    %vm4386 = vmor %vm4384, %vm4385
    %v4387 = vsel %vm4386, %v4379, %v4383
    %v4388 = vand.u32 2147483647, %v4378
    %vm4389 = vcmp.eq.f32.partialorder %v4388, 8.507059e+37
    %v4390 = vand.u32 %v4378, 2147483648
    %v4391 = vor.u32 1.1754944e-38, %v4390
    %v4392 = vsel %vm4389, %v4391, %v4387
    %v4393 = vmul.f32 1.0, %v4392
    %v4394 = vtanh.pop %v4354
    %v4395 = vxor.u32 %v4355, 2147483648
    %v4396 = vmul.f32 %v4395, 1.442695
    %v4397 = vpow.pop %v4396
    %v4398 = vadd.f32 %v4397, 1.0
    %v4399 = vrcp.pop %v4398
    %v4400 = vmul.f32 %v4398, %v4399
    %v4401 = vsub.f32 1.0, %v4400
    %v4402 = vmul.f32 %v4399, %v4401
    %v4403 = vadd.f32 %v4399, %v4402
    %vm4404 = vweird.f32 %v4398
    %vm4405 = vweird.f32 %v4399
    %vm4406 = vmor %vm4404, %vm4405
    %v4407 = vsel %vm4406, %v4399, %v4403
    %v4408 = vand.u32 2147483647, %v4398
    %vm4409 = vcmp.eq.f32.partialorder %v4408, 8.507059e+37
    %v4410 = vand.u32 %v4398, 2147483648
    %v4411 = vor.u32 1.1754944e-38, %v4410
    %v4412 = vsel %vm4409, %v4411, %v4407
    %v4413 = vmul.f32 1.0, %v4412
    %v4415 = vrot.slane %v4253, 7
    %v4417 = vmul.f32 %v4393, %v4415
    %v4418 = vmul.f32 %v4374, %v4394
    %v4419 = vadd.f32 %v4417, %v4418
    %v4420 = vtanh.pop %v4419
    %v4421 = vmul.f32 %v4413, %v4420
    %4422 = vst [vmem:[#allocation2] sm:$0x10] %v4421
    %v4424 = vrot.slane %v4421, 4
    %4426 = vmatpush.msra.mxu0 %v3519
    %4427 = vmatpush.msra.mxu0 %v3515
    %4428 = vmatpush.msra.mxu0 %v3511
    %4429 = vmatpush.msra.mxu0 %v3507
    %4430 = vmatpush.msra.mxu0 %v3503
    %4431 = vmatpush.msra.mxu0 %v3499
    %4432 = vmatpush.msra.mxu0 %v3495
    %4433 = vmatpush.msra.mxu0 %v3491
    %4434 = vmatpush.msra.mxu0 %v3487
    %4435 = vmatpush.msra.mxu0 %v3483
    %4436 = vmatpush.msra.mxu0 %v3479
    %4437 = vmatpush.msra.mxu0 %v3475
    %4438 = vmatpush.msra.mxu0 %v3471
    %4439 = vmatpush.msra.mxu0 %v3467
    %4440 = vmatpush.msra.mxu0 %v3463
    %4441 = vmatpush.msra.mxu0 %v3459
    %4442 = vmatmul.f32.gmra.mxu0 %v4424
    %v4443 = vpop.f32.mrf.mxu0
    %v4444 = vadd.f32 0.0, %v4443
    %4445 = vdwg.mxu0
    %4446 = vmatpush.msra.mxu0 %v3520
    %4447 = vmatpush.msra.mxu0 %v3516
    %4448 = vmatpush.msra.mxu0 %v3512
    %4449 = vmatpush.msra.mxu0 %v3508
    %4450 = vmatpush.msra.mxu0 %v3504
    %4451 = vmatpush.msra.mxu0 %v3500
    %4452 = vmatpush.msra.mxu0 %v3496
    %4453 = vmatpush.msra.mxu0 %v3492
    %4454 = vmatpush.msra.mxu0 %v3488
    %4455 = vmatpush.msra.mxu0 %v3484
    %4456 = vmatpush.msra.mxu0 %v3480
    %4457 = vmatpush.msra.mxu0 %v3476
    %4458 = vmatpush.msra.mxu0 %v3472
    %4459 = vmatpush.msra.mxu0 %v3468
    %4460 = vmatpush.msra.mxu0 %v3464
    %4461 = vmatpush.msra.mxu0 %v3460
    %4462 = vmatmul.f32.gmra.mxu0 %v4424
    %v4463 = vpop.f32.mrf.mxu0
    %v4464 = vadd.f32 0.0, %v4463
    %4465 = vdwg.mxu0
    %4466 = vmatpush.msra.mxu0 %v3521
    %4467 = vmatpush.msra.mxu0 %v3517
    %4468 = vmatpush.msra.mxu0 %v3513
    %4469 = vmatpush.msra.mxu0 %v3509
    %4470 = vmatpush.msra.mxu0 %v3505
    %4471 = vmatpush.msra.mxu0 %v3501
    %4472 = vmatpush.msra.mxu0 %v3497
    %4473 = vmatpush.msra.mxu0 %v3493
    %4474 = vmatpush.msra.mxu0 %v3489
    %4475 = vmatpush.msra.mxu0 %v3485
    %4476 = vmatpush.msra.mxu0 %v3481
    %4477 = vmatpush.msra.mxu0 %v3477
    %4478 = vmatpush.msra.mxu0 %v3473
    %4479 = vmatpush.msra.mxu0 %v3469
    %4480 = vmatpush.msra.mxu0 %v3465
    %4481 = vmatpush.msra.mxu0 %v3461
    %4482 = vmatmul.f32.gmra.mxu0 %v4424
    %v4483 = vpop.f32.mrf.mxu0
    %v4484 = vadd.f32 0.0, %v4483
    %4485 = vdwg.mxu0
    %4486 = vmatpush.msra.mxu0 %v3522
    %4487 = vmatpush.msra.mxu0 %v3518
    %4488 = vmatpush.msra.mxu0 %v3514
    %4489 = vmatpush.msra.mxu0 %v3510
    %4490 = vmatpush.msra.mxu0 %v3506
    %4491 = vmatpush.msra.mxu0 %v3502
    %4492 = vmatpush.msra.mxu0 %v3498
    %4493 = vmatpush.msra.mxu0 %v3494
    %4494 = vmatpush.msra.mxu0 %v3490
    %4495 = vmatpush.msra.mxu0 %v3486
    %4496 = vmatpush.msra.mxu0 %v3482
    %4497 = vmatpush.msra.mxu0 %v3478
    %4498 = vmatpush.msra.mxu0 %v3474
    %4499 = vmatpush.msra.mxu0 %v3470
    %4500 = vmatpush.msra.mxu0 %v3466
    %4501 = vmatpush.msra.mxu0 %v3462
    %4502 = vmatmul.f32.gmra.mxu0 %v4424
    %v4503 = vpop.f32.mrf.mxu0
    %v4504 = vadd.f32 0.0, %v4503
    %4505 = vdwg.mxu0
    %v4510 = vrot.slane %v4444, 3
    %v4511 = vrot.slane %v4464, 3
    %v4512 = vrot.slane %v4484, 3
    %v4513 = vrot.slane %v4504, 3
    %v4518 = vadd.f32 %v3552, %v4510
    %v4519 = vadd.f32 %v3572, %v4511
    %v4520 = vadd.f32 %v3592, %v4512
    %v4521 = vadd.f32 %v3612, %v4513
    %v4522 = vxor.u32 %v4518, 2147483648
    %v4523 = vmul.f32 %v4522, 1.442695
    %v4524 = vpow.pop %v4523
    %v4525 = vadd.f32 %v4524, 1.0
    %v4526 = vrcp.pop %v4525
    %v4527 = vmul.f32 %v4525, %v4526
    %v4528 = vsub.f32 1.0, %v4527
    %v4529 = vmul.f32 %v4526, %v4528
    %v4530 = vadd.f32 %v4526, %v4529
    %vm4531 = vweird.f32 %v4525
    %vm4532 = vweird.f32 %v4526
    %vm4533 = vmor %vm4531, %vm4532
    %v4534 = vsel %vm4533, %v4526, %v4530
    %v4535 = vand.u32 2147483647, %v4525
    %vm4536 = vcmp.eq.f32.partialorder %v4535, 8.507059e+37
    %v4537 = vand.u32 %v4525, 2147483648
    %v4538 = vor.u32 1.1754944e-38, %v4537
    %v4539 = vsel %vm4536, %v4538, %v4534
    %v4540 = vmul.f32 1.0, %v4539
    %v4541 = vxor.u32 %v4519, 2147483648
    %v4542 = vmul.f32 %v4541, 1.442695
    %v4543 = vpow.pop %v4542
    %v4544 = vadd.f32 %v4543, 1.0
    %v4545 = vrcp.pop %v4544
    %v4546 = vmul.f32 %v4544, %v4545
    %v4547 = vsub.f32 1.0, %v4546
    %v4548 = vmul.f32 %v4545, %v4547
    %v4549 = vadd.f32 %v4545, %v4548
    %vm4550 = vweird.f32 %v4544
    %vm4551 = vweird.f32 %v4545
    %vm4552 = vmor %vm4550, %vm4551
    %v4553 = vsel %vm4552, %v4545, %v4549
    %v4554 = vand.u32 2147483647, %v4544
    %vm4555 = vcmp.eq.f32.partialorder %v4554, 8.507059e+37
    %v4556 = vand.u32 %v4544, 2147483648
    %v4557 = vor.u32 1.1754944e-38, %v4556
    %v4558 = vsel %vm4555, %v4557, %v4553
    %v4559 = vmul.f32 1.0, %v4558
    %v4560 = vtanh.pop %v4520
    %v4561 = vxor.u32 %v4521, 2147483648
    %v4562 = vmul.f32 %v4561, 1.442695
    %v4563 = vpow.pop %v4562
    %v4564 = vadd.f32 %v4563, 1.0
    %v4565 = vrcp.pop %v4564
    %v4566 = vmul.f32 %v4564, %v4565
    %v4567 = vsub.f32 1.0, %v4566
    %v4568 = vmul.f32 %v4565, %v4567
    %v4569 = vadd.f32 %v4565, %v4568
    %vm4570 = vweird.f32 %v4564
    %vm4571 = vweird.f32 %v4565
    %vm4572 = vmor %vm4570, %vm4571
    %v4573 = vsel %vm4572, %v4565, %v4569
    %v4574 = vand.u32 2147483647, %v4564
    %vm4575 = vcmp.eq.f32.partialorder %v4574, 8.507059e+37
    %v4576 = vand.u32 %v4564, 2147483648
    %v4577 = vor.u32 1.1754944e-38, %v4576
    %v4578 = vsel %vm4575, %v4577, %v4573
    %v4579 = vmul.f32 1.0, %v4578
    %v4581 = vrot.slane %v4419, 7
    %v4583 = vmul.f32 %v4559, %v4581
    %v4584 = vmul.f32 %v4540, %v4560
    %v4585 = vadd.f32 %v4583, %v4584
    %v4586 = vtanh.pop %v4585
    %v4587 = vmul.f32 %v4579, %v4586
    %4588 = vst [vmem:[#allocation2] sm:$0x20] %v4587
    %v4590 = vrot.slane %v4587, 5
    %4592 = vmatpush.msra.mxu0 %v3519
    %4593 = vmatpush.msra.mxu0 %v3515
    %4594 = vmatpush.msra.mxu0 %v3511
    %4595 = vmatpush.msra.mxu0 %v3507
    %4596 = vmatpush.msra.mxu0 %v3503
    %4597 = vmatpush.msra.mxu0 %v3499
    %4598 = vmatpush.msra.mxu0 %v3495
    %4599 = vmatpush.msra.mxu0 %v3491
    %4600 = vmatpush.msra.mxu0 %v3487
    %4601 = vmatpush.msra.mxu0 %v3483
    %4602 = vmatpush.msra.mxu0 %v3479
    %4603 = vmatpush.msra.mxu0 %v3475
    %4604 = vmatpush.msra.mxu0 %v3471
    %4605 = vmatpush.msra.mxu0 %v3467
    %4606 = vmatpush.msra.mxu0 %v3463
    %4607 = vmatpush.msra.mxu0 %v3459
    %4608 = vmatmul.f32.gmra.mxu0 %v4590
    %v4609 = vpop.f32.mrf.mxu0
    %v4610 = vadd.f32 0.0, %v4609
    %4611 = vdwg.mxu0
    %4612 = vmatpush.msra.mxu0 %v3520
    %4613 = vmatpush.msra.mxu0 %v3516
    %4614 = vmatpush.msra.mxu0 %v3512
    %4615 = vmatpush.msra.mxu0 %v3508
    %4616 = vmatpush.msra.mxu0 %v3504
    %4617 = vmatpush.msra.mxu0 %v3500
    %4618 = vmatpush.msra.mxu0 %v3496
    %4619 = vmatpush.msra.mxu0 %v3492
    %4620 = vmatpush.msra.mxu0 %v3488
    %4621 = vmatpush.msra.mxu0 %v3484
    %4622 = vmatpush.msra.mxu0 %v3480
    %4623 = vmatpush.msra.mxu0 %v3476
    %4624 = vmatpush.msra.mxu0 %v3472
    %4625 = vmatpush.msra.mxu0 %v3468
    %4626 = vmatpush.msra.mxu0 %v3464
    %4627 = vmatpush.msra.mxu0 %v3460
    %4628 = vmatmul.f32.gmra.mxu0 %v4590
    %v4629 = vpop.f32.mrf.mxu0
    %v4630 = vadd.f32 0.0, %v4629
    %4631 = vdwg.mxu0
    %4632 = vmatpush.msra.mxu0 %v3521
    %4633 = vmatpush.msra.mxu0 %v3517
    %4634 = vmatpush.msra.mxu0 %v3513
    %4635 = vmatpush.msra.mxu0 %v3509
    %4636 = vmatpush.msra.mxu0 %v3505
    %4637 = vmatpush.msra.mxu0 %v3501
    %4638 = vmatpush.msra.mxu0 %v3497
    %4639 = vmatpush.msra.mxu0 %v3493
    %4640 = vmatpush.msra.mxu0 %v3489
    %4641 = vmatpush.msra.mxu0 %v3485
    %4642 = vmatpush.msra.mxu0 %v3481
    %4643 = vmatpush.msra.mxu0 %v3477
    %4644 = vmatpush.msra.mxu0 %v3473
    %4645 = vmatpush.msra.mxu0 %v3469
    %4646 = vmatpush.msra.mxu0 %v3465
    %4647 = vmatpush.msra.mxu0 %v3461
    %4648 = vmatmul.f32.gmra.mxu0 %v4590
    %v4649 = vpop.f32.mrf.mxu0
    %v4650 = vadd.f32 0.0, %v4649
    %4651 = vdwg.mxu0
    %4652 = vmatpush.msra.mxu0 %v3522
    %4653 = vmatpush.msra.mxu0 %v3518
    %4654 = vmatpush.msra.mxu0 %v3514
    %4655 = vmatpush.msra.mxu0 %v3510
    %4656 = vmatpush.msra.mxu0 %v3506
    %4657 = vmatpush.msra.mxu0 %v3502
    %4658 = vmatpush.msra.mxu0 %v3498
    %4659 = vmatpush.msra.mxu0 %v3494
    %4660 = vmatpush.msra.mxu0 %v3490
    %4661 = vmatpush.msra.mxu0 %v3486
    %4662 = vmatpush.msra.mxu0 %v3482
    %4663 = vmatpush.msra.mxu0 %v3478
    %4664 = vmatpush.msra.mxu0 %v3474
    %4665 = vmatpush.msra.mxu0 %v3470
    %4666 = vmatpush.msra.mxu0 %v3466
    %4667 = vmatpush.msra.mxu0 %v3462
    %4668 = vmatmul.f32.gmra.mxu0 %v4590
    %v4669 = vpop.f32.mrf.mxu0
    %v4670 = vadd.f32 0.0, %v4669
    %4671 = vdwg.mxu0
    %v4676 = vrot.slane %v4610, 2
    %v4677 = vrot.slane %v4630, 2
    %v4678 = vrot.slane %v4650, 2
    %v4679 = vrot.slane %v4670, 2
    %v4684 = vadd.f32 %v3552, %v4676
    %v4685 = vadd.f32 %v3572, %v4677
    %v4686 = vadd.f32 %v3592, %v4678
    %v4687 = vadd.f32 %v3612, %v4679
    %v4688 = vxor.u32 %v4684, 2147483648
    %v4689 = vmul.f32 %v4688, 1.442695
    %v4690 = vpow.pop %v4689
    %v4691 = vadd.f32 %v4690, 1.0
    %v4692 = vrcp.pop %v4691
    %v4693 = vmul.f32 %v4691, %v4692
    %v4694 = vsub.f32 1.0, %v4693
    %v4695 = vmul.f32 %v4692, %v4694
    %v4696 = vadd.f32 %v4692, %v4695
    %vm4697 = vweird.f32 %v4691
    %vm4698 = vweird.f32 %v4692
    %vm4699 = vmor %vm4697, %vm4698
    %v4700 = vsel %vm4699, %v4692, %v4696
    %v4701 = vand.u32 2147483647, %v4691
    %vm4702 = vcmp.eq.f32.partialorder %v4701, 8.507059e+37
    %v4703 = vand.u32 %v4691, 2147483648
    %v4704 = vor.u32 1.1754944e-38, %v4703
    %v4705 = vsel %vm4702, %v4704, %v4700
    %v4706 = vmul.f32 1.0, %v4705
    %v4707 = vxor.u32 %v4685, 2147483648
    %v4708 = vmul.f32 %v4707, 1.442695
    %v4709 = vpow.pop %v4708
    %v4710 = vadd.f32 %v4709, 1.0
    %v4711 = vrcp.pop %v4710
    %v4712 = vmul.f32 %v4710, %v4711
    %v4713 = vsub.f32 1.0, %v4712
    %v4714 = vmul.f32 %v4711, %v4713
    %v4715 = vadd.f32 %v4711, %v4714
    %vm4716 = vweird.f32 %v4710
    %vm4717 = vweird.f32 %v4711
    %vm4718 = vmor %vm4716, %vm4717
    %v4719 = vsel %vm4718, %v4711, %v4715
    %v4720 = vand.u32 2147483647, %v4710
    %vm4721 = vcmp.eq.f32.partialorder %v4720, 8.507059e+37
    %v4722 = vand.u32 %v4710, 2147483648
    %v4723 = vor.u32 1.1754944e-38, %v4722
    %v4724 = vsel %vm4721, %v4723, %v4719
    %v4725 = vmul.f32 1.0, %v4724
    %v4726 = vtanh.pop %v4686
    %v4727 = vxor.u32 %v4687, 2147483648
    %v4728 = vmul.f32 %v4727, 1.442695
    %v4729 = vpow.pop %v4728
    %v4730 = vadd.f32 %v4729, 1.0
    %v4731 = vrcp.pop %v4730
    %v4732 = vmul.f32 %v4730, %v4731
    %v4733 = vsub.f32 1.0, %v4732
    %v4734 = vmul.f32 %v4731, %v4733
    %v4735 = vadd.f32 %v4731, %v4734
    %vm4736 = vweird.f32 %v4730
    %vm4737 = vweird.f32 %v4731
    %vm4738 = vmor %vm4736, %vm4737
    %v4739 = vsel %vm4738, %v4731, %v4735
    %v4740 = vand.u32 2147483647, %v4730
    %vm4741 = vcmp.eq.f32.partialorder %v4740, 8.507059e+37
    %v4742 = vand.u32 %v4730, 2147483648
    %v4743 = vor.u32 1.1754944e-38, %v4742
    %v4744 = vsel %vm4741, %v4743, %v4739
    %v4745 = vmul.f32 1.0, %v4744
    %v4747 = vrot.slane %v4585, 7
    %v4749 = vmul.f32 %v4725, %v4747
    %v4750 = vmul.f32 %v4706, %v4726
    %v4751 = vadd.f32 %v4749, %v4750
    %v4752 = vtanh.pop %v4751
    %v4753 = vmul.f32 %v4745, %v4752
    %4754 = vst [vmem:[#allocation2] sm:$0x40] %v4753
    %v4756 = vrot.slane %v4753, 6
    %4758 = vmatpush.msra.mxu0 %v3519
    %4759 = vmatpush.msra.mxu0 %v3515
    %4760 = vmatpush.msra.mxu0 %v3511
    %4761 = vmatpush.msra.mxu0 %v3507
    %4762 = vmatpush.msra.mxu0 %v3503
    %4763 = vmatpush.msra.mxu0 %v3499
    %4764 = vmatpush.msra.mxu0 %v3495
    %4765 = vmatpush.msra.mxu0 %v3491
    %4766 = vmatpush.msra.mxu0 %v3487
    %4767 = vmatpush.msra.mxu0 %v3483
    %4768 = vmatpush.msra.mxu0 %v3479
    %4769 = vmatpush.msra.mxu0 %v3475
    %4770 = vmatpush.msra.mxu0 %v3471
    %4771 = vmatpush.msra.mxu0 %v3467
    %4772 = vmatpush.msra.mxu0 %v3463
    %4773 = vmatpush.msra.mxu0 %v3459
    %4774 = vmatmul.f32.gmra.mxu0 %v4756
    %v4775 = vpop.f32.mrf.mxu0
    %v4776 = vadd.f32 0.0, %v4775
    %4777 = vdwg.mxu0
    %4778 = vmatpush.msra.mxu0 %v3520
    %4779 = vmatpush.msra.mxu0 %v3516
    %4780 = vmatpush.msra.mxu0 %v3512
    %4781 = vmatpush.msra.mxu0 %v3508
    %4782 = vmatpush.msra.mxu0 %v3504
    %4783 = vmatpush.msra.mxu0 %v3500
    %4784 = vmatpush.msra.mxu0 %v3496
    %4785 = vmatpush.msra.mxu0 %v3492
    %4786 = vmatpush.msra.mxu0 %v3488
    %4787 = vmatpush.msra.mxu0 %v3484
    %4788 = vmatpush.msra.mxu0 %v3480
    %4789 = vmatpush.msra.mxu0 %v3476
    %4790 = vmatpush.msra.mxu0 %v3472
    %4791 = vmatpush.msra.mxu0 %v3468
    %4792 = vmatpush.msra.mxu0 %v3464
    %4793 = vmatpush.msra.mxu0 %v3460
    %4794 = vmatmul.f32.gmra.mxu0 %v4756
    %v4795 = vpop.f32.mrf.mxu0
    %v4796 = vadd.f32 0.0, %v4795
    %4797 = vdwg.mxu0
    %4798 = vmatpush.msra.mxu0 %v3521
    %4799 = vmatpush.msra.mxu0 %v3517
    %4800 = vmatpush.msra.mxu0 %v3513
    %4801 = vmatpush.msra.mxu0 %v3509
    %4802 = vmatpush.msra.mxu0 %v3505
    %4803 = vmatpush.msra.mxu0 %v3501
    %4804 = vmatpush.msra.mxu0 %v3497
    %4805 = vmatpush.msra.mxu0 %v3493
    %4806 = vmatpush.msra.mxu0 %v3489
    %4807 = vmatpush.msra.mxu0 %v3485
    %4808 = vmatpush.msra.mxu0 %v3481
    %4809 = vmatpush.msra.mxu0 %v3477
    %4810 = vmatpush.msra.mxu0 %v3473
    %4811 = vmatpush.msra.mxu0 %v3469
    %4812 = vmatpush.msra.mxu0 %v3465
    %4813 = vmatpush.msra.mxu0 %v3461
    %4814 = vmatmul.f32.gmra.mxu0 %v4756
    %v4815 = vpop.f32.mrf.mxu0
    %v4816 = vadd.f32 0.0, %v4815
    %4817 = vdwg.mxu0
    %4818 = vmatpush.msra.mxu0 %v3522
    %4819 = vmatpush.msra.mxu0 %v3518
    %4820 = vmatpush.msra.mxu0 %v3514
    %4821 = vmatpush.msra.mxu0 %v3510
    %4822 = vmatpush.msra.mxu0 %v3506
    %4823 = vmatpush.msra.mxu0 %v3502
    %4824 = vmatpush.msra.mxu0 %v3498
    %4825 = vmatpush.msra.mxu0 %v3494
    %4826 = vmatpush.msra.mxu0 %v3490
    %4827 = vmatpush.msra.mxu0 %v3486
    %4828 = vmatpush.msra.mxu0 %v3482
    %4829 = vmatpush.msra.mxu0 %v3478
    %4830 = vmatpush.msra.mxu0 %v3474
    %4831 = vmatpush.msra.mxu0 %v3470
    %4832 = vmatpush.msra.mxu0 %v3466
    %4833 = vmatpush.msra.mxu0 %v3462
    %4834 = vmatmul.f32.gmra.mxu0 %v4756
    %v4835 = vpop.f32.mrf.mxu0
    %v4836 = vadd.f32 0.0, %v4835
    %4837 = vdwg.mxu0
    %v4842 = vrot.slane %v4776, 1
    %v4843 = vrot.slane %v4796, 1
    %v4844 = vrot.slane %v4816, 1
    %v4845 = vrot.slane %v4836, 1
    %v4850 = vadd.f32 %v3552, %v4842
    %v4851 = vadd.f32 %v3572, %v4843
    %v4852 = vadd.f32 %v3592, %v4844
    %v4853 = vadd.f32 %v3612, %v4845
    %v4854 = vxor.u32 %v4850, 2147483648
    %v4855 = vmul.f32 %v4854, 1.442695
    %v4856 = vpow.pop %v4855
    %v4857 = vadd.f32 %v4856, 1.0
    %v4858 = vrcp.pop %v4857
    %v4859 = vmul.f32 %v4857, %v4858
    %v4860 = vsub.f32 1.0, %v4859
    %v4861 = vmul.f32 %v4858, %v4860
    %v4862 = vadd.f32 %v4858, %v4861
    %vm4863 = vweird.f32 %v4857
    %vm4864 = vweird.f32 %v4858
    %vm4865 = vmor %vm4863, %vm4864
    %v4866 = vsel %vm4865, %v4858, %v4862
    %v4867 = vand.u32 2147483647, %v4857
    %vm4868 = vcmp.eq.f32.partialorder %v4867, 8.507059e+37
    %v4869 = vand.u32 %v4857, 2147483648
    %v4870 = vor.u32 1.1754944e-38, %v4869
    %v4871 = vsel %vm4868, %v4870, %v4866
    %v4872 = vmul.f32 1.0, %v4871
    %v4873 = vxor.u32 %v4851, 2147483648
    %v4874 = vmul.f32 %v4873, 1.442695
    %v4875 = vpow.pop %v4874
    %v4876 = vadd.f32 %v4875, 1.0
    %v4877 = vrcp.pop %v4876
    %v4878 = vmul.f32 %v4876, %v4877
    %v4879 = vsub.f32 1.0, %v4878
    %v4880 = vmul.f32 %v4877, %v4879
    %v4881 = vadd.f32 %v4877, %v4880
    %vm4882 = vweird.f32 %v4876
    %vm4883 = vweird.f32 %v4877
    %vm4884 = vmor %vm4882, %vm4883
    %v4885 = vsel %vm4884, %v4877, %v4881
    %v4886 = vand.u32 2147483647, %v4876
    %vm4887 = vcmp.eq.f32.partialorder %v4886, 8.507059e+37
    %v4888 = vand.u32 %v4876, 2147483648
    %v4889 = vor.u32 1.1754944e-38, %v4888
    %v4890 = vsel %vm4887, %v4889, %v4885
    %v4891 = vmul.f32 1.0, %v4890
    %v4892 = vtanh.pop %v4852
    %v4893 = vxor.u32 %v4853, 2147483648
    %v4894 = vmul.f32 %v4893, 1.442695
    %v4895 = vpow.pop %v4894
    %v4896 = vadd.f32 %v4895, 1.0
    %v4897 = vrcp.pop %v4896
    %v4898 = vmul.f32 %v4896, %v4897
    %v4899 = vsub.f32 1.0, %v4898
    %v4900 = vmul.f32 %v4897, %v4899
    %v4901 = vadd.f32 %v4897, %v4900
    %vm4902 = vweird.f32 %v4896
    %vm4903 = vweird.f32 %v4897
    %vm4904 = vmor %vm4902, %vm4903
    %v4905 = vsel %vm4904, %v4897, %v4901
    %v4906 = vand.u32 2147483647, %v4896
    %vm4907 = vcmp.eq.f32.partialorder %v4906, 8.507059e+37
    %v4908 = vand.u32 %v4896, 2147483648
    %v4909 = vor.u32 1.1754944e-38, %v4908
    %v4910 = vsel %vm4907, %v4909, %v4905
    %v4911 = vmul.f32 1.0, %v4910
    %v4913 = vrot.slane %v4751, 7
    %v4915 = vmul.f32 %v4891, %v4913
    %v4916 = vmul.f32 %v4872, %v4892
    %v4917 = vadd.f32 %v4915, %v4916
    %v4918 = vtanh.pop %v4917
    %v4919 = vmul.f32 %v4911, %v4918
    %4920 = vst [vmem:[#allocation2] sm:$0x80] %v4919
    %v4921 = vld [vmem:[#allocation2] sm:$0xff]
    %v4922 = vld [vmem:[#allocation15] sm:$0xff]
    %v4923 = vld [vmem:[#allocation15 + $0x8] sm:$0xff]
    %v4924 = vld [vmem:[#allocation15 + $0x10] sm:$0xff]
    %v4925 = vld [vmem:[#allocation15 + $0x18] sm:$0xff]
    %v4926 = vld [vmem:[#allocation15 + $0x20] sm:$0xff]
    %v4927 = vld [vmem:[#allocation15 + $0x28] sm:$0xff]
    %v4928 = vld [vmem:[#allocation15 + $0x30] sm:$0xff]
    %v4929 = vld [vmem:[#allocation15 + $0x38] sm:$0xff]
    %v4930 = vld [vmem:[#allocation15 + $0x40] sm:$0xff]
    %v4931 = vld [vmem:[#allocation15 + $0x48] sm:$0xff]
    %v4932 = vld [vmem:[#allocation15 + $0x50] sm:$0xff]
    %v4933 = vld [vmem:[#allocation15 + $0x58] sm:$0xff]
    %v4934 = vld [vmem:[#allocation15 + $0x60] sm:$0xff]
    %v4935 = vld [vmem:[#allocation15 + $0x68] sm:$0xff]
    %v4936 = vld [vmem:[#allocation15 + $0x70] sm:$0xff]
    %v4937 = vld [vmem:[#allocation15 + $0x78] sm:$0xff]
    %4938 = vmatpush.msra.mxu0 %v4937
    %4939 = vmatpush.msra.mxu0 %v4936
    %4940 = vmatpush.msra.mxu0 %v4935
    %4941 = vmatpush.msra.mxu0 %v4934
    %4942 = vmatpush.msra.mxu0 %v4933
    %4943 = vmatpush.msra.mxu0 %v4932
    %4944 = vmatpush.msra.mxu0 %v4931
    %4945 = vmatpush.msra.mxu0 %v4930
    %4946 = vmatpush.msra.mxu0 %v4929
    %4947 = vmatpush.msra.mxu0 %v4928
    %4948 = vmatpush.msra.mxu0 %v4927
    %4949 = vmatpush.msra.mxu0 %v4926
    %4950 = vmatpush.msra.mxu0 %v4925
    %4951 = vmatpush.msra.mxu0 %v4924
    %4952 = vmatpush.msra.mxu0 %v4923
    %4953 = vmatpush.msra.mxu0 %v4922
    %4954 = vmatmul.f32.gmra.mxu0 %v4921
    %v4955 = vpop.f32.mrf.mxu0
    %v4956 = vadd.f32 0.0, %v4955
    %4957 = vdwg.mxu0
    %4958 = vst [vmem:[#allocation17] sm:$0xff] %v4956
    // Predicated region
    $region78: #{decoder_forward.1} parent=1 // pred_check
      _
    $region79: #{decoder_forward.1} parent=1 // pred_check_branch
      %4960 = sbr.rel (0) target = $region81
    $region80: #{decoder_forward.1} parent=1 // pred_region
      %4962 = vsyncadd [#allocation5], 0
      %s4964 = sshll.u32 [#allocation17], 4
      %s4965 = int_to_ptr.vmem [resolvable:$true] %s4964
      %s4966 = sshll.u32 %s11, 4
      %s4967 = int_to_ptr.hbm [resolvable:$true] %s4966
      %4969 = dma.vmem_to_hbm [thread:$0]  %s4965, 128, %s4967, [#allocation5]
    $region81: #{decoder_forward.1} parent=1 // pred_fallthru
      _
    // Predicated region
    $region82: #{decoder_forward.1} parent=1 // pred_check
      _
    $region83: #{decoder_forward.1} parent=1 // pred_check_branch
      %4971 = sbr.rel (0) target = $region85
    $region84: #{decoder_forward.1} parent=1 // pred_region
      %4973 = dma.done [#allocation5], 128
    $region85: #{decoder_forward.1} parent=1 // pred_fallthru
      _
    %4974 = vsyncpa [#allocation4], 1
    %4975 = vsyncpa [#allocation7], 1
    %4976 = vsyncpa [#allocation10], 1
    %4977 = vsyncpa [#allocation13], 1
    %4978 = vsyncpa [#allocation16], 1
    %4979 = vsyncpa [#allocation5], 1

</llo_original>
